<compile_context>
chip_gen: v6e
topology: v6e:2x2x1
jax: 0.10.0
libtpu: 0.0.40
codegen_flags: <defaults>
</compile_context>

<pallas_src>
import math
import jax
import jax.numpy as jnp
from jax import lax
from jax.experimental import pallas as pl
from jax.experimental.pallas import tpu as pltpu

# ---------------- config (small, consistent with the module) ----------------
HIDDEN = 32
NUM_HEADS = 4
HEAD_DIM = HIDDEN // NUM_HEADS
MLP_DIM = 64
NUM_LAYERS = 2                    # Encoder builds num_layers + 1 blocks
NUM_BLOCKS = NUM_LAYERS + 1
PATCH = 8
IMG = 16
IN_CH = 3
N_PATCHES = (IMG // PATCH) ** 2
SEQ = N_PATCHES + 1
EPS = 1e-6
SQRT2 = math.sqrt(2.0)


# ---------------- kernel helpers ----------------
def _layernorm(x, w, b):
    mean = jnp.mean(x, axis=-1, keepdims=True)
    var = jnp.mean((x - mean) ** 2, axis=-1, keepdims=True)
    return (x - mean) * lax.rsqrt(var + EPS) * w + b


# ---------------- fused forward kernel ----------------
def _fused_kernel(patches_ref, pw_ref, pb_ref, cls_ref, pos_ref,
                  ln1w_ref, ln1b_ref, wqkv_ref, bqkv_ref, wo_ref, bo_ref,
                  ln2w_ref, ln2b_ref, w1_ref, b1_ref, w2_ref, b2_ref,
                  o_ref):
    BS, H = o_ref.shape            # (B*SEQ, HIDDEN), static
    B = BS // SEQ
    l = pl.program_id(0)

    # ---- step 0: patch embedding + cls prepend + pos add (into resident out) ----
    @pl.when(l == 0)
    def _():
        emb = (jnp.dot(patches_ref[...], pw_ref[...],
                       preferred_element_type=jnp.float32)
               + pb_ref[...])                                   # (B*N, H)
        pos = pos_ref[...]                                      # (SEQ, H)
        cls_row = cls_ref[...] + pos[0:1, :]                    # (1, H)
        for b in range(B):                                      # static unroll
            o_ref[b * SEQ:b * SEQ + 1, :] = cls_row
            o_ref[b * SEQ + 1:(b + 1) * SEQ, :] = (
                emb[b * N_PATCHES:(b + 1) * N_PATCHES, :] + pos[1:, :])

    x = o_ref[...]                                              # (B*S, H)

    # ---- attention sub-block ----
    xn = _layernorm(x, ln1w_ref[0], ln1b_ref[0])
    qkv = (jnp.dot(xn, wqkv_ref[0], preferred_element_type=jnp.float32)
           + bqkv_ref[0])                                       # (B*S, 3H)
    q = qkv[:, 0:H]
    k = qkv[:, H:2 * H]
    v = qkv[:, 2 * H:3 * H]

    scale = jnp.float32(1.0 / math.sqrt(HEAD_DIM))
    ctx_rows = []
    for b in range(B):                                          # static unroll
        rs = slice(b * SEQ, (b + 1) * SEQ)
        heads = []
        for h in range(NUM_HEADS):                              # static unroll
            cs = slice(h * HEAD_DIM, (h + 1) * HEAD_DIM)
            qh, kh, vh = q[rs, cs], k[rs, cs], v[rs, cs]
            # q @ k^T without an explicit transpose op (rhs-contracting dot)
            s = lax.dot_general(qh, kh, (((1,), (1,)), ((), ())),
                                preferred_element_type=jnp.float32) * scale
            s = s - jnp.max(s, axis=-1, keepdims=True)
            e = jnp.exp(s)
            p = e * pl.reciprocal(jnp.sum(e, axis=-1, keepdims=True), approx=True)
            heads.append(jnp.dot(p, vh, preferred_element_type=jnp.float32))
        ctx_rows.append(jnp.concatenate(heads, axis=-1))        # (S, H)
    ctx = jnp.concatenate(ctx_rows, axis=0)                     # (B*S, H)
    attn_out = (jnp.dot(ctx, wo_ref[0], preferred_element_type=jnp.float32)
                + bo_ref[0])
    x1 = x + attn_out

    # ---- MLP sub-block ----
    xn2 = _layernorm(x1, ln2w_ref[0], ln2b_ref[0])
    h1 = (jnp.dot(xn2, w1_ref[0], preferred_element_type=jnp.float32)
          + b1_ref[0])
    h1 = 0.5 * h1 * (1.0 + lax.erf(h1 / jnp.float32(SQRT2)))    # exact GELU
    h2 = (jnp.dot(h1, w2_ref[0], preferred_element_type=jnp.float32)
          + b2_ref[0])
    o_ref[...] = x1 + h2


# ---------------- wrappers ----------------
def extract_patches(x):
    """NCHW -> (B, n_patches, C*p*p); flatten order (C, ph, pw) matches the
    PyTorch Conv2d weight flattening."""
    B, C, H, W = x.shape
    hp, wp = H // PATCH, W // PATCH
    x = x.reshape(B, C, hp, PATCH, wp, PATCH)
    x = x.transpose(0, 2, 4, 1, 3, 5)            # (B, hp, wp, C, p, p)
    return x.reshape(B, hp * wp, C * PATCH * PATCH)


def pack_block_params(blocks):
    """Stack per-block params along a leading layer axis; fuse QKV."""
    stack = lambda name: jnp.stack([blk[name] for blk in blocks], axis=0)
    wqkv = jnp.stack([jnp.concatenate([b["wq"], b["wk"], b["wv"]], axis=1)
                      for b in blocks], axis=0)                  # (L, H, 3H)
    bqkv = jnp.stack([jnp.concatenate([b["bq"], b["bk"], b["bv"]], axis=1)
                      for b in blocks], axis=0)                  # (L, 1, 3H)
    return dict(ln1w=stack("ln1w"), ln1b=stack("ln1b"),
                wqkv=wqkv, bqkv=bqkv,
                wo=stack("wo"), bo=stack("bo"),
                ln2w=stack("ln2w"), ln2b=stack("ln2b"),
                w1=stack("w1"), b1=stack("b1"),
                w2=stack("w2"), b2=stack("b2"))


def transformer_forward(x, params):
    B = x.shape[0]
    patches = extract_patches(x).reshape(B * N_PATCHES, IN_CH * PATCH * PATCH)
    CPP = patches.shape[1]
    sp = pack_block_params(params["blocks"])
    cls2d = params["cls"].reshape(1, HIDDEN)
    pos2d = params["pos"].reshape(SEQ, HIDDEN)

    const2 = lambda shape: pl.BlockSpec(shape, lambda l: (0, 0))
    per_layer = lambda shape: pl.BlockSpec((1,) + shape, lambda l: (l, 0, 0))

    out2d = pl.pallas_call(
        _fused_kernel,
        out_shape=jax.ShapeDtypeStruct((B * SEQ, HIDDEN), jnp.float32),
        grid=(NUM_BLOCKS,),
        in_specs=[
            const2((B * N_PATCHES, CPP)),     # patches (flattened batch)
            const2((CPP, HIDDEN)),            # patch_w
            const2((1, HIDDEN)),              # patch_b
            const2((1, HIDDEN)),              # cls token
            const2((SEQ, HIDDEN)),            # position embeddings
            per_layer((1, HIDDEN)),           # ln1 weight
            per_layer((1, HIDDEN)),           # ln1 bias
            per_layer((HIDDEN, 3 * HIDDEN)),  # fused QKV weight
            per_layer((1, 3 * HIDDEN)),       # fused QKV bias
            per_layer((HIDDEN, HIDDEN)),      # out-proj weight
            per_layer((1, HIDDEN)),           # out-proj bias
            per_layer((1, HIDDEN)),           # ln2 weight
            per_layer((1, HIDDEN)),           # ln2 bias
            per_layer((HIDDEN, MLP_DIM)),     # fc1 weight
            per_layer((1, MLP_DIM)),          # fc1 bias
            per_layer((MLP_DIM, HIDDEN)),     # fc2 weight
            per_layer((1, HIDDEN)),           # fc2 bias
        ],
        out_specs=pl.BlockSpec((B * SEQ, HIDDEN), lambda l: (0, 0)),
        compiler_params=pltpu.CompilerParams(
            dimension_semantics=("arbitrary",),   # sequential over layers
            vmem_limit_bytes=32 * 1024 * 1024,
        ),
    )(patches, params["patch_w"], params["patch_b"], cls2d, pos2d,
      sp["ln1w"], sp["ln1b"], sp["wqkv"], sp["bqkv"], sp["wo"], sp["bo"],
      sp["ln2w"], sp["ln2b"], sp["w1"], sp["b1"], sp["w2"], sp["b2"])
    return out2d.reshape(B, SEQ, HIDDEN)


# ---------------- pure-JAX reference (for correctness check) ----------------
def _ref_block(x, p):
    def ln(t, w, b):
        m = jnp.mean(t, -1, keepdims=True)
        v = jnp.mean((t - m) ** 2, -1, keepdims=True)
        return (t - m) / jnp.sqrt(v + EPS) * w + b
    xn = ln(x, p["ln1w"][0], p["ln1b"][0])
    q = xn @ p["wq"] + p["bq"][0]
    k = xn @ p["wk"] + p["bk"][0]
    v = xn @ p["wv"] + p["bv"][0]
    B, S, _ = x.shape
    def split(t):
        return t.reshape(B, S, NUM_HEADS, HEAD_DIM).transpose(0, 2, 1, 3)
    qh, kh, vh = split(q), split(k), split(v)
    s = jnp.einsum("bhqd,bhkd->bhqk", qh, kh) / math.sqrt(HEAD_DIM)
    p_attn = jax.nn.softmax(s, axis=-1)
    ctx = jnp.einsum("bhqk,bhkd->bhqd", p_attn, vh)
    ctx = ctx.transpose(0, 2, 1, 3).reshape(B, S, HIDDEN)
    x1 = x + ctx @ p["wo"] + p["bo"][0]
    xn2 = ln(x1, p["ln2w"][0], p["ln2b"][0])
    h1 = xn2 @ p["w1"] + p["b1"][0]
    h1 = 0.5 * h1 * (1.0 + lax.erf(h1 / SQRT2))
    return x1 + h1 @ p["w2"] + p["b2"][0]


def _ref_forward(x, params):
    patches = extract_patches(x)
    emb = patches @ params["patch_w"] + params["patch_b"][0]
    B = x.shape[0]
    cls = jnp.broadcast_to(params["cls"], (B, 1, HIDDEN))
    h = jnp.concatenate([cls, emb], axis=1) + params["pos"]
    for blk in params["blocks"]:
        h = _ref_block(h, blk)
    return h


# ---------------- deterministic parameter init ----------------
def init_params(key):
    keys = jax.random.split(key, 4 + NUM_BLOCKS)
    cpp = IN_CH * PATCH * PATCH
    params = {
        "patch_w": jax.random.normal(keys[0], (cpp, HIDDEN), jnp.float32) * 0.02,
        "patch_b": jax.random.normal(keys[1], (1, HIDDEN), jnp.float32) * 0.02,
        "cls": jax.random.normal(keys[2], (1, 1, HIDDEN), jnp.float32) * 0.02,
        "pos": jax.random.normal(keys[3], (1, SEQ, HIDDEN), jnp.float32) * 0.02,
        "blocks": [],
    }
    for i in range(NUM_BLOCKS):
        bk = jax.random.split(keys[4 + i], 12)
        blk = {
            "ln1w": jnp.ones((1, HIDDEN), jnp.float32),
            "ln1b": jnp.zeros((1, HIDDEN), jnp.float32),
            "wq": jax.random.normal(bk[0], (HIDDEN, HIDDEN), jnp.float32) * 0.05,
            "bq": jax.random.normal(bk[1], (1, HIDDEN), jnp.float32) * 0.01,
            "wk": jax.random.normal(bk[2], (HIDDEN, HIDDEN), jnp.float32) * 0.05,
            "bk": jax.random.normal(bk[3], (1, HIDDEN), jnp.float32) * 0.01,
            "wv": jax.random.normal(bk[4], (HIDDEN, HIDDEN), jnp.float32) * 0.05,
            "bv": jax.random.normal(bk[5], (1, HIDDEN), jnp.float32) * 0.01,
            "wo": jax.random.normal(bk[6], (HIDDEN, HIDDEN), jnp.float32) * 0.05,
            "bo": jax.random.normal(bk[7], (1, HIDDEN), jnp.float32) * 0.01,
            "ln2w": jnp.ones((1, HIDDEN), jnp.float32),
            "ln2b": jnp.zeros((1, HIDDEN), jnp.float32),
            "w1": jax.random.normal(bk[8], (HIDDEN, MLP_DIM), jnp.float32) * 0.05,
            "b1": jax.random.normal(bk[9], (1, MLP_DIM), jnp.float32) * 1e-6,
            "w2": jax.random.normal(bk[10], (MLP_DIM, HIDDEN), jnp.float32) * 0.05,
            "b2": jax.random.normal(bk[11], (1, HIDDEN), jnp.float32) * 1e-6,
        }
        params["blocks"].append(blk)
    return params


if __name__ == "__main__":
    key = jax.random.PRNGKey(0)
    k_x, k_p = jax.random.split(key)
    x = jax.random.normal(k_x, (2, IN_CH, IMG, IMG), jnp.float32)   # NCHW
    params = init_params(k_p)

    out = jax.block_until_ready(transformer_forward(x, params))
    ref = jax.block_until_ready(_ref_forward(x, params))

    assert out.shape == (2, SEQ, HIDDEN), out.shape
    # 2e-3 tolerance: approx (EUP) reciprocal in softmax vs exact division.
    err = float(jnp.max(jnp.abs(out - ref)))
    assert jnp.allclose(out, ref, rtol=2e-3, atol=2e-3), err

    print("KERNEL_OK")
</pallas_src>

<mosaic_0001>
module attributes {stable_mosaic.version = 11 : i64} {
  func.func @_fused_kernel(%arg0: i32, %arg1: memref<8x192xf32, #tpu.memory_space<vmem>>, %arg2: memref<192x32xf32, #tpu.memory_space<vmem>>, %arg3: memref<1x32xf32, #tpu.memory_space<vmem>>, %arg4: memref<1x32xf32, #tpu.memory_space<vmem>>, %arg5: memref<5x32xf32, #tpu.memory_space<vmem>>, %arg6: memref<1x1x32xf32, #tpu.memory_space<vmem>>, %arg7: memref<1x1x32xf32, #tpu.memory_space<vmem>>, %arg8: memref<1x32x96xf32, #tpu.memory_space<vmem>>, %arg9: memref<1x1x96xf32, #tpu.memory_space<vmem>>, %arg10: memref<1x32x32xf32, #tpu.memory_space<vmem>>, %arg11: memref<1x1x32xf32, #tpu.memory_space<vmem>>, %arg12: memref<1x1x32xf32, #tpu.memory_space<vmem>>, %arg13: memref<1x1x32xf32, #tpu.memory_space<vmem>>, %arg14: memref<1x32x64xf32, #tpu.memory_space<vmem>>, %arg15: memref<1x1x64xf32, #tpu.memory_space<vmem>>, %arg16: memref<1x64x32xf32, #tpu.memory_space<vmem>>, %arg17: memref<1x1x32xf32, #tpu.memory_space<vmem>>, %arg18: memref<10x32xf32, #tpu.memory_space<vmem>>) attributes {dimension_semantics = [#tpu.dimension_semantics<arbitrary>], iteration_bounds = array<i64: 3>, scalar_prefetch = 0 : i64, scratch_operands = 0 : i64, tpu.core_type = #tpu.core_type<tc>, window_params = [{pipeline_mode = #tpu.pipeline_mode<synchronous>, transform_indices = @transform_0, window_bounds = array<i64: 8, 192>}, {pipeline_mode = #tpu.pipeline_mode<synchronous>, transform_indices = @transform_1, window_bounds = array<i64: 192, 32>}, {pipeline_mode = #tpu.pipeline_mode<synchronous>, transform_indices = @transform_2, window_bounds = array<i64: 1, 32>}, {pipeline_mode = #tpu.pipeline_mode<synchronous>, transform_indices = @transform_3, window_bounds = array<i64: 1, 32>}, {pipeline_mode = #tpu.pipeline_mode<synchronous>, transform_indices = @transform_4, window_bounds = array<i64: 5, 32>}, {transform_indices = @transform_5, window_bounds = array<i64: 1, 1, 32>}, {transform_indices = @transform_6, window_bounds = array<i64: 1, 1, 32>}, {transform_indices = @transform_7, window_bounds = array<i64: 1, 32, 96>}, {transform_indices = @transform_8, window_bounds = array<i64: 1, 1, 96>}, {transform_indices = @transform_9, window_bounds = array<i64: 1, 32, 32>}, {transform_indices = @transform_10, window_bounds = array<i64: 1, 1, 32>}, {transform_indices = @transform_11, window_bounds = array<i64: 1, 1, 32>}, {transform_indices = @transform_12, window_bounds = array<i64: 1, 1, 32>}, {transform_indices = @transform_13, window_bounds = array<i64: 1, 32, 64>}, {transform_indices = @transform_14, window_bounds = array<i64: 1, 1, 64>}, {transform_indices = @transform_15, window_bounds = array<i64: 1, 64, 32>}, {transform_indices = @transform_16, window_bounds = array<i64: 1, 1, 32>}, {pipeline_mode = #tpu.pipeline_mode<synchronous>, transform_indices = @transform_17, window_bounds = array<i64: 10, 32>}]} {
    %c0_i32 = arith.constant 0 : i32
    %0 = arith.cmpi eq, %arg0, %c0_i32 : i32
    %1 = arith.extui %0 : i1 to i32
    %c0_i32_0 = arith.constant 0 : i32
    %2 = arith.cmpi ne, %1, %c0_i32_0 : i32
    scf.if %2 {
      %c0_96 = arith.constant 0 : index
      %c0_97 = arith.constant 0 : index
      %237 = vector.load %arg1[%c0_96, %c0_97] : memref<8x192xf32, #tpu.memory_space<vmem>>, vector<8x192xf32>
      %c0_98 = arith.constant 0 : index
      %c0_99 = arith.constant 0 : index
      %238 = vector.load %arg2[%c0_98, %c0_99] : memref<192x32xf32, #tpu.memory_space<vmem>>, vector<192x32xf32>
      %cst_100 = arith.constant dense<0.000000e+00> : vector<8x32xf32>
      %239 = tpu.matmul %237, %238, %cst_100 {dimension_numbers = #tpu.dot_dimension_numbers<[1], [0], [0], [1], [0, 0, 1, 1], [], []>} : vector<8x192xf32>, vector<192x32xf32>, vector<8x32xf32> -> vector<8x32xf32>
      %c0_101 = arith.constant 0 : index
      %c0_102 = arith.constant 0 : index
      %240 = vector.load %arg3[%c0_101, %c0_102] : memref<1x32xf32, #tpu.memory_space<vmem>>, vector<1x32xf32>
      %241 = vector.broadcast %240 : vector<1x32xf32> to vector<8x32xf32>
      %242 = arith.addf %239, %241 : vector<8x32xf32>
      %c0_103 = arith.constant 0 : index
      %c0_104 = arith.constant 0 : index
      %243 = vector.load %arg5[%c0_103, %c0_104] : memref<5x32xf32, #tpu.memory_space<vmem>>, vector<5x32xf32>
      %c0_105 = arith.constant 0 : index
      %c0_106 = arith.constant 0 : index
      %244 = vector.load %arg4[%c0_105, %c0_106] : memref<1x32xf32, #tpu.memory_space<vmem>>, vector<1x32xf32>
      %245 = vector.extract_strided_slice %243 {offsets = [0, 0], sizes = [1, 32], strides = [1, 1]} : vector<5x32xf32> to vector<1x32xf32>
      %246 = arith.addf %244, %245 : vector<1x32xf32>
      %c0_107 = arith.constant 0 : index
      %c0_108 = arith.constant 0 : index
      %247 = vector.load %arg18[%c0_107, %c0_108] : memref<10x32xf32, #tpu.memory_space<vmem>>, vector<1x32xf32>
      tpu.vector_store %arg18[%c0_107, %c0_108], %246 {strides = array<i32>} : memref<10x32xf32, #tpu.memory_space<vmem>>, vector<1x32xf32>,
      %248 = vector.extract_strided_slice %242 {offsets = [0, 0], sizes = [4, 32], strides = [1, 1]} : vector<8x32xf32> to vector<4x32xf32>
      %249 = vector.extract_strided_slice %243 {offsets = [1, 0], sizes = [4, 32], strides = [1, 1]} : vector<5x32xf32> to vector<4x32xf32>
      %250 = arith.addf %248, %249 : vector<4x32xf32>
      %c1 = arith.constant 1 : index
      %c0_109 = arith.constant 0 : index
      %251 = vector.load %arg18[%c1, %c0_109] : memref<10x32xf32, #tpu.memory_space<vmem>>, vector<4x32xf32>
      tpu.vector_store %arg18[%c1, %c0_109], %250 {strides = array<i32>} : memref<10x32xf32, #tpu.memory_space<vmem>>, vector<4x32xf32>,
      %c5 = arith.constant 5 : index
      %c0_110 = arith.constant 0 : index
      %252 = vector.load %arg18[%c5, %c0_110] : memref<10x32xf32, #tpu.memory_space<vmem>>, vector<1x32xf32>
      tpu.vector_store %arg18[%c5, %c0_110], %246 {strides = array<i32>} : memref<10x32xf32, #tpu.memory_space<vmem>>, vector<1x32xf32>,
      %253 = vector.extract_strided_slice %242 {offsets = [4, 0], sizes = [4, 32], strides = [1, 1]} : vector<8x32xf32> to vector<4x32xf32>
      %254 = vector.extract_strided_slice %243 {offsets = [1, 0], sizes = [4, 32], strides = [1, 1]} : vector<5x32xf32> to vector<4x32xf32>
      %255 = arith.addf %253, %254 : vector<4x32xf32>
      %c6 = arith.constant 6 : index
      %c0_111 = arith.constant 0 : index
      %256 = vector.load %arg18[%c6, %c0_111] : memref<10x32xf32, #tpu.memory_space<vmem>>, vector<4x32xf32>
      tpu.vector_store %arg18[%c6, %c0_111], %255 {strides = array<i32>} : memref<10x32xf32, #tpu.memory_space<vmem>>, vector<4x32xf32>,
    } else {
    }
    %c0 = arith.constant 0 : index
    %c0_1 = arith.constant 0 : index
    %3 = vector.load %arg18[%c0, %c0_1] : memref<10x32xf32, #tpu.memory_space<vmem>>, vector<10x32xf32>
    %c0_2 = arith.constant 0 : index
    %c0_3 = arith.constant 0 : index
    %c0_4 = arith.constant 0 : index
    %4 = vector.load %arg6[%c0_2, %c0_3, %c0_4] : memref<1x1x32xf32, #tpu.memory_space<vmem>>, vector<1x1x32xf32>
    %5 = vector.shape_cast %4 : vector<1x1x32xf32> to vector<1x32xf32>
    %c0_5 = arith.constant 0 : index
    %c0_6 = arith.constant 0 : index
    %c0_7 = arith.constant 0 : index
    %6 = vector.load %arg7[%c0_5, %c0_6, %c0_7] : memref<1x1x32xf32, #tpu.memory_space<vmem>>, vector<1x1x32xf32>
    %7 = vector.shape_cast %6 : vector<1x1x32xf32> to vector<1x32xf32>
    %cst = arith.constant dense<0.000000e+00> : vector<10xf32>
    %8 = vector.multi_reduction <add>, %3, %cst [1] : vector<10x32xf32> to vector<10xf32>
    %9 = vector.shape_cast %8 : vector<10xf32> to vector<10x1xf32>
    %cst_8 = arith.constant 3.200000e+01 : f32
    %10 = vector.broadcast %cst_8 : f32 to vector<10x1xf32>
    %11 = arith.divf %9, %10 : vector<10x1xf32>
    %12 = vector.broadcast %11 : vector<10x1xf32> to vector<10x32xf32>
    %13 = arith.subf %3, %12 : vector<10x32xf32>
    %14 = arith.mulf %13, %13 : vector<10x32xf32>
    %cst_9 = arith.constant dense<0.000000e+00> : vector<10xf32>
    %15 = vector.multi_reduction <add>, %14, %cst_9 [1] : vector<10x32xf32> to vector<10xf32>
    %16 = vector.shape_cast %15 : vector<10xf32> to vector<10x1xf32>
    %cst_10 = arith.constant 3.200000e+01 : f32
    %17 = vector.broadcast %cst_10 : f32 to vector<10x1xf32>
    %18 = arith.divf %16, %17 : vector<10x1xf32>
    %19 = vector.broadcast %11 : vector<10x1xf32> to vector<10x32xf32>
    %20 = arith.subf %3, %19 : vector<10x32xf32>
    %cst_11 = arith.constant 9.99999997E-7 : f32
    %21 = vector.broadcast %cst_11 : f32 to vector<10x1xf32>
    %22 = arith.addf %18, %21 : vector<10x1xf32>
    %23 = math.rsqrt %22 : vector<10x1xf32>
    %24 = vector.broadcast %23 : vector<10x1xf32> to vector<10x32xf32>
    %25 = arith.mulf %20, %24 : vector<10x32xf32>
    %26 = vector.broadcast %5 : vector<1x32xf32> to vector<10x32xf32>
    %27 = arith.mulf %25, %26 : vector<10x32xf32>
    %28 = vector.broadcast %7 : vector<1x32xf32> to vector<10x32xf32>
    %29 = arith.addf %27, %28 : vector<10x32xf32>
    %c0_12 = arith.constant 0 : index
    %c0_13 = arith.constant 0 : index
    %c0_14 = arith.constant 0 : index
    %30 = vector.load %arg8[%c0_12, %c0_13, %c0_14] : memref<1x32x96xf32, #tpu.memory_space<vmem>>, vector<1x32x96xf32>
    %31 = vector.shape_cast %30 : vector<1x32x96xf32> to vector<32x96xf32>
    %cst_15 = arith.constant dense<0.000000e+00> : vector<10x96xf32>
    %32 = tpu.matmul %29, %31, %cst_15 {dimension_numbers = #tpu.dot_dimension_numbers<[1], [0], [0], [1], [0, 0, 1, 1], [], []>} : vector<10x32xf32>, vector<32x96xf32>, vector<10x96xf32> -> vector<10x96xf32>
    %c0_16 = arith.constant 0 : index
    %c0_17 = arith.constant 0 : index
    %c0_18 = arith.constant 0 : index
    %33 = vector.load %arg9[%c0_16, %c0_17, %c0_18] : memref<1x1x96xf32, #tpu.memory_space<vmem>>, vector<1x1x96xf32>
    %34 = vector.shape_cast %33 : vector<1x1x96xf32> to vector<1x96xf32>
    %35 = vector.broadcast %34 : vector<1x96xf32> to vector<10x96xf32>
    %36 = arith.addf %32, %35 : vector<10x96xf32>
    %37 = vector.extract_strided_slice %36 {offsets = [0, 0], sizes = [10, 32], strides = [1, 1]} : vector<10x96xf32> to vector<10x32xf32>
    %38 = vector.extract_strided_slice %36 {offsets = [0, 32], sizes = [10, 32], strides = [1, 1]} : vector<10x96xf32> to vector<10x32xf32>
    %39 = vector.extract_strided_slice %36 {offsets = [0, 64], sizes = [10, 32], strides = [1, 1]} : vector<10x96xf32> to vector<10x32xf32>
    %40 = vector.extract_strided_slice %37 {offsets = [0, 0], sizes = [5, 8], strides = [1, 1]} : vector<10x32xf32> to vector<5x8xf32>
    %41 = vector.extract_strided_slice %38 {offsets = [0, 0], sizes = [5, 8], strides = [1, 1]} : vector<10x32xf32> to vector<5x8xf32>
    %42 = vector.extract_strided_slice %39 {offsets = [0, 0], sizes = [5, 8], strides = [1, 1]} : vector<10x32xf32> to vector<5x8xf32>
    %cst_19 = arith.constant dense<0.000000e+00> : vector<5x5xf32>
    %43 = tpu.matmul %40, %41, %cst_19 {dimension_numbers = #tpu.dot_dimension_numbers<[1], [1], [0], [0], [0, 0, 1, 0], [], []>} : vector<5x8xf32>, vector<5x8xf32>, vector<5x5xf32> -> vector<5x5xf32>
    %cst_20 = arith.constant 0.353553385 : f32
    %44 = vector.broadcast %cst_20 : f32 to vector<5x5xf32>
    %45 = arith.mulf %43, %44 : vector<5x5xf32>
    %cst_21 = arith.constant dense<0xFF800000> : vector<5xf32>
    %46 = vector.multi_reduction <maximumf>, %45, %cst_21 [1] : vector<5x5xf32> to vector<5xf32>
    %47 = vector.shape_cast %46 : vector<5xf32> to vector<5x1xf32>
    %48 = vector.broadcast %47 : vector<5x1xf32> to vector<5x5xf32>
    %49 = arith.subf %45, %48 : vector<5x5xf32>
    %50 = math.exp %49 : vector<5x5xf32>
    %cst_22 = arith.constant dense<0.000000e+00> : vector<5xf32>
    %51 = vector.multi_reduction <add>, %50, %cst_22 [1] : vector<5x5xf32> to vector<5xf32>
    %52 = vector.shape_cast %51 : vector<5xf32> to vector<5x1xf32>
    %53 = tpu.reciprocal %52 {approx = true} : vector<5x1xf32> -> vector<5x1xf32>
    %54 = vector.broadcast %53 : vector<5x1xf32> to vector<5x5xf32>
    %55 = arith.mulf %50, %54 : vector<5x5xf32>
    %cst_23 = arith.constant dense<0.000000e+00> : vector<5x8xf32>
    %56 = tpu.matmul %55, %42, %cst_23 {dimension_numbers = #tpu.dot_dimension_numbers<[1], [0], [0], [1], [0, 0, 1, 1], [], []>} : vector<5x5xf32>, vector<5x8xf32>, vector<5x8xf32> -> vector<5x8xf32>
    %57 = vector.extract_strided_slice %37 {offsets = [0, 8], sizes = [5, 8], strides = [1, 1]} : vector<10x32xf32> to vector<5x8xf32>
    %58 = vector.extract_strided_slice %38 {offsets = [0, 8], sizes = [5, 8], strides = [1, 1]} : vector<10x32xf32> to vector<5x8xf32>
    %59 = vector.extract_strided_slice %39 {offsets = [0, 8], sizes = [5, 8], strides = [1, 1]} : vector<10x32xf32> to vector<5x8xf32>
    %cst_24 = arith.constant dense<0.000000e+00> : vector<5x5xf32>
    %60 = tpu.matmul %57, %58, %cst_24 {dimension_numbers = #tpu.dot_dimension_numbers<[1], [1], [0], [0], [0, 0, 1, 0], [], []>} : vector<5x8xf32>, vector<5x8xf32>, vector<5x5xf32> -> vector<5x5xf32>
    %cst_25 = arith.constant 0.353553385 : f32
    %61 = vector.broadcast %cst_25 : f32 to vector<5x5xf32>
    %62 = arith.mulf %60, %61 : vector<5x5xf32>
    %cst_26 = arith.constant dense<0xFF800000> : vector<5xf32>
    %63 = vector.multi_reduction <maximumf>, %62, %cst_26 [1] : vector<5x5xf32> to vector<5xf32>
    %64 = vector.shape_cast %63 : vector<5xf32> to vector<5x1xf32>
    %65 = vector.broadcast %64 : vector<5x1xf32> to vector<5x5xf32>
    %66 = arith.subf %62, %65 : vector<5x5xf32>
    %67 = math.exp %66 : vector<5x5xf32>
    %cst_27 = arith.constant dense<0.000000e+00> : vector<5xf32>
    %68 = vector.multi_reduction <add>, %67, %cst_27 [1] : vector<5x5xf32> to vector<5xf32>
    %69 = vector.shape_cast %68 : vector<5xf32> to vector<5x1xf32>
    %70 = tpu.reciprocal %69 {approx = true} : vector<5x1xf32> -> vector<5x1xf32>
    %71 = vector.broadcast %70 : vector<5x1xf32> to vector<5x5xf32>
    %72 = arith.mulf %67, %71 : vector<5x5xf32>
    %cst_28 = arith.constant dense<0.000000e+00> : vector<5x8xf32>
    %73 = tpu.matmul %72, %59, %cst_28 {dimension_numbers = #tpu.dot_dimension_numbers<[1], [0], [0], [1], [0, 0, 1, 1], [], []>} : vector<5x5xf32>, vector<5x8xf32>, vector<5x8xf32> -> vector<5x8xf32>
    %74 = vector.extract_strided_slice %37 {offsets = [0, 16], sizes = [5, 8], strides = [1, 1]} : vector<10x32xf32> to vector<5x8xf32>
    %75 = vector.extract_strided_slice %38 {offsets = [0, 16], sizes = [5, 8], strides = [1, 1]} : vector<10x32xf32> to vector<5x8xf32>
    %76 = vector.extract_strided_slice %39 {offsets = [0, 16], sizes = [5, 8], strides = [1, 1]} : vector<10x32xf32> to vector<5x8xf32>
    %cst_29 = arith.constant dense<0.000000e+00> : vector<5x5xf32>
    %77 = tpu.matmul %74, %75, %cst_29 {dimension_numbers = #tpu.dot_dimension_numbers<[1], [1], [0], [0], [0, 0, 1, 0], [], []>} : vector<5x8xf32>, vector<5x8xf32>, vector<5x5xf32> -> vector<5x5xf32>
    %cst_30 = arith.constant 0.353553385 : f32
    %78 = vector.broadcast %cst_30 : f32 to vector<5x5xf32>
    %79 = arith.mulf %77, %78 : vector<5x5xf32>
    %cst_31 = arith.constant dense<0xFF800000> : vector<5xf32>
    %80 = vector.multi_reduction <maximumf>, %79, %cst_31 [1] : vector<5x5xf32> to vector<5xf32>
    %81 = vector.shape_cast %80 : vector<5xf32> to vector<5x1xf32>
    %82 = vector.broadcast %81 : vector<5x1xf32> to vector<5x5xf32>
    %83 = arith.subf %79, %82 : vector<5x5xf32>
    %84 = math.exp %83 : vector<5x5xf32>
    %cst_32 = arith.constant dense<0.000000e+00> : vector<5xf32>
    %85 = vector.multi_reduction <add>, %84, %cst_32 [1] : vector<5x5xf32> to vector<5xf32>
    %86 = vector.shape_cast %85 : vector<5xf32> to vector<5x1xf32>
    %87 = tpu.reciprocal %86 {approx = true} : vector<5x1xf32> -> vector<5x1xf32>
    %88 = vector.broadcast %87 : vector<5x1xf32> to vector<5x5xf32>
    %89 = arith.mulf %84, %88 : vector<5x5xf32>
    %cst_33 = arith.constant dense<0.000000e+00> : vector<5x8xf32>
    %90 = tpu.matmul %89, %76, %cst_33 {dimension_numbers = #tpu.dot_dimension_numbers<[1], [0], [0], [1], [0, 0, 1, 1], [], []>} : vector<5x5xf32>, vector<5x8xf32>, vector<5x8xf32> -> vector<5x8xf32>
    %91 = vector.extract_strided_slice %37 {offsets = [0, 24], sizes = [5, 8], strides = [1, 1]} : vector<10x32xf32> to vector<5x8xf32>
    %92 = vector.extract_strided_slice %38 {offsets = [0, 24], sizes = [5, 8], strides = [1, 1]} : vector<10x32xf32> to vector<5x8xf32>
    %93 = vector.extract_strided_slice %39 {offsets = [0, 24], sizes = [5, 8], strides = [1, 1]} : vector<10x32xf32> to vector<5x8xf32>
    %cst_34 = arith.constant dense<0.000000e+00> : vector<5x5xf32>
    %94 = tpu.matmul %91, %92, %cst_34 {dimension_numbers = #tpu.dot_dimension_numbers<[1], [1], [0], [0], [0, 0, 1, 0], [], []>} : vector<5x8xf32>, vector<5x8xf32>, vector<5x5xf32> -> vector<5x5xf32>
    %cst_35 = arith.constant 0.353553385 : f32
    %95 = vector.broadcast %cst_35 : f32 to vector<5x5xf32>
    %96 = arith.mulf %94, %95 : vector<5x5xf32>
    %cst_36 = arith.constant dense<0xFF800000> : vector<5xf32>
    %97 = vector.multi_reduction <maximumf>, %96, %cst_36 [1] : vector<5x5xf32> to vector<5xf32>
    %98 = vector.shape_cast %97 : vector<5xf32> to vector<5x1xf32>
    %99 = vector.broadcast %98 : vector<5x1xf32> to vector<5x5xf32>
    %100 = arith.subf %96, %99 : vector<5x5xf32>
    %101 = math.exp %100 : vector<5x5xf32>
    %cst_37 = arith.constant dense<0.000000e+00> : vector<5xf32>
    %102 = vector.multi_reduction <add>, %101, %cst_37 [1] : vector<5x5xf32> to vector<5xf32>
    %103 = vector.shape_cast %102 : vector<5xf32> to vector<5x1xf32>
    %104 = tpu.reciprocal %103 {approx = true} : vector<5x1xf32> -> vector<5x1xf32>
    %105 = vector.broadcast %104 : vector<5x1xf32> to vector<5x5xf32>
    %106 = arith.mulf %101, %105 : vector<5x5xf32>
    %cst_38 = arith.constant dense<0.000000e+00> : vector<5x8xf32>
    %107 = tpu.matmul %106, %93, %cst_38 {dimension_numbers = #tpu.dot_dimension_numbers<[1], [0], [0], [1], [0, 0, 1, 1], [], []>} : vector<5x5xf32>, vector<5x8xf32>, vector<5x8xf32> -> vector<5x8xf32>
    %108 = tpu.concatenate %56, %73, %90, %107 in 1 : vector<5x8xf32>, vector<5x8xf32>, vector<5x8xf32>, vector<5x8xf32> -> vector<5x32xf32>
    %109 = vector.extract_strided_slice %37 {offsets = [5, 0], sizes = [5, 8], strides = [1, 1]} : vector<10x32xf32> to vector<5x8xf32>
    %110 = vector.extract_strided_slice %38 {offsets = [5, 0], sizes = [5, 8], strides = [1, 1]} : vector<10x32xf32> to vector<5x8xf32>
    %111 = vector.extract_strided_slice %39 {offsets = [5, 0], sizes = [5, 8], strides = [1, 1]} : vector<10x32xf32> to vector<5x8xf32>
    %cst_39 = arith.constant dense<0.000000e+00> : vector<5x5xf32>
    %112 = tpu.matmul %109, %110, %cst_39 {dimension_numbers = #tpu.dot_dimension_numbers<[1], [1], [0], [0], [0, 0, 1, 0], [], []>} : vector<5x8xf32>, vector<5x8xf32>, vector<5x5xf32> -> vector<5x5xf32>
    %cst_40 = arith.constant 0.353553385 : f32
    %113 = vector.broadcast %cst_40 : f32 to vector<5x5xf32>
    %114 = arith.mulf %112, %113 : vector<5x5xf32>
    %cst_41 = arith.constant dense<0xFF800000> : vector<5xf32>
    %115 = vector.multi_reduction <maximumf>, %114, %cst_41 [1] : vector<5x5xf32> to vector<5xf32>
    %116 = vector.shape_cast %115 : vector<5xf32> to vector<5x1xf32>
    %117 = vector.broadcast %116 : vector<5x1xf32> to vector<5x5xf32>
    %118 = arith.subf %114, %117 : vector<5x5xf32>
    %119 = math.exp %118 : vector<5x5xf32>
    %cst_42 = arith.constant dense<0.000000e+00> : vector<5xf32>
    %120 = vector.multi_reduction <add>, %119, %cst_42 [1] : vector<5x5xf32> to vector<5xf32>
    %121 = vector.shape_cast %120 : vector<5xf32> to vector<5x1xf32>
    %122 = tpu.reciprocal %121 {approx = true} : vector<5x1xf32> -> vector<5x1xf32>
    %123 = vector.broadcast %122 : vector<5x1xf32> to vector<5x5xf32>
    %124 = arith.mulf %119, %123 : vector<5x5xf32>
    %cst_43 = arith.constant dense<0.000000e+00> : vector<5x8xf32>
    %125 = tpu.matmul %124, %111, %cst_43 {dimension_numbers = #tpu.dot_dimension_numbers<[1], [0], [0], [1], [0, 0, 1, 1], [], []>} : vector<5x5xf32>, vector<5x8xf32>, vector<5x8xf32> -> vector<5x8xf32>
    %126 = vector.extract_strided_slice %37 {offsets = [5, 8], sizes = [5, 8], strides = [1, 1]} : vector<10x32xf32> to vector<5x8xf32>
    %127 = vector.extract_strided_slice %38 {offsets = [5, 8], sizes = [5, 8], strides = [1, 1]} : vector<10x32xf32> to vector<5x8xf32>
    %128 = vector.extract_strided_slice %39 {offsets = [5, 8], sizes = [5, 8], strides = [1, 1]} : vector<10x32xf32> to vector<5x8xf32>
    %cst_44 = arith.constant dense<0.000000e+00> : vector<5x5xf32>
    %129 = tpu.matmul %126, %127, %cst_44 {dimension_numbers = #tpu.dot_dimension_numbers<[1], [1], [0], [0], [0, 0, 1, 0], [], []>} : vector<5x8xf32>, vector<5x8xf32>, vector<5x5xf32> -> vector<5x5xf32>
    %cst_45 = arith.constant 0.353553385 : f32
    %130 = vector.broadcast %cst_45 : f32 to vector<5x5xf32>
    %131 = arith.mulf %129, %130 : vector<5x5xf32>
    %cst_46 = arith.constant dense<0xFF800000> : vector<5xf32>
    %132 = vector.multi_reduction <maximumf>, %131, %cst_46 [1] : vector<5x5xf32> to vector<5xf32>
    %133 = vector.shape_cast %132 : vector<5xf32> to vector<5x1xf32>
    %134 = vector.broadcast %133 : vector<5x1xf32> to vector<5x5xf32>
    %135 = arith.subf %131, %134 : vector<5x5xf32>
    %136 = math.exp %135 : vector<5x5xf32>
    %cst_47 = arith.constant dense<0.000000e+00> : vector<5xf32>
    %137 = vector.multi_reduction <add>, %136, %cst_47 [1] : vector<5x5xf32> to vector<5xf32>
    %138 = vector.shape_cast %137 : vector<5xf32> to vector<5x1xf32>
    %139 = tpu.reciprocal %138 {approx = true} : vector<5x1xf32> -> vector<5x1xf32>
    %140 = vector.broadcast %139 : vector<5x1xf32> to vector<5x5xf32>
    %141 = arith.mulf %136, %140 : vector<5x5xf32>
    %cst_48 = arith.constant dense<0.000000e+00> : vector<5x8xf32>
    %142 = tpu.matmul %141, %128, %cst_48 {dimension_numbers = #tpu.dot_dimension_numbers<[1], [0], [0], [1], [0, 0, 1, 1], [], []>} : vector<5x5xf32>, vector<5x8xf32>, vector<5x8xf32> -> vector<5x8xf32>
    %143 = vector.extract_strided_slice %37 {offsets = [5, 16], sizes = [5, 8], strides = [1, 1]} : vector<10x32xf32> to vector<5x8xf32>
    %144 = vector.extract_strided_slice %38 {offsets = [5, 16], sizes = [5, 8], strides = [1, 1]} : vector<10x32xf32> to vector<5x8xf32>
    %145 = vector.extract_strided_slice %39 {offsets = [5, 16], sizes = [5, 8], strides = [1, 1]} : vector<10x32xf32> to vector<5x8xf32>
    %cst_49 = arith.constant dense<0.000000e+00> : vector<5x5xf32>
    %146 = tpu.matmul %143, %144, %cst_49 {dimension_numbers = #tpu.dot_dimension_numbers<[1], [1], [0], [0], [0, 0, 1, 0], [], []>} : vector<5x8xf32>, vector<5x8xf32>, vector<5x5xf32> -> vector<5x5xf32>
    %cst_50 = arith.constant 0.353553385 : f32
    %147 = vector.broadcast %cst_50 : f32 to vector<5x5xf32>
    %148 = arith.mulf %146, %147 : vector<5x5xf32>
    %cst_51 = arith.constant dense<0xFF800000> : vector<5xf32>
    %149 = vector.multi_reduction <maximumf>, %148, %cst_51 [1] : vector<5x5xf32> to vector<5xf32>
    %150 = vector.shape_cast %149 : vector<5xf32> to vector<5x1xf32>
    %151 = vector.broadcast %150 : vector<5x1xf32> to vector<5x5xf32>
    %152 = arith.subf %148, %151 : vector<5x5xf32>
    %153 = math.exp %152 : vector<5x5xf32>
    %cst_52 = arith.constant dense<0.000000e+00> : vector<5xf32>
    %154 = vector.multi_reduction <add>, %153, %cst_52 [1] : vector<5x5xf32> to vector<5xf32>
    %155 = vector.shape_cast %154 : vector<5xf32> to vector<5x1xf32>
    %156 = tpu.reciprocal %155 {approx = true} : vector<5x1xf32> -> vector<5x1xf32>
    %157 = vector.broadcast %156 : vector<5x1xf32> to vector<5x5xf32>
    %158 = arith.mulf %153, %157 : vector<5x5xf32>
    %cst_53 = arith.constant dense<0.000000e+00> : vector<5x8xf32>
    %159 = tpu.matmul %158, %145, %cst_53 {dimension_numbers = #tpu.dot_dimension_numbers<[1], [0], [0], [1], [0, 0, 1, 1], [], []>} : vector<5x5xf32>, vector<5x8xf32>, vector<5x8xf32> -> vector<5x8xf32>
    %160 = vector.extract_strided_slice %37 {offsets = [5, 24], sizes = [5, 8], strides = [1, 1]} : vector<10x32xf32> to vector<5x8xf32>
    %161 = vector.extract_strided_slice %38 {offsets = [5, 24], sizes = [5, 8], strides = [1, 1]} : vector<10x32xf32> to vector<5x8xf32>
    %162 = vector.extract_strided_slice %39 {offsets = [5, 24], sizes = [5, 8], strides = [1, 1]} : vector<10x32xf32> to vector<5x8xf32>
    %cst_54 = arith.constant dense<0.000000e+00> : vector<5x5xf32>
    %163 = tpu.matmul %160, %161, %cst_54 {dimension_numbers = #tpu.dot_dimension_numbers<[1], [1], [0], [0], [0, 0, 1, 0], [], []>} : vector<5x8xf32>, vector<5x8xf32>, vector<5x5xf32> -> vector<5x5xf32>
    %cst_55 = arith.constant 0.353553385 : f32
    %164 = vector.broadcast %cst_55 : f32 to vector<5x5xf32>
    %165 = arith.mulf %163, %164 : vector<5x5xf32>
    %cst_56 = arith.constant dense<0xFF800000> : vector<5xf32>
    %166 = vector.multi_reduction <maximumf>, %165, %cst_56 [1] : vector<5x5xf32> to vector<5xf32>
    %167 = vector.shape_cast %166 : vector<5xf32> to vector<5x1xf32>
    %168 = vector.broadcast %167 : vector<5x1xf32> to vector<5x5xf32>
    %169 = arith.subf %165, %168 : vector<5x5xf32>
    %170 = math.exp %169 : vector<5x5xf32>
    %cst_57 = arith.constant dense<0.000000e+00> : vector<5xf32>
    %171 = vector.multi_reduction <add>, %170, %cst_57 [1] : vector<5x5xf32> to vector<5xf32>
    %172 = vector.shape_cast %171 : vector<5xf32> to vector<5x1xf32>
    %173 = tpu.reciprocal %172 {approx = true} : vector<5x1xf32> -> vector<5x1xf32>
    %174 = vector.broadcast %173 : vector<5x1xf32> to vector<5x5xf32>
    %175 = arith.mulf %170, %174 : vector<5x5xf32>
    %cst_58 = arith.constant dense<0.000000e+00> : vector<5x8xf32>
    %176 = tpu.matmul %175, %162, %cst_58 {dimension_numbers = #tpu.dot_dimension_numbers<[1], [0], [0], [1], [0, 0, 1, 1], [], []>} : vector<5x5xf32>, vector<5x8xf32>, vector<5x8xf32> -> vector<5x8xf32>
    %177 = tpu.concatenate %125, %142, %159, %176 in 1 : vector<5x8xf32>, vector<5x8xf32>, vector<5x8xf32>, vector<5x8xf32> -> vector<5x32xf32>
    %178 = tpu.concatenate %108, %177 in 0 : vector<5x32xf32>, vector<5x32xf32> -> vector<10x32xf32>
    %c0_59 = arith.constant 0 : index
    %c0_60 = arith.constant 0 : index
    %c0_61 = arith.constant 0 : index
    %179 = vector.load %arg10[%c0_59, %c0_60, %c0_61] : memref<1x32x32xf32, #tpu.memory_space<vmem>>, vector<1x32x32xf32>
    %180 = vector.shape_cast %179 : vector<1x32x32xf32> to vector<32x32xf32>
    %cst_62 = arith.constant dense<0.000000e+00> : vector<10x32xf32>
    %181 = tpu.matmul %178, %180, %cst_62 {dimension_numbers = #tpu.dot_dimension_numbers<[1], [0], [0], [1], [0, 0, 1, 1], [], []>} : vector<10x32xf32>, vector<32x32xf32>, vector<10x32xf32> -> vector<10x32xf32>
    %c0_63 = arith.constant 0 : index
    %c0_64 = arith.constant 0 : index
    %c0_65 = arith.constant 0 : index
    %182 = vector.load %arg11[%c0_63, %c0_64, %c0_65] : memref<1x1x32xf32, #tpu.memory_space<vmem>>, vector<1x1x32xf32>
    %183 = vector.shape_cast %182 : vector<1x1x32xf32> to vector<1x32xf32>
    %184 = vector.broadcast %183 : vector<1x32xf32> to vector<10x32xf32>
    %185 = arith.addf %181, %184 : vector<10x32xf32>
    %186 = arith.addf %3, %185 : vector<10x32xf32>
    %c0_66 = arith.constant 0 : index
    %c0_67 = arith.constant 0 : index
    %c0_68 = arith.constant 0 : index
    %187 = vector.load %arg12[%c0_66, %c0_67, %c0_68] : memref<1x1x32xf32, #tpu.memory_space<vmem>>, vector<1x1x32xf32>
    %188 = vector.shape_cast %187 : vector<1x1x32xf32> to vector<1x32xf32>
    %c0_69 = arith.constant 0 : index
    %c0_70 = arith.constant 0 : index
    %c0_71 = arith.constant 0 : index
    %189 = vector.load %arg13[%c0_69, %c0_70, %c0_71] : memref<1x1x32xf32, #tpu.memory_space<vmem>>, vector<1x1x32xf32>
    %190 = vector.shape_cast %189 : vector<1x1x32xf32> to vector<1x32xf32>
    %cst_72 = arith.constant dense<0.000000e+00> : vector<10xf32>
    %191 = vector.multi_reduction <add>, %186, %cst_72 [1] : vector<10x32xf32> to vector<10xf32>
    %192 = vector.shape_cast %191 : vector<10xf32> to vector<10x1xf32>
    %cst_73 = arith.constant 3.200000e+01 : f32
    %193 = vector.broadcast %cst_73 : f32 to vector<10x1xf32>
    %194 = arith.divf %192, %193 : vector<10x1xf32>
    %195 = vector.broadcast %194 : vector<10x1xf32> to vector<10x32xf32>
    %196 = arith.subf %186, %195 : vector<10x32xf32>
    %197 = arith.mulf %196, %196 : vector<10x32xf32>
    %cst_74 = arith.constant dense<0.000000e+00> : vector<10xf32>
    %198 = vector.multi_reduction <add>, %197, %cst_74 [1] : vector<10x32xf32> to vector<10xf32>
    %199 = vector.shape_cast %198 : vector<10xf32> to vector<10x1xf32>
    %cst_75 = arith.constant 3.200000e+01 : f32
    %200 = vector.broadcast %cst_75 : f32 to vector<10x1xf32>
    %201 = arith.divf %199, %200 : vector<10x1xf32>
    %202 = vector.broadcast %194 : vector<10x1xf32> to vector<10x32xf32>
    %203 = arith.subf %186, %202 : vector<10x32xf32>
    %cst_76 = arith.constant 9.99999997E-7 : f32
    %204 = vector.broadcast %cst_76 : f32 to vector<10x1xf32>
    %205 = arith.addf %201, %204 : vector<10x1xf32>
    %206 = math.rsqrt %205 : vector<10x1xf32>
    %207 = vector.broadcast %206 : vector<10x1xf32> to vector<10x32xf32>
    %208 = arith.mulf %203, %207 : vector<10x32xf32>
    %209 = vector.broadcast %188 : vector<1x32xf32> to vector<10x32xf32>
    %210 = arith.mulf %208, %209 : vector<10x32xf32>
    %211 = vector.broadcast %190 : vector<1x32xf32> to vector<10x32xf32>
    %212 = arith.addf %210, %211 : vector<10x32xf32>
    %c0_77 = arith.constant 0 : index
    %c0_78 = arith.constant 0 : index
    %c0_79 = arith.constant 0 : index
    %213 = vector.load %arg14[%c0_77, %c0_78, %c0_79] : memref<1x32x64xf32, #tpu.memory_space<vmem>>, vector<1x32x64xf32>
    %214 = vector.shape_cast %213 : vector<1x32x64xf32> to vector<32x64xf32>
    %cst_80 = arith.constant dense<0.000000e+00> : vector<10x64xf32>
    %215 = tpu.matmul %212, %214, %cst_80 {dimension_numbers = #tpu.dot_dimension_numbers<[1], [0], [0], [1], [0, 0, 1, 1], [], []>} : vector<10x32xf32>, vector<32x64xf32>, vector<10x64xf32> -> vector<10x64xf32>
    %c0_81 = arith.constant 0 : index
    %c0_82 = arith.constant 0 : index
    %c0_83 = arith.constant 0 : index
    %216 = vector.load %arg15[%c0_81, %c0_82, %c0_83] : memref<1x1x64xf32, #tpu.memory_space<vmem>>, vector<1x1x64xf32>
    %217 = vector.shape_cast %216 : vector<1x1x64xf32> to vector<1x64xf32>
    %218 = vector.broadcast %217 : vector<1x64xf32> to vector<10x64xf32>
    %219 = arith.addf %215, %218 : vector<10x64xf32>
    %cst_84 = arith.constant 5.000000e-01 : f32
    %220 = vector.broadcast %cst_84 : f32 to vector<10x64xf32>
    %221 = arith.mulf %220, %219 : vector<10x64xf32>
    %cst_85 = arith.constant 1.41421354 : f32
    %222 = vector.broadcast %cst_85 : f32 to vector<10x64xf32>
    %223 = arith.divf %219, %222 : vector<10x64xf32>
    %224 = math.erf %223 : vector<10x64xf32>
    %cst_86 = arith.constant 1.000000e+00 : f32
    %225 = vector.broadcast %cst_86 : f32 to vector<10x64xf32>
    %226 = arith.addf %225, %224 : vector<10x64xf32>
    %227 = arith.mulf %221, %226 : vector<10x64xf32>
    %c0_87 = arith.constant 0 : index
    %c0_88 = arith.constant 0 : index
    %c0_89 = arith.constant 0 : index
    %228 = vector.load %arg16[%c0_87, %c0_88, %c0_89] : memref<1x64x32xf32, #tpu.memory_space<vmem>>, vector<1x64x32xf32>
    %229 = vector.shape_cast %228 : vector<1x64x32xf32> to vector<64x32xf32>
    %cst_90 = arith.constant dense<0.000000e+00> : vector<10x32xf32>
    %230 = tpu.matmul %227, %229, %cst_90 {dimension_numbers = #tpu.dot_dimension_numbers<[1], [0], [0], [1], [0, 0, 1, 1], [], []>} : vector<10x64xf32>, vector<64x32xf32>, vector<10x32xf32> -> vector<10x32xf32>
    %c0_91 = arith.constant 0 : index
    %c0_92 = arith.constant 0 : index
    %c0_93 = arith.constant 0 : index
    %231 = vector.load %arg17[%c0_91, %c0_92, %c0_93] : memref<1x1x32xf32, #tpu.memory_space<vmem>>, vector<1x1x32xf32>
    %232 = vector.shape_cast %231 : vector<1x1x32xf32> to vector<1x32xf32>
    %233 = vector.broadcast %232 : vector<1x32xf32> to vector<10x32xf32>
    %234 = arith.addf %230, %233 : vector<10x32xf32>
    %235 = arith.addf %186, %234 : vector<10x32xf32>
    %c0_94 = arith.constant 0 : index
    %c0_95 = arith.constant 0 : index
    %236 = vector.load %arg18[%c0_94, %c0_95] : memref<10x32xf32, #tpu.memory_space<vmem>>, vector<10x32xf32>
    tpu.vector_store %arg18[%c0_94, %c0_95], %235 {strides = array<i32>} : memref<10x32xf32, #tpu.memory_space<vmem>>, vector<10x32xf32>,
    return
  }
  func.func @transform_0(%arg0: i32) -> (i32, i32) {
    %c0_i32 = arith.constant 0 : i32
    %c0_i32_0 = arith.constant 0 : i32
    %c0_i32_1 = arith.constant 0 : i32
    return %c0_i32, %c0_i32_0 : i32, i32
  }
  func.func @transform_1(%arg0: i32) -> (i32, i32) {
    %c0_i32 = arith.constant 0 : i32
    %c0_i32_0 = arith.constant 0 : i32
    %c0_i32_1 = arith.constant 0 : i32
    return %c0_i32, %c0_i32_0 : i32, i32
  }
  func.func @transform_2(%arg0: i32) -> (i32, i32) {
    %c0_i32 = arith.constant 0 : i32
    %c0_i32_0 = arith.constant 0 : i32
    %c0_i32_1 = arith.constant 0 : i32
    return %c0_i32, %c0_i32_0 : i32, i32
  }
  func.func @transform_3(%arg0: i32) -> (i32, i32) {
    %c0_i32 = arith.constant 0 : i32
    %c0_i32_0 = arith.constant 0 : i32
    %c0_i32_1 = arith.constant 0 : i32
    return %c0_i32, %c0_i32_0 : i32, i32
  }
  func.func @transform_4(%arg0: i32) -> (i32, i32) {
    %c0_i32 = arith.constant 0 : i32
    %c0_i32_0 = arith.constant 0 : i32
    %c0_i32_1 = arith.constant 0 : i32
    return %c0_i32, %c0_i32_0 : i32, i32
  }
  func.func @transform_5(%arg0: i32) -> (i32, i32, i32) {
    %c0_i32 = arith.constant 0 : i32
    %c0_i32_0 = arith.constant 0 : i32
    %c0_i32_1 = arith.constant 0 : i32
    return %arg0, %c0_i32, %c0_i32_0 : i32, i32, i32
  }
  func.func @transform_6(%arg0: i32) -> (i32, i32, i32) {
    %c0_i32 = arith.constant 0 : i32
    %c0_i32_0 = arith.constant 0 : i32
    %c0_i32_1 = arith.constant 0 : i32
    return %arg0, %c0_i32, %c0_i32_0 : i32, i32, i32
  }
  func.func @transform_7(%arg0: i32) -> (i32, i32, i32) {
    %c0_i32 = arith.constant 0 : i32
    %c0_i32_0 = arith.constant 0 : i32
    %c0_i32_1 = arith.constant 0 : i32
    return %arg0, %c0_i32, %c0_i32_0 : i32, i32, i32
  }
  func.func @transform_8(%arg0: i32) -> (i32, i32, i32) {
    %c0_i32 = arith.constant 0 : i32
    %c0_i32_0 = arith.constant 0 : i32
    %c0_i32_1 = arith.constant 0 : i32
    return %arg0, %c0_i32, %c0_i32_0 : i32, i32, i32
  }
  func.func @transform_9(%arg0: i32) -> (i32, i32, i32) {
    %c0_i32 = arith.constant 0 : i32
    %c0_i32_0 = arith.constant 0 : i32
    %c0_i32_1 = arith.constant 0 : i32
    return %arg0, %c0_i32, %c0_i32_0 : i32, i32, i32
  }
  func.func @transform_10(%arg0: i32) -> (i32, i32, i32) {
    %c0_i32 = arith.constant 0 : i32
    %c0_i32_0 = arith.constant 0 : i32
    %c0_i32_1 = arith.constant 0 : i32
    return %arg0, %c0_i32, %c0_i32_0 : i32, i32, i32
  }
  func.func @transform_11(%arg0: i32) -> (i32, i32, i32) {
    %c0_i32 = arith.constant 0 : i32
    %c0_i32_0 = arith.constant 0 : i32
    %c0_i32_1 = arith.constant 0 : i32
    return %arg0, %c0_i32, %c0_i32_0 : i32, i32, i32
  }
  func.func @transform_12(%arg0: i32) -> (i32, i32, i32) {
    %c0_i32 = arith.constant 0 : i32
    %c0_i32_0 = arith.constant 0 : i32
    %c0_i32_1 = arith.constant 0 : i32
    return %arg0, %c0_i32, %c0_i32_0 : i32, i32, i32
  }
  func.func @transform_13(%arg0: i32) -> (i32, i32, i32) {
    %c0_i32 = arith.constant 0 : i32
    %c0_i32_0 = arith.constant 0 : i32
    %c0_i32_1 = arith.constant 0 : i32
    return %arg0, %c0_i32, %c0_i32_0 : i32, i32, i32
  }
  func.func @transform_14(%arg0: i32) -> (i32, i32, i32) {
    %c0_i32 = arith.constant 0 : i32
    %c0_i32_0 = arith.constant 0 : i32
    %c0_i32_1 = arith.constant 0 : i32
    return %arg0, %c0_i32, %c0_i32_0 : i32, i32, i32
  }
  func.func @transform_15(%arg0: i32) -> (i32, i32, i32) {
    %c0_i32 = arith.constant 0 : i32
    %c0_i32_0 = arith.constant 0 : i32
    %c0_i32_1 = arith.constant 0 : i32
    return %arg0, %c0_i32, %c0_i32_0 : i32, i32, i32
  }
  func.func @transform_16(%arg0: i32) -> (i32, i32, i32) {
    %c0_i32 = arith.constant 0 : i32
    %c0_i32_0 = arith.constant 0 : i32
    %c0_i32_1 = arith.constant 0 : i32
    return %arg0, %c0_i32, %c0_i32_0 : i32, i32, i32
  }
  func.func @transform_17(%arg0: i32) -> (i32, i32) {
    %c0_i32 = arith.constant 0 : i32
    %c0_i32_0 = arith.constant 0 : i32
    %c0_i32_1 = arith.constant 0 : i32
    return %c0_i32, %c0_i32_0 : i32, i32
  }
}

</mosaic_0001>

<llo_original>
// kernel: tpu_custom_call.1
$region0: #{tpu_custom_call.1}
  #allocation0 [shape = 'u32[]', space=smem, size = 0x4, offset = 0x4, fixed_abs, tag = 'smem constant byte address 0x4 - core index']
  #allocation1 [shape = 'u32[144,128]{1,0:T(1,128)}', space=vmem, size = 0x12000, scoped, tag = 'internal scratch']
  %s0 = inlined_call_operand.vmem [shape: f32[8,192], index: 0, kind: input, shape index: {}]
  %s1 = inlined_call_operand.vmem [shape: f32[192,32], index: 1, kind: input, shape index: {}]
  %s2 = inlined_call_operand.vmem [shape: f32[1,32], index: 2, kind: input, shape index: {}]
  %s3 = inlined_call_operand.vmem [shape: f32[1,32], index: 3, kind: input, shape index: {}]
  %s4 = inlined_call_operand.vmem [shape: f32[5,32], index: 4, kind: input, shape index: {}]
  %s5 = inlined_call_operand.vmem [shape: f32[3,1,32], index: 5, kind: input, shape index: {}]
  %s6 = inlined_call_operand.vmem [shape: f32[3,1,32], index: 6, kind: input, shape index: {}]
  %s7 = inlined_call_operand.vmem [shape: f32[3,32,96], index: 7, kind: input, shape index: {}]
  %s8 = inlined_call_operand.vmem [shape: f32[3,1,96], index: 8, kind: input, shape index: {}]
  %s9 = inlined_call_operand.vmem [shape: f32[3,32,32], index: 9, kind: input, shape index: {}]
  %s10 = inlined_call_operand.vmem [shape: f32[3,1,32], index: 10, kind: input, shape index: {}]
  %s11 = inlined_call_operand.vmem [shape: f32[3,1,32], index: 11, kind: input, shape index: {}]
  %s12 = inlined_call_operand.vmem [shape: f32[3,1,32], index: 12, kind: input, shape index: {}]
  %s13 = inlined_call_operand.vmem [shape: f32[3,32,64], index: 13, kind: input, shape index: {}]
  %s14 = inlined_call_operand.vmem [shape: f32[3,1,64], index: 14, kind: input, shape index: {}]
  %s15 = inlined_call_operand.vmem [shape: f32[3,64,32], index: 15, kind: input, shape index: {}]
  %s16 = inlined_call_operand.vmem [shape: f32[3,1,32], index: 16, kind: input, shape index: {}]
  %s17 = inlined_call_operand.hbm [shape: f32[10,32], index: 17, kind: output, shape index: {}]
  %s18 = sld [smem:[#allocation0]]
  $region105: #{tpu_custom_call.1} parent=0
    _
  %s20 = ssub.s32 1, %s18
  %s21 = scalar_select 0, %s20, %s18
  $region1: #{tpu_custom_call.1} parent=0
    #allocation2 [shape = 'u8[8192]{0}', space=vmem, size = 0x2000, scoped, tag = 'output window, operand 0, single buffered']
    #allocation3 [shape = 's32[2]{0}', space=sflag, size = 0x8, scoped, tag = 'scoped memory for tpu_custom_call.1']
    %22 = vsyncpa [#allocation3], 0
    loop: start=0, step=1, limit=5
    $region2: #{tpu_custom_call.1} parent=1 // loop_pre_header
      _
    $region3: #{tpu_custom_call.1} parent=1 // loop_header
      %s24 = sphi 0, %s28
      %p25 = scmp.ge.s32.totalorder %s24, 5
      %s32 = sphi 0, %s32
      %s34 = sphi 0, %s32
      %s35 = sphi 0, %s34
      %s49 = sphi 0, %s35
      %s53 = sphi 0, %s53
      %s55 = sphi 0, %s53
      %s56 = sphi 0, %s55
      %s70 = sphi 0, %s56
      %s74 = sphi 0, %s74
      %s76 = sphi 0, %s74
      %s77 = sphi 0, %s76
      %s91 = sphi 0, %s77
      %s95 = sphi 0, %s95
      %s97 = sphi 0, %s95
      %s98 = sphi 0, %s97
      %s112 = sphi 0, %s98
      %s116 = sphi 0, %s116
      %s118 = sphi 0, %s116
      %s119 = sphi 0, %s118
      %s133 = sphi 0, %s119
      %s139 = sphi 0, %s141
      %s142 = sphi 0, %s139
      %s143 = sphi 0, %s142
      %s159 = sphi 0, %s143
      %s165 = sphi 0, %s167
      %s168 = sphi 0, %s165
      %s169 = sphi 0, %s168
      %s185 = sphi 0, %s169
      %s191 = sphi 0, %s193
      %s194 = sphi 0, %s191
      %s195 = sphi 0, %s194
      %s211 = sphi 0, %s195
      %s217 = sphi 0, %s219
      %s220 = sphi 0, %s217
      %s221 = sphi 0, %s220
      %s237 = sphi 0, %s221
      %s243 = sphi 0, %s245
      %s246 = sphi 0, %s243
      %s247 = sphi 0, %s246
      %s263 = sphi 0, %s247
      %s269 = sphi 0, %s271
      %s272 = sphi 0, %s269
      %s273 = sphi 0, %s272
      %s289 = sphi 0, %s273
      %s295 = sphi 0, %s297
      %s298 = sphi 0, %s295
      %s299 = sphi 0, %s298
      %s315 = sphi 0, %s299
      %s321 = sphi 0, %s323
      %s324 = sphi 0, %s321
      %s325 = sphi 0, %s324
      %s341 = sphi 0, %s325
      %s347 = sphi 0, %s349
      %s350 = sphi 0, %s347
      %s351 = sphi 0, %s350
      %s367 = sphi 0, %s351
      %s373 = sphi 0, %s375
      %s376 = sphi 0, %s373
      %s377 = sphi 0, %s376
      %s393 = sphi 0, %s377
      %s399 = sphi 0, %s401
      %s402 = sphi 0, %s399
      %s403 = sphi 0, %s402
      %s419 = sphi 0, %s403
      %s425 = sphi 0, %s427
      %s428 = sphi 0, %s425
      %s429 = sphi 0, %s428
      %s445 = sphi 0, %s429
      %s449 = sphi 0, %s449
      %s451 = sphi 0, %s449
      %s452 = sphi 0, %s451
      %s466 = sphi 0, %s452
    $region4: #{tpu_custom_call.1} parent=1 // loop_header_branch
      %27 = sbr.rel (%p25) target = $region8
    $region5: #{tpu_custom_call.1} parent=1 // loop_body
      %s29 = ssub.s32 %s24, 1
      %s30 = ssub.s32 %s24, 2
      %s31 = sadd.s32 %s24, 1
      %s33 = sadd.s32 %s32, 1
      %p36 = scmp.eq.s32.totalorder %s24, 2
      %p37 = scmp.ne.s32.totalorder %s32, %s34
      %p38 = scmp.eq.s32.totalorder %s24, 0
      %p39 = por %p37, %p38
      %p40 = scmp.ne.s32.totalorder %s32, %s34
      %p41 = scmp.eq.s32.totalorder %s29, 2
      %p42 = por %p40, %p41
      %p43 = scmp.ne.s32.totalorder %s34, %s35
      %p44 = scmp.eq.s32.totalorder %s29, 0
      %p45 = por %p43, %p44
      %p46 = scmp.ne.s32.totalorder %s34, %s35
      %p47 = scmp.eq.s32.totalorder %s30, 2
      %p48 = por %p46, %p47
      %p50 = scmp.ne.s32.totalorder %s35, %s49
      %p51 = scmp.eq.s32.totalorder %s30, 0
      %p52 = por %p50, %p51
      %s54 = sadd.s32 %s53, 1
      %p57 = scmp.eq.s32.totalorder %s24, 2
      %p58 = scmp.ne.s32.totalorder %s53, %s55
      %p59 = scmp.eq.s32.totalorder %s24, 0
      %p60 = por %p58, %p59
      %p61 = scmp.ne.s32.totalorder %s53, %s55
      %p62 = scmp.eq.s32.totalorder %s29, 2
      %p63 = por %p61, %p62
      %p64 = scmp.ne.s32.totalorder %s55, %s56
      %p65 = scmp.eq.s32.totalorder %s29, 0
      %p66 = por %p64, %p65
      %p67 = scmp.ne.s32.totalorder %s55, %s56
      %p68 = scmp.eq.s32.totalorder %s30, 2
      %p69 = por %p67, %p68
      %p71 = scmp.ne.s32.totalorder %s56, %s70
      %p72 = scmp.eq.s32.totalorder %s30, 0
      %p73 = por %p71, %p72
      %s75 = sadd.s32 %s74, 1
      %p78 = scmp.eq.s32.totalorder %s24, 2
      %p79 = scmp.ne.s32.totalorder %s74, %s76
      %p80 = scmp.eq.s32.totalorder %s24, 0
      %p81 = por %p79, %p80
      %p82 = scmp.ne.s32.totalorder %s74, %s76
      %p83 = scmp.eq.s32.totalorder %s29, 2
      %p84 = por %p82, %p83
      %p85 = scmp.ne.s32.totalorder %s76, %s77
      %p86 = scmp.eq.s32.totalorder %s29, 0
      %p87 = por %p85, %p86
      %p88 = scmp.ne.s32.totalorder %s76, %s77
      %p89 = scmp.eq.s32.totalorder %s30, 2
      %p90 = por %p88, %p89
      %p92 = scmp.ne.s32.totalorder %s77, %s91
      %p93 = scmp.eq.s32.totalorder %s30, 0
      %p94 = por %p92, %p93
      %s96 = sadd.s32 %s95, 1
      %p99 = scmp.eq.s32.totalorder %s24, 2
      %p100 = scmp.ne.s32.totalorder %s95, %s97
      %p101 = scmp.eq.s32.totalorder %s24, 0
      %p102 = por %p100, %p101
      %p103 = scmp.ne.s32.totalorder %s95, %s97
      %p104 = scmp.eq.s32.totalorder %s29, 2
      %p105 = por %p103, %p104
      %p106 = scmp.ne.s32.totalorder %s97, %s98
      %p107 = scmp.eq.s32.totalorder %s29, 0
      %p108 = por %p106, %p107
      %p109 = scmp.ne.s32.totalorder %s97, %s98
      %p110 = scmp.eq.s32.totalorder %s30, 2
      %p111 = por %p109, %p110
      %p113 = scmp.ne.s32.totalorder %s98, %s112
      %p114 = scmp.eq.s32.totalorder %s30, 0
      %p115 = por %p113, %p114
      %s117 = sadd.s32 %s116, 1
      %p120 = scmp.eq.s32.totalorder %s24, 2
      %p121 = scmp.ne.s32.totalorder %s116, %s118
      %p122 = scmp.eq.s32.totalorder %s24, 0
      %p123 = por %p121, %p122
      %p124 = scmp.ne.s32.totalorder %s116, %s118
      %p125 = scmp.eq.s32.totalorder %s29, 2
      %p126 = por %p124, %p125
      %p127 = scmp.ne.s32.totalorder %s118, %s119
      %p128 = scmp.eq.s32.totalorder %s29, 0
      %p129 = por %p127, %p128
      %p130 = scmp.ne.s32.totalorder %s118, %s119
      %p131 = scmp.eq.s32.totalorder %s30, 2
      %p132 = por %p130, %p131
      %p134 = scmp.ne.s32.totalorder %s119, %s133
      %p135 = scmp.eq.s32.totalorder %s30, 0
      %p136 = por %p134, %p135
      %s137 = ssub.s32 %s24, %s31
      %p138 = scmp.eq.s32.totalorder %s137, 0
      %s140 = sadd.s32 %s139, 1
      %s141 = scalar_select %p138, %s139, %s140
      %p144 = pneg %p138
      %p145 = scmp.eq.s32.totalorder %s24, 2
      %p146 = por %p144, %p145
      %p147 = scmp.ne.s32.totalorder %s139, %s142
      %p148 = scmp.eq.s32.totalorder %s24, 0
      %p149 = por %p147, %p148
      %p150 = scmp.ne.s32.totalorder %s139, %s142
      %p151 = scmp.eq.s32.totalorder %s29, 2
      %p152 = por %p150, %p151
      %p153 = scmp.ne.s32.totalorder %s142, %s143
      %p154 = scmp.eq.s32.totalorder %s29, 0
      %p155 = por %p153, %p154
      %p156 = scmp.ne.s32.totalorder %s142, %s143
      %p157 = scmp.eq.s32.totalorder %s30, 2
      %p158 = por %p156, %p157
      %p160 = scmp.ne.s32.totalorder %s143, %s159
      %p161 = scmp.eq.s32.totalorder %s30, 0
      %p162 = por %p160, %p161
      %s163 = ssub.s32 %s24, %s31
      %p164 = scmp.eq.s32.totalorder %s163, 0
      %s166 = sadd.s32 %s165, 1
      %s167 = scalar_select %p164, %s165, %s166
      %p170 = pneg %p164
      %p171 = scmp.eq.s32.totalorder %s24, 2
      %p172 = por %p170, %p171
      %p173 = scmp.ne.s32.totalorder %s165, %s168
      %p174 = scmp.eq.s32.totalorder %s24, 0
      %p175 = por %p173, %p174
      %p176 = scmp.ne.s32.totalorder %s165, %s168
      %p177 = scmp.eq.s32.totalorder %s29, 2
      %p178 = por %p176, %p177
      %p179 = scmp.ne.s32.totalorder %s168, %s169
      %p180 = scmp.eq.s32.totalorder %s29, 0
      %p181 = por %p179, %p180
      %p182 = scmp.ne.s32.totalorder %s168, %s169
      %p183 = scmp.eq.s32.totalorder %s30, 2
      %p184 = por %p182, %p183
      %p186 = scmp.ne.s32.totalorder %s169, %s185
      %p187 = scmp.eq.s32.totalorder %s30, 0
      %p188 = por %p186, %p187
      %s189 = ssub.s32 %s24, %s31
      %p190 = scmp.eq.s32.totalorder %s189, 0
      %s192 = sadd.s32 %s191, 1
      %s193 = scalar_select %p190, %s191, %s192
      %p196 = pneg %p190
      %p197 = scmp.eq.s32.totalorder %s24, 2
      %p198 = por %p196, %p197
      %p199 = scmp.ne.s32.totalorder %s191, %s194
      %p200 = scmp.eq.s32.totalorder %s24, 0
      %p201 = por %p199, %p200
      %p202 = scmp.ne.s32.totalorder %s191, %s194
      %p203 = scmp.eq.s32.totalorder %s29, 2
      %p204 = por %p202, %p203
      %p205 = scmp.ne.s32.totalorder %s194, %s195
      %p206 = scmp.eq.s32.totalorder %s29, 0
      %p207 = por %p205, %p206
      %p208 = scmp.ne.s32.totalorder %s194, %s195
      %p209 = scmp.eq.s32.totalorder %s30, 2
      %p210 = por %p208, %p209
      %p212 = scmp.ne.s32.totalorder %s195, %s211
      %p213 = scmp.eq.s32.totalorder %s30, 0
      %p214 = por %p212, %p213
      %s215 = ssub.s32 %s24, %s31
      %p216 = scmp.eq.s32.totalorder %s215, 0
      %s218 = sadd.s32 %s217, 1
      %s219 = scalar_select %p216, %s217, %s218
      %p222 = pneg %p216
      %p223 = scmp.eq.s32.totalorder %s24, 2
      %p224 = por %p222, %p223
      %p225 = scmp.ne.s32.totalorder %s217, %s220
      %p226 = scmp.eq.s32.totalorder %s24, 0
      %p227 = por %p225, %p226
      %p228 = scmp.ne.s32.totalorder %s217, %s220
      %p229 = scmp.eq.s32.totalorder %s29, 2
      %p230 = por %p228, %p229
      %p231 = scmp.ne.s32.totalorder %s220, %s221
      %p232 = scmp.eq.s32.totalorder %s29, 0
      %p233 = por %p231, %p232
      %p234 = scmp.ne.s32.totalorder %s220, %s221
      %p235 = scmp.eq.s32.totalorder %s30, 2
      %p236 = por %p234, %p235
      %p238 = scmp.ne.s32.totalorder %s221, %s237
      %p239 = scmp.eq.s32.totalorder %s30, 0
      %p240 = por %p238, %p239
      %s241 = ssub.s32 %s24, %s31
      %p242 = scmp.eq.s32.totalorder %s241, 0
      %s244 = sadd.s32 %s243, 1
      %s245 = scalar_select %p242, %s243, %s244
      %p248 = pneg %p242
      %p249 = scmp.eq.s32.totalorder %s24, 2
      %p250 = por %p248, %p249
      %p251 = scmp.ne.s32.totalorder %s243, %s246
      %p252 = scmp.eq.s32.totalorder %s24, 0
      %p253 = por %p251, %p252
      %p254 = scmp.ne.s32.totalorder %s243, %s246
      %p255 = scmp.eq.s32.totalorder %s29, 2
      %p256 = por %p254, %p255
      %p257 = scmp.ne.s32.totalorder %s246, %s247
      %p258 = scmp.eq.s32.totalorder %s29, 0
      %p259 = por %p257, %p258
      %p260 = scmp.ne.s32.totalorder %s246, %s247
      %p261 = scmp.eq.s32.totalorder %s30, 2
      %p262 = por %p260, %p261
      %p264 = scmp.ne.s32.totalorder %s247, %s263
      %p265 = scmp.eq.s32.totalorder %s30, 0
      %p266 = por %p264, %p265
      %s267 = ssub.s32 %s24, %s31
      %p268 = scmp.eq.s32.totalorder %s267, 0
      %s270 = sadd.s32 %s269, 1
      %s271 = scalar_select %p268, %s269, %s270
      %p274 = pneg %p268
      %p275 = scmp.eq.s32.totalorder %s24, 2
      %p276 = por %p274, %p275
      %p277 = scmp.ne.s32.totalorder %s269, %s272
      %p278 = scmp.eq.s32.totalorder %s24, 0
      %p279 = por %p277, %p278
      %p280 = scmp.ne.s32.totalorder %s269, %s272
      %p281 = scmp.eq.s32.totalorder %s29, 2
      %p282 = por %p280, %p281
      %p283 = scmp.ne.s32.totalorder %s272, %s273
      %p284 = scmp.eq.s32.totalorder %s29, 0
      %p285 = por %p283, %p284
      %p286 = scmp.ne.s32.totalorder %s272, %s273
      %p287 = scmp.eq.s32.totalorder %s30, 2
      %p288 = por %p286, %p287
      %p290 = scmp.ne.s32.totalorder %s273, %s289
      %p291 = scmp.eq.s32.totalorder %s30, 0
      %p292 = por %p290, %p291
      %s293 = ssub.s32 %s24, %s31
      %p294 = scmp.eq.s32.totalorder %s293, 0
      %s296 = sadd.s32 %s295, 1
      %s297 = scalar_select %p294, %s295, %s296
      %p300 = pneg %p294
      %p301 = scmp.eq.s32.totalorder %s24, 2
      %p302 = por %p300, %p301
      %p303 = scmp.ne.s32.totalorder %s295, %s298
      %p304 = scmp.eq.s32.totalorder %s24, 0
      %p305 = por %p303, %p304
      %p306 = scmp.ne.s32.totalorder %s295, %s298
      %p307 = scmp.eq.s32.totalorder %s29, 2
      %p308 = por %p306, %p307
      %p309 = scmp.ne.s32.totalorder %s298, %s299
      %p310 = scmp.eq.s32.totalorder %s29, 0
      %p311 = por %p309, %p310
      %p312 = scmp.ne.s32.totalorder %s298, %s299
      %p313 = scmp.eq.s32.totalorder %s30, 2
      %p314 = por %p312, %p313
      %p316 = scmp.ne.s32.totalorder %s299, %s315
      %p317 = scmp.eq.s32.totalorder %s30, 0
      %p318 = por %p316, %p317
      %s319 = ssub.s32 %s24, %s31
      %p320 = scmp.eq.s32.totalorder %s319, 0
      %s322 = sadd.s32 %s321, 1
      %s323 = scalar_select %p320, %s321, %s322
      %p326 = pneg %p320
      %p327 = scmp.eq.s32.totalorder %s24, 2
      %p328 = por %p326, %p327
      %p329 = scmp.ne.s32.totalorder %s321, %s324
      %p330 = scmp.eq.s32.totalorder %s24, 0
      %p331 = por %p329, %p330
      %p332 = scmp.ne.s32.totalorder %s321, %s324
      %p333 = scmp.eq.s32.totalorder %s29, 2
      %p334 = por %p332, %p333
      %p335 = scmp.ne.s32.totalorder %s324, %s325
      %p336 = scmp.eq.s32.totalorder %s29, 0
      %p337 = por %p335, %p336
      %p338 = scmp.ne.s32.totalorder %s324, %s325
      %p339 = scmp.eq.s32.totalorder %s30, 2
      %p340 = por %p338, %p339
      %p342 = scmp.ne.s32.totalorder %s325, %s341
      %p343 = scmp.eq.s32.totalorder %s30, 0
      %p344 = por %p342, %p343
      %s345 = ssub.s32 %s24, %s31
      %p346 = scmp.eq.s32.totalorder %s345, 0
      %s348 = sadd.s32 %s347, 1
      %s349 = scalar_select %p346, %s347, %s348
      %p352 = pneg %p346
      %p353 = scmp.eq.s32.totalorder %s24, 2
      %p354 = por %p352, %p353
      %p355 = scmp.ne.s32.totalorder %s347, %s350
      %p356 = scmp.eq.s32.totalorder %s24, 0
      %p357 = por %p355, %p356
      %p358 = scmp.ne.s32.totalorder %s347, %s350
      %p359 = scmp.eq.s32.totalorder %s29, 2
      %p360 = por %p358, %p359
      %p361 = scmp.ne.s32.totalorder %s350, %s351
      %p362 = scmp.eq.s32.totalorder %s29, 0
      %p363 = por %p361, %p362
      %p364 = scmp.ne.s32.totalorder %s350, %s351
      %p365 = scmp.eq.s32.totalorder %s30, 2
      %p366 = por %p364, %p365
      %p368 = scmp.ne.s32.totalorder %s351, %s367
      %p369 = scmp.eq.s32.totalorder %s30, 0
      %p370 = por %p368, %p369
      %s371 = ssub.s32 %s24, %s31
      %p372 = scmp.eq.s32.totalorder %s371, 0
      %s374 = sadd.s32 %s373, 1
      %s375 = scalar_select %p372, %s373, %s374
      %p378 = pneg %p372
      %p379 = scmp.eq.s32.totalorder %s24, 2
      %p380 = por %p378, %p379
      %p381 = scmp.ne.s32.totalorder %s373, %s376
      %p382 = scmp.eq.s32.totalorder %s24, 0
      %p383 = por %p381, %p382
      %p384 = scmp.ne.s32.totalorder %s373, %s376
      %p385 = scmp.eq.s32.totalorder %s29, 2
      %p386 = por %p384, %p385
      %p387 = scmp.ne.s32.totalorder %s376, %s377
      %p388 = scmp.eq.s32.totalorder %s29, 0
      %p389 = por %p387, %p388
      %p390 = scmp.ne.s32.totalorder %s376, %s377
      %p391 = scmp.eq.s32.totalorder %s30, 2
      %p392 = por %p390, %p391
      %p394 = scmp.ne.s32.totalorder %s377, %s393
      %p395 = scmp.eq.s32.totalorder %s30, 0
      %p396 = por %p394, %p395
      %s397 = ssub.s32 %s24, %s31
      %p398 = scmp.eq.s32.totalorder %s397, 0
      %s400 = sadd.s32 %s399, 1
      %s401 = scalar_select %p398, %s399, %s400
      %p404 = pneg %p398
      %p405 = scmp.eq.s32.totalorder %s24, 2
      %p406 = por %p404, %p405
      %p407 = scmp.ne.s32.totalorder %s399, %s402
      %p408 = scmp.eq.s32.totalorder %s24, 0
      %p409 = por %p407, %p408
      %p410 = scmp.ne.s32.totalorder %s399, %s402
      %p411 = scmp.eq.s32.totalorder %s29, 2
      %p412 = por %p410, %p411
      %p413 = scmp.ne.s32.totalorder %s402, %s403
      %p414 = scmp.eq.s32.totalorder %s29, 0
      %p415 = por %p413, %p414
      %p416 = scmp.ne.s32.totalorder %s402, %s403
      %p417 = scmp.eq.s32.totalorder %s30, 2
      %p418 = por %p416, %p417
      %p420 = scmp.ne.s32.totalorder %s403, %s419
      %p421 = scmp.eq.s32.totalorder %s30, 0
      %p422 = por %p420, %p421
      %s423 = ssub.s32 %s24, %s31
      %p424 = scmp.eq.s32.totalorder %s423, 0
      %s426 = sadd.s32 %s425, 1
      %s427 = scalar_select %p424, %s425, %s426
      %p430 = pneg %p424
      %p431 = scmp.eq.s32.totalorder %s24, 2
      %p432 = por %p430, %p431
      %p433 = scmp.ne.s32.totalorder %s425, %s428
      %p434 = scmp.eq.s32.totalorder %s24, 0
      %p435 = por %p433, %p434
      %p436 = scmp.ne.s32.totalorder %s425, %s428
      %p437 = scmp.eq.s32.totalorder %s29, 2
      %p438 = por %p436, %p437
      %p439 = scmp.ne.s32.totalorder %s428, %s429
      %p440 = scmp.eq.s32.totalorder %s29, 0
      %p441 = por %p439, %p440
      %p442 = scmp.ne.s32.totalorder %s428, %s429
      %p443 = scmp.eq.s32.totalorder %s30, 2
      %p444 = por %p442, %p443
      %p446 = scmp.ne.s32.totalorder %s429, %s445
      %p447 = scmp.eq.s32.totalorder %s30, 0
      %p448 = por %p446, %p447
      %s450 = sadd.s32 %s449, 1
      %p453 = scmp.eq.s32.totalorder %s24, 2
      %p454 = scmp.ne.s32.totalorder %s449, %s451
      %p455 = scmp.eq.s32.totalorder %s24, 0
      %p456 = por %p454, %p455
      %p457 = scmp.ne.s32.totalorder %s449, %s451
      %p458 = scmp.eq.s32.totalorder %s29, 2
      %p459 = por %p457, %p458
      %p460 = scmp.ne.s32.totalorder %s451, %s452
      %p461 = scmp.eq.s32.totalorder %s29, 0
      %p462 = por %p460, %p461
      %p463 = scmp.ne.s32.totalorder %s451, %s452
      %p464 = scmp.eq.s32.totalorder %s30, 2
      %p465 = por %p463, %p464
      %p467 = scmp.ne.s32.totalorder %s452, %s466
      %p468 = scmp.eq.s32.totalorder %s30, 0
      %p469 = por %p467, %p468
      %p470 = scmp.le.s32.totalorder 1, %s24
      %p471 = scmp.lt.s32.totalorder %s24, 4
      %p472 = pnand %p470, %p471
      %p473 = pneg %p472
      // Predicated region
      $region9: #{tpu_custom_call.1} parent=5 // pred_check
        _
      $region10: #{tpu_custom_call.1} parent=5 // pred_check_branch
        %475 = sbr.rel (%p472) target = $region12
      $region11: #{tpu_custom_call.1} parent=5 // pred_region
        %s476 = ssub.s32 %s24, 1
        // Predicated region
        $region13: #{tpu_custom_call.1} parent=11 // pred_check
          %p477 = pneg %p45
        $region14: #{tpu_custom_call.1} parent=11 // pred_check_branch
          %479 = sbr.rel (%p477) target = $region16
        $region15: #{tpu_custom_call.1} parent=11 // pred_region
          _
        $region16: #{tpu_custom_call.1} parent=11 // pred_fallthru
          _
        // Predicated region
        $region17: #{tpu_custom_call.1} parent=11 // pred_check
          %p480 = pneg %p66
        $region18: #{tpu_custom_call.1} parent=11 // pred_check_branch
          %482 = sbr.rel (%p480) target = $region20
        $region19: #{tpu_custom_call.1} parent=11 // pred_region
          _
        $region20: #{tpu_custom_call.1} parent=11 // pred_fallthru
          _
        // Predicated region
        $region21: #{tpu_custom_call.1} parent=11 // pred_check
          %p483 = pneg %p87
        $region22: #{tpu_custom_call.1} parent=11 // pred_check_branch
          %485 = sbr.rel (%p483) target = $region24
        $region23: #{tpu_custom_call.1} parent=11 // pred_region
          _
        $region24: #{tpu_custom_call.1} parent=11 // pred_fallthru
          _
        // Predicated region
        $region25: #{tpu_custom_call.1} parent=11 // pred_check
          %p486 = pneg %p108
        $region26: #{tpu_custom_call.1} parent=11 // pred_check_branch
          %488 = sbr.rel (%p486) target = $region28
        $region27: #{tpu_custom_call.1} parent=11 // pred_region
          _
        $region28: #{tpu_custom_call.1} parent=11 // pred_fallthru
          _
        // Predicated region
        $region29: #{tpu_custom_call.1} parent=11 // pred_check
          %p489 = pneg %p129
        $region30: #{tpu_custom_call.1} parent=11 // pred_check_branch
          %491 = sbr.rel (%p489) target = $region32
        $region31: #{tpu_custom_call.1} parent=11 // pred_region
          _
        $region32: #{tpu_custom_call.1} parent=11 // pred_fallthru
          _
      $region12: #{tpu_custom_call.1} parent=5 // pred_fallthru
        _
      %p492 = scmp.lt.s32.totalorder %s24, 3
      // Predicated region
      $region33: #{tpu_custom_call.1} parent=5 // pred_check
        %p493 = pneg %p492
      $region34: #{tpu_custom_call.1} parent=5 // pred_check_branch
        %495 = sbr.rel (%p493) target = $region36
      $region35: #{tpu_custom_call.1} parent=5 // pred_region
        // Predicated region
        $region37: #{tpu_custom_call.1} parent=35 // pred_check
          %p496 = pneg %p149
        $region38: #{tpu_custom_call.1} parent=35 // pred_check_branch
          %498 = sbr.rel (%p496) target = $region40
        $region39: #{tpu_custom_call.1} parent=35 // pred_region
          %p499 = scmp.lt.s32.totalorder %s24, 2
          %s500 = scalar_select %p499, %s24, 2
          %s501 = scalar_lea.vmem %s5, %s500
        $region40: #{tpu_custom_call.1} parent=35 // pred_fallthru
          _
        // Predicated region
        $region41: #{tpu_custom_call.1} parent=35 // pred_check
          %p502 = pneg %p175
        $region42: #{tpu_custom_call.1} parent=35 // pred_check_branch
          %504 = sbr.rel (%p502) target = $region44
        $region43: #{tpu_custom_call.1} parent=35 // pred_region
          %p505 = scmp.lt.s32.totalorder %s24, 2
          %s506 = scalar_select %p505, %s24, 2
          %s507 = scalar_lea.vmem %s6, %s506
        $region44: #{tpu_custom_call.1} parent=35 // pred_fallthru
          _
        // Predicated region
        $region45: #{tpu_custom_call.1} parent=35 // pred_check
          %p508 = pneg %p201
        $region46: #{tpu_custom_call.1} parent=35 // pred_check_branch
          %510 = sbr.rel (%p508) target = $region48
        $region47: #{tpu_custom_call.1} parent=35 // pred_region
          %p511 = scmp.lt.s32.totalorder %s24, 2
          %s512 = scalar_select %p511, %s24, 2
          %s513 = smul.addr %s512, 4
          %s514 = smul.addr %s513, 8
          %s515 = scalar_lea.vmem %s7, %s514
        $region48: #{tpu_custom_call.1} parent=35 // pred_fallthru
          _
        // Predicated region
        $region49: #{tpu_custom_call.1} parent=35 // pred_check
          %p516 = pneg %p227
        $region50: #{tpu_custom_call.1} parent=35 // pred_check_branch
          %518 = sbr.rel (%p516) target = $region52
        $region51: #{tpu_custom_call.1} parent=35 // pred_region
          %p519 = scmp.lt.s32.totalorder %s24, 2
          %s520 = scalar_select %p519, %s24, 2
          %s521 = scalar_lea.vmem %s8, %s520
        $region52: #{tpu_custom_call.1} parent=35 // pred_fallthru
          _
        // Predicated region
        $region53: #{tpu_custom_call.1} parent=35 // pred_check
          %p522 = pneg %p253
        $region54: #{tpu_custom_call.1} parent=35 // pred_check_branch
          %524 = sbr.rel (%p522) target = $region56
        $region55: #{tpu_custom_call.1} parent=35 // pred_region
          %p525 = scmp.lt.s32.totalorder %s24, 2
          %s526 = scalar_select %p525, %s24, 2
          %s527 = smul.addr %s526, 4
          %s528 = smul.addr %s527, 8
          %s529 = scalar_lea.vmem %s9, %s528
        $region56: #{tpu_custom_call.1} parent=35 // pred_fallthru
          _
        // Predicated region
        $region57: #{tpu_custom_call.1} parent=35 // pred_check
          %p530 = pneg %p279
        $region58: #{tpu_custom_call.1} parent=35 // pred_check_branch
          %532 = sbr.rel (%p530) target = $region60
        $region59: #{tpu_custom_call.1} parent=35 // pred_region
          %p533 = scmp.lt.s32.totalorder %s24, 2
          %s534 = scalar_select %p533, %s24, 2
          %s535 = scalar_lea.vmem %s10, %s534
        $region60: #{tpu_custom_call.1} parent=35 // pred_fallthru
          _
        // Predicated region
        $region61: #{tpu_custom_call.1} parent=35 // pred_check
          %p536 = pneg %p305
        $region62: #{tpu_custom_call.1} parent=35 // pred_check_branch
          %538 = sbr.rel (%p536) target = $region64
        $region63: #{tpu_custom_call.1} parent=35 // pred_region
          %p539 = scmp.lt.s32.totalorder %s24, 2
          %s540 = scalar_select %p539, %s24, 2
          %s541 = scalar_lea.vmem %s11, %s540
        $region64: #{tpu_custom_call.1} parent=35 // pred_fallthru
          _
        // Predicated region
        $region65: #{tpu_custom_call.1} parent=35 // pred_check
          %p542 = pneg %p331
        $region66: #{tpu_custom_call.1} parent=35 // pred_check_branch
          %544 = sbr.rel (%p542) target = $region68
        $region67: #{tpu_custom_call.1} parent=35 // pred_region
          %p545 = scmp.lt.s32.totalorder %s24, 2
          %s546 = scalar_select %p545, %s24, 2
          %s547 = scalar_lea.vmem %s12, %s546
        $region68: #{tpu_custom_call.1} parent=35 // pred_fallthru
          _
        // Predicated region
        $region69: #{tpu_custom_call.1} parent=35 // pred_check
          %p548 = pneg %p357
        $region70: #{tpu_custom_call.1} parent=35 // pred_check_branch
          %550 = sbr.rel (%p548) target = $region72
        $region71: #{tpu_custom_call.1} parent=35 // pred_region
          %p551 = scmp.lt.s32.totalorder %s24, 2
          %s552 = scalar_select %p551, %s24, 2
          %s553 = smul.addr %s552, 4
          %s554 = smul.addr %s553, 8
          %s555 = scalar_lea.vmem %s13, %s554
        $region72: #{tpu_custom_call.1} parent=35 // pred_fallthru
          _
        // Predicated region
        $region73: #{tpu_custom_call.1} parent=35 // pred_check
          %p556 = pneg %p383
        $region74: #{tpu_custom_call.1} parent=35 // pred_check_branch
          %558 = sbr.rel (%p556) target = $region76
        $region75: #{tpu_custom_call.1} parent=35 // pred_region
          %p559 = scmp.lt.s32.totalorder %s24, 2
          %s560 = scalar_select %p559, %s24, 2
          %s561 = scalar_lea.vmem %s14, %s560
        $region76: #{tpu_custom_call.1} parent=35 // pred_fallthru
          _
        // Predicated region
        $region77: #{tpu_custom_call.1} parent=35 // pred_check
          %p562 = pneg %p409
        $region78: #{tpu_custom_call.1} parent=35 // pred_check_branch
          %564 = sbr.rel (%p562) target = $region80
        $region79: #{tpu_custom_call.1} parent=35 // pred_region
          %p565 = scmp.lt.s32.totalorder %s24, 2
          %s566 = scalar_select %p565, %s24, 2
          %s567 = smul.addr %s566, 8
          %s568 = smul.addr %s567, 8
          %s569 = scalar_lea.vmem %s15, %s568
        $region80: #{tpu_custom_call.1} parent=35 // pred_fallthru
          _
        // Predicated region
        $region81: #{tpu_custom_call.1} parent=35 // pred_check
          %p570 = pneg %p435
        $region82: #{tpu_custom_call.1} parent=35 // pred_check_branch
          %572 = sbr.rel (%p570) target = $region84
        $region83: #{tpu_custom_call.1} parent=35 // pred_region
          %p573 = scmp.lt.s32.totalorder %s24, 2
          %s574 = scalar_select %p573, %s24, 2
          %s575 = scalar_lea.vmem %s16, %s574
        $region84: #{tpu_custom_call.1} parent=35 // pred_fallthru
          _
      $region36: #{tpu_custom_call.1} parent=5 // pred_fallthru
        _
      %p576 = scmp.le.s32.totalorder 1, %s24
      %p577 = scmp.lt.s32.totalorder %s24, 4
      %p578 = pnand %p576, %p577
      %p579 = pneg %p578
      // Predicated region
      $region85: #{tpu_custom_call.1} parent=5 // pred_check
        _
      $region86: #{tpu_custom_call.1} parent=5 // pred_check_branch
        %581 = sbr.rel (%p578) target = $region88
      $region87: #{tpu_custom_call.1} parent=5 // pred_region
        %s582 = ssub.s32 %s24, 1
        %p583 = pneg %p45
        %p584 = pneg %p42
        %p585 = pneg %p66
        %p586 = pneg %p63
        %p587 = pneg %p87
        %p588 = pneg %p84
        %p589 = pneg %p108
        %p590 = pneg %p105
        %p591 = pneg %p129
        %p592 = pneg %p126
        %p593 = scmp.lt.s32.totalorder %s29, 2
        %s594 = scalar_select %p593, %s29, 2
        %s595 = scalar_lea.vmem %s5, %s594
        %p596 = pneg %p155
        %p597 = pneg %p152
        %p598 = scmp.lt.s32.totalorder %s29, 2
        %s599 = scalar_select %p598, %s29, 2
        %s600 = scalar_lea.vmem %s6, %s599
        %p601 = pneg %p181
        %p602 = pneg %p178
        %p603 = scmp.lt.s32.totalorder %s29, 2
        %s604 = scalar_select %p603, %s29, 2
        %s605 = smul.addr %s604, 4
        %s606 = smul.addr %s605, 8
        %s607 = scalar_lea.vmem %s7, %s606
        %p608 = pneg %p207
        %p609 = pneg %p204
        %p610 = scmp.lt.s32.totalorder %s29, 2
        %s611 = scalar_select %p610, %s29, 2
        %s612 = scalar_lea.vmem %s8, %s611
        %p613 = pneg %p233
        %p614 = pneg %p230
        %p615 = scmp.lt.s32.totalorder %s29, 2
        %s616 = scalar_select %p615, %s29, 2
        %s617 = smul.addr %s616, 4
        %s618 = smul.addr %s617, 8
        %s619 = scalar_lea.vmem %s9, %s618
        %p620 = pneg %p259
        %p621 = pneg %p256
        %p622 = scmp.lt.s32.totalorder %s29, 2
        %s623 = scalar_select %p622, %s29, 2
        %s624 = scalar_lea.vmem %s10, %s623
        %p625 = pneg %p285
        %p626 = pneg %p282
        %p627 = scmp.lt.s32.totalorder %s29, 2
        %s628 = scalar_select %p627, %s29, 2
        %s629 = scalar_lea.vmem %s11, %s628
        %p630 = pneg %p311
        %p631 = pneg %p308
        %p632 = scmp.lt.s32.totalorder %s29, 2
        %s633 = scalar_select %p632, %s29, 2
        %s634 = scalar_lea.vmem %s12, %s633
        %p635 = pneg %p337
        %p636 = pneg %p334
        %p637 = scmp.lt.s32.totalorder %s29, 2
        %s638 = scalar_select %p637, %s29, 2
        %s639 = smul.addr %s638, 4
        %s640 = smul.addr %s639, 8
        %s641 = scalar_lea.vmem %s13, %s640
        %p642 = pneg %p363
        %p643 = pneg %p360
        %p644 = scmp.lt.s32.totalorder %s29, 2
        %s645 = scalar_select %p644, %s29, 2
        %s646 = scalar_lea.vmem %s14, %s645
        %p647 = pneg %p389
        %p648 = pneg %p386
        %p649 = scmp.lt.s32.totalorder %s29, 2
        %s650 = scalar_select %p649, %s29, 2
        %s651 = smul.addr %s650, 8
        %s652 = smul.addr %s651, 8
        %s653 = scalar_lea.vmem %s15, %s652
        %p654 = pneg %p415
        %p655 = pneg %p412
        %p656 = scmp.lt.s32.totalorder %s29, 2
        %s657 = scalar_select %p656, %s29, 2
        %s658 = scalar_lea.vmem %s16, %s657
        %p659 = pneg %p441
        %p660 = pneg %p438
        %p661 = pneg %p462
        %p662 = pneg %p459
        %p663 = scmp.lt.s32.totalorder %s29, 2
        %s664 = scalar_select %p663, %s29, 2
        %s665 = scalar_lea.vmem %s5, %s664
        %p666 = scmp.lt.s32.totalorder %s29, 2
        %s667 = scalar_select %p666, %s29, 2
        %s668 = scalar_lea.vmem %s6, %s667
        %p669 = scmp.lt.s32.totalorder %s29, 2
        %s670 = scalar_select %p669, %s29, 2
        %s671 = smul.addr %s670, 4
        %s672 = smul.addr %s671, 8
        %s673 = scalar_lea.vmem %s7, %s672
        %p674 = scmp.lt.s32.totalorder %s29, 2
        %s675 = scalar_select %p674, %s29, 2
        %s676 = scalar_lea.vmem %s8, %s675
        %p677 = scmp.lt.s32.totalorder %s29, 2
        %s678 = scalar_select %p677, %s29, 2
        %s679 = smul.addr %s678, 4
        %s680 = smul.addr %s679, 8
        %s681 = scalar_lea.vmem %s9, %s680
        %p682 = scmp.lt.s32.totalorder %s29, 2
        %s683 = scalar_select %p682, %s29, 2
        %s684 = scalar_lea.vmem %s10, %s683
        %p685 = scmp.lt.s32.totalorder %s29, 2
        %s686 = scalar_select %p685, %s29, 2
        %s687 = scalar_lea.vmem %s11, %s686
        %p688 = scmp.lt.s32.totalorder %s29, 2
        %s689 = scalar_select %p688, %s29, 2
        %s690 = scalar_lea.vmem %s12, %s689
        %p691 = scmp.lt.s32.totalorder %s29, 2
        %s692 = scalar_select %p691, %s29, 2
        %s693 = smul.addr %s692, 4
        %s694 = smul.addr %s693, 8
        %s695 = scalar_lea.vmem %s13, %s694
        %p696 = scmp.lt.s32.totalorder %s29, 2
        %s697 = scalar_select %p696, %s29, 2
        %s698 = scalar_lea.vmem %s14, %s697
        %p699 = scmp.lt.s32.totalorder %s29, 2
        %s700 = scalar_select %p699, %s29, 2
        %s701 = smul.addr %s700, 8
        %s702 = smul.addr %s701, 8
        %s703 = scalar_lea.vmem %s15, %s702
        %p704 = scmp.lt.s32.totalorder %s29, 2
        %s705 = scalar_select %p704, %s29, 2
        %s706 = scalar_lea.vmem %s16, %s705
        %p707 = scmp.eq.s32.totalorder %s29, 0
        // Predicated region
        $region89: #{tpu_custom_call.1} parent=87 // pred_check
          %p708 = pneg %p707
        $region90: #{tpu_custom_call.1} parent=87 // pred_check_branch
          %710 = sbr.rel (%p708) target = $region92
        $region91: #{tpu_custom_call.1} parent=87 // pred_region
          %v711 = vld [vmem:[%s0] sm:$0xff]
          %v712 = vld [vmem:[%s0 + $0x8] sm:$0xff]
          %v713 = vld [vmem:[%s1] sm:$0xff]
          %v714 = vld [vmem:[%s1 + $0x8] sm:$0xff]
          %v715 = vld [vmem:[%s1 + $0x10] sm:$0xff]
          %v716 = vld [vmem:[%s1 + $0x18] sm:$0xff]
          %v717 = vld [vmem:[%s1 + $0x20] sm:$0xff]
          %v718 = vld [vmem:[%s1 + $0x28] sm:$0xff]
          %v719 = vld [vmem:[%s1 + $0x30] sm:$0xff]
          %v720 = vld [vmem:[%s1 + $0x38] sm:$0xff]
          %v721 = vld [vmem:[%s1 + $0x40] sm:$0xff]
          %v722 = vld [vmem:[%s1 + $0x48] sm:$0xff]
          %v723 = vld [vmem:[%s1 + $0x50] sm:$0xff]
          %v724 = vld [vmem:[%s1 + $0x58] sm:$0xff]
          %v725 = vld [vmem:[%s1 + $0x60] sm:$0xff]
          %v726 = vld [vmem:[%s1 + $0x68] sm:$0xff]
          %v727 = vld [vmem:[%s1 + $0x70] sm:$0xff]
          %v728 = vld [vmem:[%s1 + $0x78] sm:$0xff]
          %v729 = vld [vmem:[%s1 + $0x80] sm:$0xff]
          %v730 = vld [vmem:[%s1 + $0x88] sm:$0xff]
          %v731 = vld [vmem:[%s1 + $0x90] sm:$0xff]
          %v732 = vld [vmem:[%s1 + $0x98] sm:$0xff]
          %v733 = vld [vmem:[%s1 + $0xa0] sm:$0xff]
          %v734 = vld [vmem:[%s1 + $0xa8] sm:$0xff]
          %v735 = vld [vmem:[%s1 + $0xb0] sm:$0xff]
          %v736 = vld [vmem:[%s1 + $0xb8] sm:$0xff]
          %v737 = vld [vmem:[%s2] sm:$0x1]
          %v739 = vlaneseq
          %v740 = vshrl.u32 %v739, 7
          %v741 = vsub.s32 0, %v740
          %v742 = vrot.slane %v737, %v741
          %vm744 = vcmask 523264
          %v746 = vsel %vm744, %v712, 0
          %748 = vmatprep.subr.mxu0 0.0
          %749 = vmatpush1.msra.mxu0 %v728
          %750 = vmatprep.subr.mxu0 0.0
          %751 = vmatpush1.msra.mxu0 %v727
          %752 = vmatprep.subr.mxu0 0.0
          %753 = vmatpush1.msra.mxu0 %v726
          %754 = vmatprep.subr.mxu0 0.0
          %755 = vmatpush1.msra.mxu0 %v725
          %756 = vmatprep.subr.mxu0 0.0
          %757 = vmatpush1.msra.mxu0 %v724
          %758 = vmatprep.subr.mxu0 0.0
          %759 = vmatpush1.msra.mxu0 %v723
          %760 = vmatprep.subr.mxu0 0.0
          %761 = vmatpush1.msra.mxu0 %v722
          %762 = vmatprep.subr.mxu0 0.0
          %763 = vmatpush1.msra.mxu0 %v721
          %764 = vmatprep.subr.mxu0 0.0
          %765 = vmatpush1.msra.mxu0 %v720
          %766 = vmatprep.subr.mxu0 0.0
          %767 = vmatpush1.msra.mxu0 %v719
          %768 = vmatprep.subr.mxu0 0.0
          %769 = vmatpush1.msra.mxu0 %v718
          %770 = vmatprep.subr.mxu0 0.0
          %771 = vmatpush1.msra.mxu0 %v717
          %772 = vmatprep.subr.mxu0 0.0
          %773 = vmatpush1.msra.mxu0 %v716
          %774 = vmatprep.subr.mxu0 0.0
          %775 = vmatpush1.msra.mxu0 %v715
          %776 = vmatprep.subr.mxu0 0.0
          %777 = vmatpush1.msra.mxu0 %v714
          %778 = vmatprep.subr.mxu0 0.0
          %779 = vmatpush1.msra.mxu0 %v713
          %780 = vmatprep.subr.mxu0 0.0
          %781 = vmatpush2.msra.mxu0 0.0
          %782 = vmatprep.subr.mxu0 0.0
          %783 = vmatpush2.msra.mxu0 0.0
          %784 = vmatprep.subr.mxu0 0.0
          %785 = vmatpush2.msra.mxu0 0.0
          %786 = vmatprep.subr.mxu0 0.0
          %787 = vmatpush2.msra.mxu0 0.0
          %788 = vmatprep.subr.mxu0 0.0
          %789 = vmatpush2.msra.mxu0 0.0
          %790 = vmatprep.subr.mxu0 0.0
          %791 = vmatpush2.msra.mxu0 0.0
          %792 = vmatprep.subr.mxu0 0.0
          %793 = vmatpush2.msra.mxu0 0.0
          %794 = vmatprep.subr.mxu0 0.0
          %795 = vmatpush2.msra.mxu0 0.0
          %796 = vmatprep.subr.mxu0 0.0
          %797 = vmatpush2.msra.mxu0 %v736
          %798 = vmatprep.subr.mxu0 0.0
          %799 = vmatpush2.msra.mxu0 %v735
          %800 = vmatprep.subr.mxu0 0.0
          %801 = vmatpush2.msra.mxu0 %v734
          %802 = vmatprep.subr.mxu0 0.0
          %803 = vmatpush2.msra.mxu0 %v733
          %804 = vmatprep.subr.mxu0 0.0
          %805 = vmatpush2.msra.mxu0 %v732
          %806 = vmatprep.subr.mxu0 0.0
          %807 = vmatpush2.msra.mxu0 %v731
          %808 = vmatprep.subr.mxu0 0.0
          %809 = vmatpush2.msra.mxu0 %v730
          %810 = vmatprep.subr.mxu0 0.0
          %811 = vmatpush2.msra.mxu0 %v729
          %812 = vmatprep.mubr.f32.mxu0 %v746
          %813 = vmatmul.mubr.f32.gmra.mxu0 %v711
          %v814 = vpop.f32.mrf.mxu0
          %v815 = vadd.f32 %v742, %v814
          %v816 = vpop.f32.mrf.mxu0
          %817 = vdwg.mxu0
          %v818 = vld [vmem:[%s4] sm:$0x1f]
          %v819 = vld [vmem:[%s3] sm:$0x1]
          %v820 = vadd.f32 %v819, %v818
          %vm821 = vcmask 253952
          %822 = vst.msk [vmem:[#allocation2] sm:$0x1] %vm821, %v820
          %v824 = vrot.slane %v818, 1
          %v826 = vadd.f32 %v815, %v824
          %vm827 = vcmask 257024
          %828 = vst.msk [vmem:[#allocation2 + $0x1] sm:$0xf] %vm827, %v826
          %829 = vst.msk [vmem:[#allocation2 + $0x5] sm:$0x1] %vm821, %v820
          %v830 = vrot.slane %v818, 5
          %v832 = vadd.f32 %v815, %v830
          %vm833 = vcmask 261124
          %834 = vst.msk [vmem:[#allocation2 + $0x2] sm:$0xf0] %vm833, %v832
        $region92: #{tpu_custom_call.1} parent=87 // pred_fallthru
          _
        %v835 = vld [vmem:[#allocation2] sm:$0xff]
        %v836 = vld [vmem:[#allocation2 + $0x8] sm:$0x3]
        %v837 = vld [vmem:[%s665] sm:$0x1]
        %v838 = vld [vmem:[%s668] sm:$0x1]
        %vm839 = vcmask 261120
        %v840 = vsel %vm839, %v835, 0.0
        %841 = vadd.xlane.f32.xlu0 %v840
        %v842 = vpop.xlane.xlu0 %841
        %vm843 = vcmask 254976
        %v844 = vsel %vm843, %v836, 0.0
        %845 = vadd.xlane.f32.xlu0 %v844
        %v846 = vpop.xlane.xlu0 %845
        %v847 = vrcp.pop 32.0
        %v848 = vmul.f32 %v842, %v847
        %v849 = vmul.f32 %v846, %v847
        %v850 = vsub.f32 %v835, %v848
        %v851 = vsub.f32 %v836, %v849
        %v852 = vmul.f32 %v850, %v850
        %v853 = vmul.f32 %v851, %v851
        %v854 = vsel %vm839, %v852, 0.0
        %855 = vadd.xlane.f32.xlu0 %v854
        %v856 = vpop.xlane.xlu0 %855
        %v857 = vsel %vm843, %v853, 0.0
        %858 = vadd.xlane.f32.xlu0 %v857
        %v859 = vpop.xlane.xlu0 %858
        %v860 = vmul.f32 %v856, %v847
        %v861 = vmul.f32 %v859, %v847
        %v862 = vadd.f32 %v860, 1e-06
        %v863 = vadd.f32 %v861, 1e-06
        %v864 = vrsqrt.pop %v862
        %v865 = vrsqrt.pop %v863
        %v866 = vmul.f32 %v850, %v864
        %v867 = vmul.f32 %v851, %v865
        %v869 = vlaneseq
        %v870 = vshrl.u32 %v869, 7
        %v871 = vsub.s32 0, %v870
        %v872 = vrot.slane %v837, %v871
        %v874 = vmul.f32 %v866, %v872
        %v875 = vmul.f32 %v867, %v872
        %v877 = vlaneseq
        %v878 = vshrl.u32 %v877, 7
        %v879 = vsub.s32 0, %v878
        %v880 = vrot.slane %v838, %v879
        %v882 = vadd.f32 %v874, %v880
        %v883 = vadd.f32 %v875, %v880
        %v884 = vld [vmem:[%s673] sm:$0xff]
        %v885 = vld [vmem:[%s673 + $0x8] sm:$0xff]
        %v886 = vld [vmem:[%s673 + $0x10] sm:$0xff]
        %v887 = vld [vmem:[%s673 + $0x18] sm:$0xff]
        %v888 = vld [vmem:[%s676] sm:$0x1]
        %v890 = vlaneseq
        %v891 = vshrl.u32 %v890, 7
        %v892 = vsub.s32 0, %v891
        %v893 = vrot.slane %v888, %v892
        %v896 = vsel %vm839, %v882, 0
        %v899 = vsel %vm839, %v883, 0
        %901 = vmatprep.subr.mxu0 0.0
        %902 = vmatpush1.msra.mxu0 0.0
        %903 = vmatprep.subr.mxu0 0.0
        %904 = vmatpush1.msra.mxu0 0.0
        %905 = vmatprep.subr.mxu0 0.0
        %906 = vmatpush1.msra.mxu0 0.0
        %907 = vmatprep.subr.mxu0 0.0
        %908 = vmatpush1.msra.mxu0 0.0
        %909 = vmatprep.subr.mxu0 0.0
        %910 = vmatpush1.msra.mxu0 0.0
        %911 = vmatprep.subr.mxu0 0.0
        %912 = vmatpush1.msra.mxu0 0.0
        %913 = vmatprep.subr.mxu0 0.0
        %914 = vmatpush1.msra.mxu0 0.0
        %915 = vmatprep.subr.mxu0 0.0
        %916 = vmatpush1.msra.mxu0 0.0
        %917 = vmatprep.subr.mxu0 0.0
        %918 = vmatpush1.msra.mxu0 0.0
        %919 = vmatprep.subr.mxu0 0.0
        %920 = vmatpush1.msra.mxu0 0.0
        %921 = vmatprep.subr.mxu0 0.0
        %922 = vmatpush1.msra.mxu0 0.0
        %923 = vmatprep.subr.mxu0 0.0
        %924 = vmatpush1.msra.mxu0 0.0
        %925 = vmatprep.subr.mxu0 0.0
        %926 = vmatpush1.msra.mxu0 %v887
        %927 = vmatprep.subr.mxu0 0.0
        %928 = vmatpush1.msra.mxu0 %v886
        %929 = vmatprep.subr.mxu0 0.0
        %930 = vmatpush1.msra.mxu0 %v885
        %931 = vmatprep.subr.mxu0 0.0
        %932 = vmatpush1.msra.mxu0 %v884
        %933 = vmatprep.subr.mxu0 0.0
        %934 = vmatpush2.msra.mxu0 0.0
        %935 = vmatprep.subr.mxu0 0.0
        %936 = vmatpush2.msra.mxu0 0.0
        %937 = vmatprep.subr.mxu0 0.0
        %938 = vmatpush2.msra.mxu0 0.0
        %939 = vmatprep.subr.mxu0 0.0
        %940 = vmatpush2.msra.mxu0 0.0
        %941 = vmatprep.subr.mxu0 0.0
        %942 = vmatpush2.msra.mxu0 0.0
        %943 = vmatprep.subr.mxu0 0.0
        %944 = vmatpush2.msra.mxu0 0.0
        %945 = vmatprep.subr.mxu0 0.0
        %946 = vmatpush2.msra.mxu0 0.0
        %947 = vmatprep.subr.mxu0 0.0
        %948 = vmatpush2.msra.mxu0 0.0
        %949 = vmatprep.subr.mxu0 0.0
        %950 = vmatpush2.msra.mxu0 0.0
        %951 = vmatprep.subr.mxu0 0.0
        %952 = vmatpush2.msra.mxu0 0.0
        %953 = vmatprep.subr.mxu0 0.0
        %954 = vmatpush2.msra.mxu0 0.0
        %955 = vmatprep.subr.mxu0 0.0
        %956 = vmatpush2.msra.mxu0 0.0
        %957 = vmatprep.subr.mxu0 0.0
        %958 = vmatpush2.msra.mxu0 0.0
        %959 = vmatprep.subr.mxu0 0.0
        %960 = vmatpush2.msra.mxu0 0.0
        %961 = vmatprep.subr.mxu0 0.0
        %962 = vmatpush2.msra.mxu0 0.0
        %963 = vmatprep.subr.mxu0 0.0
        %964 = vmatpush2.msra.mxu0 0.0
        %965 = vmatprep.mubr.f32.mxu0 0.0
        %966 = vmatmul.mubr.f32.gmra.mxu0 %v896
        %v967 = vpop.f32.mrf.mxu0
        %v968 = vadd.f32 %v893, %v967
        %v969 = vpop.f32.mrf.mxu0
        %970 = vmatprep.mubr.f32.mxu0 0.0
        %971 = vmatmul.mubr.f32.gmra.mxu0 %v899
        %v972 = vpop.f32.mrf.mxu0
        %v973 = vadd.f32 %v893, %v972
        %v974 = vpop.f32.mrf.mxu0
        %975 = vdwg.mxu0
        %977 = vrot.lane.b32.xlu0 %v968, 96
        %v978 = vpop.permute.xlu0 %977
        %vm979 = vcmask 64512
        %v980 = vsel %vm979, %v968, 0
        %v982 = vsel %vm979, %v978, 0
        %984 = vmatprep.subr.mxu0 0.0
        %985 = vmatpush1.xpose.msra.mxu0 0.0
        %986 = vmatprep.subr.mxu0 0.0
        %987 = vmatpush1.xpose.msra.mxu0 0.0
        %988 = vmatprep.subr.mxu0 0.0
        %989 = vmatpush1.xpose.msra.mxu0 0.0
        %990 = vmatprep.subr.mxu0 0.0
        %991 = vmatpush1.xpose.msra.mxu0 0.0
        %992 = vmatprep.subr.mxu0 0.0
        %993 = vmatpush1.xpose.msra.mxu0 0.0
        %994 = vmatprep.subr.mxu0 0.0
        %995 = vmatpush1.xpose.msra.mxu0 0.0
        %996 = vmatprep.subr.mxu0 0.0
        %997 = vmatpush1.xpose.msra.mxu0 0.0
        %998 = vmatprep.subr.mxu0 0.0
        %999 = vmatpush1.xpose.msra.mxu0 0.0
        %1000 = vmatprep.subr.mxu0 0.0
        %1001 = vmatpush1.xpose.msra.mxu0 0.0
        %1002 = vmatprep.subr.mxu0 0.0
        %1003 = vmatpush1.xpose.msra.mxu0 0.0
        %1004 = vmatprep.subr.mxu0 0.0
        %1005 = vmatpush1.xpose.msra.mxu0 0.0
        %1006 = vmatprep.subr.mxu0 0.0
        %1007 = vmatpush1.xpose.msra.mxu0 0.0
        %1008 = vmatprep.subr.mxu0 0.0
        %1009 = vmatpush1.xpose.msra.mxu0 0.0
        %1010 = vmatprep.subr.mxu0 0.0
        %1011 = vmatpush1.xpose.msra.mxu0 0.0
        %1012 = vmatprep.subr.mxu0 0.0
        %1013 = vmatpush1.xpose.msra.mxu0 0.0
        %1014 = vmatprep.subr.mxu0 0.0
        %1015 = vmatpush1.xpose.msra.mxu0 %v982
        %1016 = vmatprep.subr.mxu0 0.0
        %1017 = vmatpush2.xpose.msra.mxu0 0.0
        %1018 = vmatprep.subr.mxu0 0.0
        %1019 = vmatpush2.xpose.msra.mxu0 0.0
        %1020 = vmatprep.subr.mxu0 0.0
        %1021 = vmatpush2.xpose.msra.mxu0 0.0
        %1022 = vmatprep.subr.mxu0 0.0
        %1023 = vmatpush2.xpose.msra.mxu0 0.0
        %1024 = vmatprep.subr.mxu0 0.0
        %1025 = vmatpush2.xpose.msra.mxu0 0.0
        %1026 = vmatprep.subr.mxu0 0.0
        %1027 = vmatpush2.xpose.msra.mxu0 0.0
        %1028 = vmatprep.subr.mxu0 0.0
        %1029 = vmatpush2.xpose.msra.mxu0 0.0
        %1030 = vmatprep.subr.mxu0 0.0
        %1031 = vmatpush2.xpose.msra.mxu0 0.0
        %1032 = vmatprep.subr.mxu0 0.0
        %1033 = vmatpush2.xpose.msra.mxu0 0.0
        %1034 = vmatprep.subr.mxu0 0.0
        %1035 = vmatpush2.xpose.msra.mxu0 0.0
        %1036 = vmatprep.subr.mxu0 0.0
        %1037 = vmatpush2.xpose.msra.mxu0 0.0
        %1038 = vmatprep.subr.mxu0 0.0
        %1039 = vmatpush2.xpose.msra.mxu0 0.0
        %1040 = vmatprep.subr.mxu0 0.0
        %1041 = vmatpush2.xpose.msra.mxu0 0.0
        %1042 = vmatprep.subr.mxu0 0.0
        %1043 = vmatpush2.xpose.msra.mxu0 0.0
        %1044 = vmatprep.subr.mxu0 0.0
        %1045 = vmatpush2.xpose.msra.mxu0 0.0
        %1046 = vmatprep.subr.mxu0 0.0
        %1047 = vmatpush2.xpose.msra.mxu0 0.0
        %1048 = vmatprep.mubr.f32.mxu0 0.0
        %1049 = vmatmul.mubr.f32.gmra.mxu0 %v980
        %v1050 = vpop.f32.mrf.mxu0
        %v1051 = vadd.f32 0.0, %v1050
        %v1052 = vpop.f32.mrf.mxu0
        %1053 = vdwg.mxu0
        %v1054 = vmul.f32 %v1051, 0.35355338
        %vm1055 = vcmask 36864
        %v1056 = vsel %vm1055, %v1054, -inf
        %1057 = vmax.xlane.f32.xlu0 %v1056
        %v1058 = vpop.xlane.xlu0 %1057
        %v1059 = vsub.f32 %v1054, %v1058
        %v1060 = vmul.f32 %v1059, 1.442695
        %v1061 = vpow.pop %v1060
        %v1062 = vsel %vm1055, %v1061, 0.0
        %1063 = vadd.xlane.f32.xlu0 %v1062
        %v1064 = vpop.xlane.xlu0 %1063
        %v1065 = vrcp.pop %v1064
        %v1066 = vmul.f32 %v1061, %v1065
        %1067 = vrot.lane.b32.xlu0 %v968, 64
        %v1068 = vpop.permute.xlu0 %1067
        %vm1069 = vcmask 39936
        %v1071 = vsel %vm1069, %v1066, 0
        %vm1073 = vcmask 1044480
        %v1074 = vsel %vm1073, %v1068, 0
        %1076 = vmatprep.subr.mxu0 0.0
        %1077 = vmatpush1.msra.mxu0 0.0
        %1078 = vmatprep.subr.mxu0 0.0
        %1079 = vmatpush1.msra.mxu0 0.0
        %1080 = vmatprep.subr.mxu0 0.0
        %1081 = vmatpush1.msra.mxu0 0.0
        %1082 = vmatprep.subr.mxu0 0.0
        %1083 = vmatpush1.msra.mxu0 0.0
        %1084 = vmatprep.subr.mxu0 0.0
        %1085 = vmatpush1.msra.mxu0 0.0
        %1086 = vmatprep.subr.mxu0 0.0
        %1087 = vmatpush1.msra.mxu0 0.0
        %1088 = vmatprep.subr.mxu0 0.0
        %1089 = vmatpush1.msra.mxu0 0.0
        %1090 = vmatprep.subr.mxu0 0.0
        %1091 = vmatpush1.msra.mxu0 0.0
        %1092 = vmatprep.subr.mxu0 0.0
        %1093 = vmatpush1.msra.mxu0 0.0
        %1094 = vmatprep.subr.mxu0 0.0
        %1095 = vmatpush1.msra.mxu0 0.0
        %1096 = vmatprep.subr.mxu0 0.0
        %1097 = vmatpush1.msra.mxu0 0.0
        %1098 = vmatprep.subr.mxu0 0.0
        %1099 = vmatpush1.msra.mxu0 0.0
        %1100 = vmatprep.subr.mxu0 0.0
        %1101 = vmatpush1.msra.mxu0 0.0
        %1102 = vmatprep.subr.mxu0 0.0
        %1103 = vmatpush1.msra.mxu0 0.0
        %1104 = vmatprep.subr.mxu0 0.0
        %1105 = vmatpush1.msra.mxu0 0.0
        %1106 = vmatprep.subr.mxu0 0.0
        %1107 = vmatpush1.msra.mxu0 %v1074
        %1108 = vmatprep.subr.mxu0 0.0
        %1109 = vmatpush2.msra.mxu0 0.0
        %1110 = vmatprep.subr.mxu0 0.0
        %1111 = vmatpush2.msra.mxu0 0.0
        %1112 = vmatprep.subr.mxu0 0.0
        %1113 = vmatpush2.msra.mxu0 0.0
        %1114 = vmatprep.subr.mxu0 0.0
        %1115 = vmatpush2.msra.mxu0 0.0
        %1116 = vmatprep.subr.mxu0 0.0
        %1117 = vmatpush2.msra.mxu0 0.0
        %1118 = vmatprep.subr.mxu0 0.0
        %1119 = vmatpush2.msra.mxu0 0.0
        %1120 = vmatprep.subr.mxu0 0.0
        %1121 = vmatpush2.msra.mxu0 0.0
        %1122 = vmatprep.subr.mxu0 0.0
        %1123 = vmatpush2.msra.mxu0 0.0
        %1124 = vmatprep.subr.mxu0 0.0
        %1125 = vmatpush2.msra.mxu0 0.0
        %1126 = vmatprep.subr.mxu0 0.0
        %1127 = vmatpush2.msra.mxu0 0.0
        %1128 = vmatprep.subr.mxu0 0.0
        %1129 = vmatpush2.msra.mxu0 0.0
        %1130 = vmatprep.subr.mxu0 0.0
        %1131 = vmatpush2.msra.mxu0 0.0
        %1132 = vmatprep.subr.mxu0 0.0
        %1133 = vmatpush2.msra.mxu0 0.0
        %1134 = vmatprep.subr.mxu0 0.0
        %1135 = vmatpush2.msra.mxu0 0.0
        %1136 = vmatprep.subr.mxu0 0.0
        %1137 = vmatpush2.msra.mxu0 0.0
        %1138 = vmatprep.subr.mxu0 0.0
        %1139 = vmatpush2.msra.mxu0 0.0
        %1140 = vmatprep.mubr.f32.mxu0 0.0
        %1141 = vmatmul.mubr.f32.gmra.mxu0 %v1071
        %v1142 = vpop.f32.mrf.mxu0
        %v1143 = vadd.f32 0.0, %v1142
        %v1144 = vpop.f32.mrf.mxu0
        %1145 = vdwg.mxu0
        %1146 = vrot.lane.b32.xlu0 %v968, 120
        %v1147 = vpop.permute.xlu0 %1146
        %1148 = vrot.lane.b32.xlu0 %v968, 88
        %v1149 = vpop.permute.xlu0 %1148
        %v1150 = vsel %vm979, %v1147, 0
        %v1152 = vsel %vm979, %v1149, 0
        %1154 = vmatprep.subr.mxu0 0.0
        %1155 = vmatpush1.xpose.msra.mxu0 0.0
        %1156 = vmatprep.subr.mxu0 0.0
        %1157 = vmatpush1.xpose.msra.mxu0 0.0
        %1158 = vmatprep.subr.mxu0 0.0
        %1159 = vmatpush1.xpose.msra.mxu0 0.0
        %1160 = vmatprep.subr.mxu0 0.0
        %1161 = vmatpush1.xpose.msra.mxu0 0.0
        %1162 = vmatprep.subr.mxu0 0.0
        %1163 = vmatpush1.xpose.msra.mxu0 0.0
        %1164 = vmatprep.subr.mxu0 0.0
        %1165 = vmatpush1.xpose.msra.mxu0 0.0
        %1166 = vmatprep.subr.mxu0 0.0
        %1167 = vmatpush1.xpose.msra.mxu0 0.0
        %1168 = vmatprep.subr.mxu0 0.0
        %1169 = vmatpush1.xpose.msra.mxu0 0.0
        %1170 = vmatprep.subr.mxu0 0.0
        %1171 = vmatpush1.xpose.msra.mxu0 0.0
        %1172 = vmatprep.subr.mxu0 0.0
        %1173 = vmatpush1.xpose.msra.mxu0 0.0
        %1174 = vmatprep.subr.mxu0 0.0
        %1175 = vmatpush1.xpose.msra.mxu0 0.0
        %1176 = vmatprep.subr.mxu0 0.0
        %1177 = vmatpush1.xpose.msra.mxu0 0.0
        %1178 = vmatprep.subr.mxu0 0.0
        %1179 = vmatpush1.xpose.msra.mxu0 0.0
        %1180 = vmatprep.subr.mxu0 0.0
        %1181 = vmatpush1.xpose.msra.mxu0 0.0
        %1182 = vmatprep.subr.mxu0 0.0
        %1183 = vmatpush1.xpose.msra.mxu0 0.0
        %1184 = vmatprep.subr.mxu0 0.0
        %1185 = vmatpush1.xpose.msra.mxu0 %v1152
        %1186 = vmatprep.subr.mxu0 0.0
        %1187 = vmatpush2.xpose.msra.mxu0 0.0
        %1188 = vmatprep.subr.mxu0 0.0
        %1189 = vmatpush2.xpose.msra.mxu0 0.0
        %1190 = vmatprep.subr.mxu0 0.0
        %1191 = vmatpush2.xpose.msra.mxu0 0.0
        %1192 = vmatprep.subr.mxu0 0.0
        %1193 = vmatpush2.xpose.msra.mxu0 0.0
        %1194 = vmatprep.subr.mxu0 0.0
        %1195 = vmatpush2.xpose.msra.mxu0 0.0
        %1196 = vmatprep.subr.mxu0 0.0
        %1197 = vmatpush2.xpose.msra.mxu0 0.0
        %1198 = vmatprep.subr.mxu0 0.0
        %1199 = vmatpush2.xpose.msra.mxu0 0.0
        %1200 = vmatprep.subr.mxu0 0.0
        %1201 = vmatpush2.xpose.msra.mxu0 0.0
        %1202 = vmatprep.subr.mxu0 0.0
        %1203 = vmatpush2.xpose.msra.mxu0 0.0
        %1204 = vmatprep.subr.mxu0 0.0
        %1205 = vmatpush2.xpose.msra.mxu0 0.0
        %1206 = vmatprep.subr.mxu0 0.0
        %1207 = vmatpush2.xpose.msra.mxu0 0.0
        %1208 = vmatprep.subr.mxu0 0.0
        %1209 = vmatpush2.xpose.msra.mxu0 0.0
        %1210 = vmatprep.subr.mxu0 0.0
        %1211 = vmatpush2.xpose.msra.mxu0 0.0
        %1212 = vmatprep.subr.mxu0 0.0
        %1213 = vmatpush2.xpose.msra.mxu0 0.0
        %1214 = vmatprep.subr.mxu0 0.0
        %1215 = vmatpush2.xpose.msra.mxu0 0.0
        %1216 = vmatprep.subr.mxu0 0.0
        %1217 = vmatpush2.xpose.msra.mxu0 0.0
        %1218 = vmatprep.mubr.f32.mxu0 0.0
        %1219 = vmatmul.mubr.f32.gmra.mxu0 %v1150
        %v1220 = vpop.f32.mrf.mxu0
        %v1221 = vadd.f32 0.0, %v1220
        %v1222 = vpop.f32.mrf.mxu0
        %1223 = vdwg.mxu0
        %v1224 = vmul.f32 %v1221, 0.35355338
        %v1225 = vsel %vm1055, %v1224, -inf
        %1226 = vmax.xlane.f32.xlu0 %v1225
        %v1227 = vpop.xlane.xlu0 %1226
        %v1228 = vsub.f32 %v1224, %v1227
        %v1229 = vmul.f32 %v1228, 1.442695
        %v1230 = vpow.pop %v1229
        %v1231 = vsel %vm1055, %v1230, 0.0
        %1232 = vadd.xlane.f32.xlu0 %v1231
        %v1233 = vpop.xlane.xlu0 %1232
        %v1234 = vrcp.pop %v1233
        %v1235 = vmul.f32 %v1230, %v1234
        %1236 = vrot.lane.b32.xlu0 %v968, 56
        %v1237 = vpop.permute.xlu0 %1236
        %v1239 = vsel %vm1069, %v1235, 0
        %v1241 = vsel %vm1073, %v1237, 0
        %1243 = vmatprep.subr.mxu0 0.0
        %1244 = vmatpush1.msra.mxu0 0.0
        %1245 = vmatprep.subr.mxu0 0.0
        %1246 = vmatpush1.msra.mxu0 0.0
        %1247 = vmatprep.subr.mxu0 0.0
        %1248 = vmatpush1.msra.mxu0 0.0
        %1249 = vmatprep.subr.mxu0 0.0
        %1250 = vmatpush1.msra.mxu0 0.0
        %1251 = vmatprep.subr.mxu0 0.0
        %1252 = vmatpush1.msra.mxu0 0.0
        %1253 = vmatprep.subr.mxu0 0.0
        %1254 = vmatpush1.msra.mxu0 0.0
        %1255 = vmatprep.subr.mxu0 0.0
        %1256 = vmatpush1.msra.mxu0 0.0
        %1257 = vmatprep.subr.mxu0 0.0
        %1258 = vmatpush1.msra.mxu0 0.0
        %1259 = vmatprep.subr.mxu0 0.0
        %1260 = vmatpush1.msra.mxu0 0.0
        %1261 = vmatprep.subr.mxu0 0.0
        %1262 = vmatpush1.msra.mxu0 0.0
        %1263 = vmatprep.subr.mxu0 0.0
        %1264 = vmatpush1.msra.mxu0 0.0
        %1265 = vmatprep.subr.mxu0 0.0
        %1266 = vmatpush1.msra.mxu0 0.0
        %1267 = vmatprep.subr.mxu0 0.0
        %1268 = vmatpush1.msra.mxu0 0.0
        %1269 = vmatprep.subr.mxu0 0.0
        %1270 = vmatpush1.msra.mxu0 0.0
        %1271 = vmatprep.subr.mxu0 0.0
        %1272 = vmatpush1.msra.mxu0 0.0
        %1273 = vmatprep.subr.mxu0 0.0
        %1274 = vmatpush1.msra.mxu0 %v1241
        %1275 = vmatprep.subr.mxu0 0.0
        %1276 = vmatpush2.msra.mxu0 0.0
        %1277 = vmatprep.subr.mxu0 0.0
        %1278 = vmatpush2.msra.mxu0 0.0
        %1279 = vmatprep.subr.mxu0 0.0
        %1280 = vmatpush2.msra.mxu0 0.0
        %1281 = vmatprep.subr.mxu0 0.0
        %1282 = vmatpush2.msra.mxu0 0.0
        %1283 = vmatprep.subr.mxu0 0.0
        %1284 = vmatpush2.msra.mxu0 0.0
        %1285 = vmatprep.subr.mxu0 0.0
        %1286 = vmatpush2.msra.mxu0 0.0
        %1287 = vmatprep.subr.mxu0 0.0
        %1288 = vmatpush2.msra.mxu0 0.0
        %1289 = vmatprep.subr.mxu0 0.0
        %1290 = vmatpush2.msra.mxu0 0.0
        %1291 = vmatprep.subr.mxu0 0.0
        %1292 = vmatpush2.msra.mxu0 0.0
        %1293 = vmatprep.subr.mxu0 0.0
        %1294 = vmatpush2.msra.mxu0 0.0
        %1295 = vmatprep.subr.mxu0 0.0
        %1296 = vmatpush2.msra.mxu0 0.0
        %1297 = vmatprep.subr.mxu0 0.0
        %1298 = vmatpush2.msra.mxu0 0.0
        %1299 = vmatprep.subr.mxu0 0.0
        %1300 = vmatpush2.msra.mxu0 0.0
        %1301 = vmatprep.subr.mxu0 0.0
        %1302 = vmatpush2.msra.mxu0 0.0
        %1303 = vmatprep.subr.mxu0 0.0
        %1304 = vmatpush2.msra.mxu0 0.0
        %1305 = vmatprep.subr.mxu0 0.0
        %1306 = vmatpush2.msra.mxu0 0.0
        %1307 = vmatprep.mubr.f32.mxu0 0.0
        %1308 = vmatmul.mubr.f32.gmra.mxu0 %v1239
        %v1309 = vpop.f32.mrf.mxu0
        %v1310 = vadd.f32 0.0, %v1309
        %v1311 = vpop.f32.mrf.mxu0
        %1312 = vdwg.mxu0
        %1313 = vrot.lane.b32.xlu0 %v968, 112
        %v1314 = vpop.permute.xlu0 %1313
        %1315 = vrot.lane.b32.xlu0 %v968, 80
        %v1316 = vpop.permute.xlu0 %1315
        %v1317 = vsel %vm979, %v1314, 0
        %v1319 = vsel %vm979, %v1316, 0
        %1321 = vmatprep.subr.mxu0 0.0
        %1322 = vmatpush1.xpose.msra.mxu0 0.0
        %1323 = vmatprep.subr.mxu0 0.0
        %1324 = vmatpush1.xpose.msra.mxu0 0.0
        %1325 = vmatprep.subr.mxu0 0.0
        %1326 = vmatpush1.xpose.msra.mxu0 0.0
        %1327 = vmatprep.subr.mxu0 0.0
        %1328 = vmatpush1.xpose.msra.mxu0 0.0
        %1329 = vmatprep.subr.mxu0 0.0
        %1330 = vmatpush1.xpose.msra.mxu0 0.0
        %1331 = vmatprep.subr.mxu0 0.0
        %1332 = vmatpush1.xpose.msra.mxu0 0.0
        %1333 = vmatprep.subr.mxu0 0.0
        %1334 = vmatpush1.xpose.msra.mxu0 0.0
        %1335 = vmatprep.subr.mxu0 0.0
        %1336 = vmatpush1.xpose.msra.mxu0 0.0
        %1337 = vmatprep.subr.mxu0 0.0
        %1338 = vmatpush1.xpose.msra.mxu0 0.0
        %1339 = vmatprep.subr.mxu0 0.0
        %1340 = vmatpush1.xpose.msra.mxu0 0.0
        %1341 = vmatprep.subr.mxu0 0.0
        %1342 = vmatpush1.xpose.msra.mxu0 0.0
        %1343 = vmatprep.subr.mxu0 0.0
        %1344 = vmatpush1.xpose.msra.mxu0 0.0
        %1345 = vmatprep.subr.mxu0 0.0
        %1346 = vmatpush1.xpose.msra.mxu0 0.0
        %1347 = vmatprep.subr.mxu0 0.0
        %1348 = vmatpush1.xpose.msra.mxu0 0.0
        %1349 = vmatprep.subr.mxu0 0.0
        %1350 = vmatpush1.xpose.msra.mxu0 0.0
        %1351 = vmatprep.subr.mxu0 0.0
        %1352 = vmatpush1.xpose.msra.mxu0 %v1319
        %1353 = vmatprep.subr.mxu0 0.0
        %1354 = vmatpush2.xpose.msra.mxu0 0.0
        %1355 = vmatprep.subr.mxu0 0.0
        %1356 = vmatpush2.xpose.msra.mxu0 0.0
        %1357 = vmatprep.subr.mxu0 0.0
        %1358 = vmatpush2.xpose.msra.mxu0 0.0
        %1359 = vmatprep.subr.mxu0 0.0
        %1360 = vmatpush2.xpose.msra.mxu0 0.0
        %1361 = vmatprep.subr.mxu0 0.0
        %1362 = vmatpush2.xpose.msra.mxu0 0.0
        %1363 = vmatprep.subr.mxu0 0.0
        %1364 = vmatpush2.xpose.msra.mxu0 0.0
        %1365 = vmatprep.subr.mxu0 0.0
        %1366 = vmatpush2.xpose.msra.mxu0 0.0
        %1367 = vmatprep.subr.mxu0 0.0
        %1368 = vmatpush2.xpose.msra.mxu0 0.0
        %1369 = vmatprep.subr.mxu0 0.0
        %1370 = vmatpush2.xpose.msra.mxu0 0.0
        %1371 = vmatprep.subr.mxu0 0.0
        %1372 = vmatpush2.xpose.msra.mxu0 0.0
        %1373 = vmatprep.subr.mxu0 0.0
        %1374 = vmatpush2.xpose.msra.mxu0 0.0
        %1375 = vmatprep.subr.mxu0 0.0
        %1376 = vmatpush2.xpose.msra.mxu0 0.0
        %1377 = vmatprep.subr.mxu0 0.0
        %1378 = vmatpush2.xpose.msra.mxu0 0.0
        %1379 = vmatprep.subr.mxu0 0.0
        %1380 = vmatpush2.xpose.msra.mxu0 0.0
        %1381 = vmatprep.subr.mxu0 0.0
        %1382 = vmatpush2.xpose.msra.mxu0 0.0
        %1383 = vmatprep.subr.mxu0 0.0
        %1384 = vmatpush2.xpose.msra.mxu0 0.0
        %1385 = vmatprep.mubr.f32.mxu0 0.0
        %1386 = vmatmul.mubr.f32.gmra.mxu0 %v1317
        %v1387 = vpop.f32.mrf.mxu0
        %v1388 = vadd.f32 0.0, %v1387
        %v1389 = vpop.f32.mrf.mxu0
        %1390 = vdwg.mxu0
        %v1391 = vmul.f32 %v1388, 0.35355338
        %v1392 = vsel %vm1055, %v1391, -inf
        %1393 = vmax.xlane.f32.xlu0 %v1392
        %v1394 = vpop.xlane.xlu0 %1393
        %v1395 = vsub.f32 %v1391, %v1394
        %v1396 = vmul.f32 %v1395, 1.442695
        %v1397 = vpow.pop %v1396
        %v1398 = vsel %vm1055, %v1397, 0.0
        %1399 = vadd.xlane.f32.xlu0 %v1398
        %v1400 = vpop.xlane.xlu0 %1399
        %v1401 = vrcp.pop %v1400
        %v1402 = vmul.f32 %v1397, %v1401
        %1403 = vrot.lane.b32.xlu0 %v968, 48
        %v1404 = vpop.permute.xlu0 %1403
        %v1406 = vsel %vm1069, %v1402, 0
        %v1408 = vsel %vm1073, %v1404, 0
        %1410 = vmatprep.subr.mxu0 0.0
        %1411 = vmatpush1.msra.mxu0 0.0
        %1412 = vmatprep.subr.mxu0 0.0
        %1413 = vmatpush1.msra.mxu0 0.0
        %1414 = vmatprep.subr.mxu0 0.0
        %1415 = vmatpush1.msra.mxu0 0.0
        %1416 = vmatprep.subr.mxu0 0.0
        %1417 = vmatpush1.msra.mxu0 0.0
        %1418 = vmatprep.subr.mxu0 0.0
        %1419 = vmatpush1.msra.mxu0 0.0
        %1420 = vmatprep.subr.mxu0 0.0
        %1421 = vmatpush1.msra.mxu0 0.0
        %1422 = vmatprep.subr.mxu0 0.0
        %1423 = vmatpush1.msra.mxu0 0.0
        %1424 = vmatprep.subr.mxu0 0.0
        %1425 = vmatpush1.msra.mxu0 0.0
        %1426 = vmatprep.subr.mxu0 0.0
        %1427 = vmatpush1.msra.mxu0 0.0
        %1428 = vmatprep.subr.mxu0 0.0
        %1429 = vmatpush1.msra.mxu0 0.0
        %1430 = vmatprep.subr.mxu0 0.0
        %1431 = vmatpush1.msra.mxu0 0.0
        %1432 = vmatprep.subr.mxu0 0.0
        %1433 = vmatpush1.msra.mxu0 0.0
        %1434 = vmatprep.subr.mxu0 0.0
        %1435 = vmatpush1.msra.mxu0 0.0
        %1436 = vmatprep.subr.mxu0 0.0
        %1437 = vmatpush1.msra.mxu0 0.0
        %1438 = vmatprep.subr.mxu0 0.0
        %1439 = vmatpush1.msra.mxu0 0.0
        %1440 = vmatprep.subr.mxu0 0.0
        %1441 = vmatpush1.msra.mxu0 %v1408
        %1442 = vmatprep.subr.mxu0 0.0
        %1443 = vmatpush2.msra.mxu0 0.0
        %1444 = vmatprep.subr.mxu0 0.0
        %1445 = vmatpush2.msra.mxu0 0.0
        %1446 = vmatprep.subr.mxu0 0.0
        %1447 = vmatpush2.msra.mxu0 0.0
        %1448 = vmatprep.subr.mxu0 0.0
        %1449 = vmatpush2.msra.mxu0 0.0
        %1450 = vmatprep.subr.mxu0 0.0
        %1451 = vmatpush2.msra.mxu0 0.0
        %1452 = vmatprep.subr.mxu0 0.0
        %1453 = vmatpush2.msra.mxu0 0.0
        %1454 = vmatprep.subr.mxu0 0.0
        %1455 = vmatpush2.msra.mxu0 0.0
        %1456 = vmatprep.subr.mxu0 0.0
        %1457 = vmatpush2.msra.mxu0 0.0
        %1458 = vmatprep.subr.mxu0 0.0
        %1459 = vmatpush2.msra.mxu0 0.0
        %1460 = vmatprep.subr.mxu0 0.0
        %1461 = vmatpush2.msra.mxu0 0.0
        %1462 = vmatprep.subr.mxu0 0.0
        %1463 = vmatpush2.msra.mxu0 0.0
        %1464 = vmatprep.subr.mxu0 0.0
        %1465 = vmatpush2.msra.mxu0 0.0
        %1466 = vmatprep.subr.mxu0 0.0
        %1467 = vmatpush2.msra.mxu0 0.0
        %1468 = vmatprep.subr.mxu0 0.0
        %1469 = vmatpush2.msra.mxu0 0.0
        %1470 = vmatprep.subr.mxu0 0.0
        %1471 = vmatpush2.msra.mxu0 0.0
        %1472 = vmatprep.subr.mxu0 0.0
        %1473 = vmatpush2.msra.mxu0 0.0
        %1474 = vmatprep.mubr.f32.mxu0 0.0
        %1475 = vmatmul.mubr.f32.gmra.mxu0 %v1406
        %v1476 = vpop.f32.mrf.mxu0
        %v1477 = vadd.f32 0.0, %v1476
        %v1478 = vpop.f32.mrf.mxu0
        %1479 = vdwg.mxu0
        %1480 = vrot.lane.b32.xlu0 %v968, 104
        %v1481 = vpop.permute.xlu0 %1480
        %1482 = vrot.lane.b32.xlu0 %v968, 72
        %v1483 = vpop.permute.xlu0 %1482
        %v1484 = vsel %vm979, %v1481, 0
        %v1486 = vsel %vm979, %v1483, 0
        %1488 = vmatprep.subr.mxu0 0.0
        %1489 = vmatpush1.xpose.msra.mxu0 0.0
        %1490 = vmatprep.subr.mxu0 0.0
        %1491 = vmatpush1.xpose.msra.mxu0 0.0
        %1492 = vmatprep.subr.mxu0 0.0
        %1493 = vmatpush1.xpose.msra.mxu0 0.0
        %1494 = vmatprep.subr.mxu0 0.0
        %1495 = vmatpush1.xpose.msra.mxu0 0.0
        %1496 = vmatprep.subr.mxu0 0.0
        %1497 = vmatpush1.xpose.msra.mxu0 0.0
        %1498 = vmatprep.subr.mxu0 0.0
        %1499 = vmatpush1.xpose.msra.mxu0 0.0
        %1500 = vmatprep.subr.mxu0 0.0
        %1501 = vmatpush1.xpose.msra.mxu0 0.0
        %1502 = vmatprep.subr.mxu0 0.0
        %1503 = vmatpush1.xpose.msra.mxu0 0.0
        %1504 = vmatprep.subr.mxu0 0.0
        %1505 = vmatpush1.xpose.msra.mxu0 0.0
        %1506 = vmatprep.subr.mxu0 0.0
        %1507 = vmatpush1.xpose.msra.mxu0 0.0
        %1508 = vmatprep.subr.mxu0 0.0
        %1509 = vmatpush1.xpose.msra.mxu0 0.0
        %1510 = vmatprep.subr.mxu0 0.0
        %1511 = vmatpush1.xpose.msra.mxu0 0.0
        %1512 = vmatprep.subr.mxu0 0.0
        %1513 = vmatpush1.xpose.msra.mxu0 0.0
        %1514 = vmatprep.subr.mxu0 0.0
        %1515 = vmatpush1.xpose.msra.mxu0 0.0
        %1516 = vmatprep.subr.mxu0 0.0
        %1517 = vmatpush1.xpose.msra.mxu0 0.0
        %1518 = vmatprep.subr.mxu0 0.0
        %1519 = vmatpush1.xpose.msra.mxu0 %v1486
        %1520 = vmatprep.subr.mxu0 0.0
        %1521 = vmatpush2.xpose.msra.mxu0 0.0
        %1522 = vmatprep.subr.mxu0 0.0
        %1523 = vmatpush2.xpose.msra.mxu0 0.0
        %1524 = vmatprep.subr.mxu0 0.0
        %1525 = vmatpush2.xpose.msra.mxu0 0.0
        %1526 = vmatprep.subr.mxu0 0.0
        %1527 = vmatpush2.xpose.msra.mxu0 0.0
        %1528 = vmatprep.subr.mxu0 0.0
        %1529 = vmatpush2.xpose.msra.mxu0 0.0
        %1530 = vmatprep.subr.mxu0 0.0
        %1531 = vmatpush2.xpose.msra.mxu0 0.0
        %1532 = vmatprep.subr.mxu0 0.0
        %1533 = vmatpush2.xpose.msra.mxu0 0.0
        %1534 = vmatprep.subr.mxu0 0.0
        %1535 = vmatpush2.xpose.msra.mxu0 0.0
        %1536 = vmatprep.subr.mxu0 0.0
        %1537 = vmatpush2.xpose.msra.mxu0 0.0
        %1538 = vmatprep.subr.mxu0 0.0
        %1539 = vmatpush2.xpose.msra.mxu0 0.0
        %1540 = vmatprep.subr.mxu0 0.0
        %1541 = vmatpush2.xpose.msra.mxu0 0.0
        %1542 = vmatprep.subr.mxu0 0.0
        %1543 = vmatpush2.xpose.msra.mxu0 0.0
        %1544 = vmatprep.subr.mxu0 0.0
        %1545 = vmatpush2.xpose.msra.mxu0 0.0
        %1546 = vmatprep.subr.mxu0 0.0
        %1547 = vmatpush2.xpose.msra.mxu0 0.0
        %1548 = vmatprep.subr.mxu0 0.0
        %1549 = vmatpush2.xpose.msra.mxu0 0.0
        %1550 = vmatprep.subr.mxu0 0.0
        %1551 = vmatpush2.xpose.msra.mxu0 0.0
        %1552 = vmatprep.mubr.f32.mxu0 0.0
        %1553 = vmatmul.mubr.f32.gmra.mxu0 %v1484
        %v1554 = vpop.f32.mrf.mxu0
        %v1555 = vadd.f32 0.0, %v1554
        %v1556 = vpop.f32.mrf.mxu0
        %1557 = vdwg.mxu0
        %v1558 = vmul.f32 %v1555, 0.35355338
        %v1559 = vsel %vm1055, %v1558, -inf
        %1560 = vmax.xlane.f32.xlu0 %v1559
        %v1561 = vpop.xlane.xlu0 %1560
        %v1562 = vsub.f32 %v1558, %v1561
        %v1563 = vmul.f32 %v1562, 1.442695
        %v1564 = vpow.pop %v1563
        %v1565 = vsel %vm1055, %v1564, 0.0
        %1566 = vadd.xlane.f32.xlu0 %v1565
        %v1567 = vpop.xlane.xlu0 %1566
        %v1568 = vrcp.pop %v1567
        %v1569 = vmul.f32 %v1564, %v1568
        %1570 = vrot.lane.b32.xlu0 %v968, 40
        %v1571 = vpop.permute.xlu0 %1570
        %v1573 = vsel %vm1069, %v1569, 0
        %v1575 = vsel %vm1073, %v1571, 0
        %1577 = vmatprep.subr.mxu0 0.0
        %1578 = vmatpush1.msra.mxu0 0.0
        %1579 = vmatprep.subr.mxu0 0.0
        %1580 = vmatpush1.msra.mxu0 0.0
        %1581 = vmatprep.subr.mxu0 0.0
        %1582 = vmatpush1.msra.mxu0 0.0
        %1583 = vmatprep.subr.mxu0 0.0
        %1584 = vmatpush1.msra.mxu0 0.0
        %1585 = vmatprep.subr.mxu0 0.0
        %1586 = vmatpush1.msra.mxu0 0.0
        %1587 = vmatprep.subr.mxu0 0.0
        %1588 = vmatpush1.msra.mxu0 0.0
        %1589 = vmatprep.subr.mxu0 0.0
        %1590 = vmatpush1.msra.mxu0 0.0
        %1591 = vmatprep.subr.mxu0 0.0
        %1592 = vmatpush1.msra.mxu0 0.0
        %1593 = vmatprep.subr.mxu0 0.0
        %1594 = vmatpush1.msra.mxu0 0.0
        %1595 = vmatprep.subr.mxu0 0.0
        %1596 = vmatpush1.msra.mxu0 0.0
        %1597 = vmatprep.subr.mxu0 0.0
        %1598 = vmatpush1.msra.mxu0 0.0
        %1599 = vmatprep.subr.mxu0 0.0
        %1600 = vmatpush1.msra.mxu0 0.0
        %1601 = vmatprep.subr.mxu0 0.0
        %1602 = vmatpush1.msra.mxu0 0.0
        %1603 = vmatprep.subr.mxu0 0.0
        %1604 = vmatpush1.msra.mxu0 0.0
        %1605 = vmatprep.subr.mxu0 0.0
        %1606 = vmatpush1.msra.mxu0 0.0
        %1607 = vmatprep.subr.mxu0 0.0
        %1608 = vmatpush1.msra.mxu0 %v1575
        %1609 = vmatprep.subr.mxu0 0.0
        %1610 = vmatpush2.msra.mxu0 0.0
        %1611 = vmatprep.subr.mxu0 0.0
        %1612 = vmatpush2.msra.mxu0 0.0
        %1613 = vmatprep.subr.mxu0 0.0
        %1614 = vmatpush2.msra.mxu0 0.0
        %1615 = vmatprep.subr.mxu0 0.0
        %1616 = vmatpush2.msra.mxu0 0.0
        %1617 = vmatprep.subr.mxu0 0.0
        %1618 = vmatpush2.msra.mxu0 0.0
        %1619 = vmatprep.subr.mxu0 0.0
        %1620 = vmatpush2.msra.mxu0 0.0
        %1621 = vmatprep.subr.mxu0 0.0
        %1622 = vmatpush2.msra.mxu0 0.0
        %1623 = vmatprep.subr.mxu0 0.0
        %1624 = vmatpush2.msra.mxu0 0.0
        %1625 = vmatprep.subr.mxu0 0.0
        %1626 = vmatpush2.msra.mxu0 0.0
        %1627 = vmatprep.subr.mxu0 0.0
        %1628 = vmatpush2.msra.mxu0 0.0
        %1629 = vmatprep.subr.mxu0 0.0
        %1630 = vmatpush2.msra.mxu0 0.0
        %1631 = vmatprep.subr.mxu0 0.0
        %1632 = vmatpush2.msra.mxu0 0.0
        %1633 = vmatprep.subr.mxu0 0.0
        %1634 = vmatpush2.msra.mxu0 0.0
        %1635 = vmatprep.subr.mxu0 0.0
        %1636 = vmatpush2.msra.mxu0 0.0
        %1637 = vmatprep.subr.mxu0 0.0
        %1638 = vmatpush2.msra.mxu0 0.0
        %1639 = vmatprep.subr.mxu0 0.0
        %1640 = vmatpush2.msra.mxu0 0.0
        %1641 = vmatprep.mubr.f32.mxu0 0.0
        %1642 = vmatmul.mubr.f32.gmra.mxu0 %v1573
        %v1643 = vpop.f32.mrf.mxu0
        %v1644 = vadd.f32 0.0, %v1643
        %v1645 = vpop.f32.mrf.mxu0
        %1646 = vdwg.mxu0
        %1648 = vrot.lane.b32.xlu0 %v1310, 8
        %v1649 = vpop.permute.xlu0 %1648
        %1652 = vrot.lane.b32.xlu0 %v1477, 16
        %v1653 = vpop.permute.xlu0 %1652
        %1656 = vrot.lane.b32.xlu0 %v1644, 24
        %v1657 = vpop.permute.xlu0 %1656
        %v1659 = vsel %vm979, %v1143, %v1649
        %vm1660 = vcmask 130048
        %v1661 = vsel %vm1660, %v1659, %v1653
        %vm1662 = vcmask 195584
        %v1663 = vsel %vm1662, %v1661, %v1657
        %vm1665 = vcmask 1042432
        %v1666 = vrot.slane %v968, 5
        %v1667 = vrot.slane %v973, 5
        %v1668 = vsel %vm1665, %v1666, %v1667
        %1669 = vrot.lane.b32.xlu0 %v1668, 96
        %v1670 = vpop.permute.xlu0 %1669
        %v1671 = vsel %vm979, %v1668, 0
        %v1673 = vsel %vm979, %v1670, 0
        %1675 = vmatprep.subr.mxu0 0.0
        %1676 = vmatpush1.xpose.msra.mxu0 0.0
        %1677 = vmatprep.subr.mxu0 0.0
        %1678 = vmatpush1.xpose.msra.mxu0 0.0
        %1679 = vmatprep.subr.mxu0 0.0
        %1680 = vmatpush1.xpose.msra.mxu0 0.0
        %1681 = vmatprep.subr.mxu0 0.0
        %1682 = vmatpush1.xpose.msra.mxu0 0.0
        %1683 = vmatprep.subr.mxu0 0.0
        %1684 = vmatpush1.xpose.msra.mxu0 0.0
        %1685 = vmatprep.subr.mxu0 0.0
        %1686 = vmatpush1.xpose.msra.mxu0 0.0
        %1687 = vmatprep.subr.mxu0 0.0
        %1688 = vmatpush1.xpose.msra.mxu0 0.0
        %1689 = vmatprep.subr.mxu0 0.0
        %1690 = vmatpush1.xpose.msra.mxu0 0.0
        %1691 = vmatprep.subr.mxu0 0.0
        %1692 = vmatpush1.xpose.msra.mxu0 0.0
        %1693 = vmatprep.subr.mxu0 0.0
        %1694 = vmatpush1.xpose.msra.mxu0 0.0
        %1695 = vmatprep.subr.mxu0 0.0
        %1696 = vmatpush1.xpose.msra.mxu0 0.0
        %1697 = vmatprep.subr.mxu0 0.0
        %1698 = vmatpush1.xpose.msra.mxu0 0.0
        %1699 = vmatprep.subr.mxu0 0.0
        %1700 = vmatpush1.xpose.msra.mxu0 0.0
        %1701 = vmatprep.subr.mxu0 0.0
        %1702 = vmatpush1.xpose.msra.mxu0 0.0
        %1703 = vmatprep.subr.mxu0 0.0
        %1704 = vmatpush1.xpose.msra.mxu0 0.0
        %1705 = vmatprep.subr.mxu0 0.0
        %1706 = vmatpush1.xpose.msra.mxu0 %v1673
        %1707 = vmatprep.subr.mxu0 0.0
        %1708 = vmatpush2.xpose.msra.mxu0 0.0
        %1709 = vmatprep.subr.mxu0 0.0
        %1710 = vmatpush2.xpose.msra.mxu0 0.0
        %1711 = vmatprep.subr.mxu0 0.0
        %1712 = vmatpush2.xpose.msra.mxu0 0.0
        %1713 = vmatprep.subr.mxu0 0.0
        %1714 = vmatpush2.xpose.msra.mxu0 0.0
        %1715 = vmatprep.subr.mxu0 0.0
        %1716 = vmatpush2.xpose.msra.mxu0 0.0
        %1717 = vmatprep.subr.mxu0 0.0
        %1718 = vmatpush2.xpose.msra.mxu0 0.0
        %1719 = vmatprep.subr.mxu0 0.0
        %1720 = vmatpush2.xpose.msra.mxu0 0.0
        %1721 = vmatprep.subr.mxu0 0.0
        %1722 = vmatpush2.xpose.msra.mxu0 0.0
        %1723 = vmatprep.subr.mxu0 0.0
        %1724 = vmatpush2.xpose.msra.mxu0 0.0
        %1725 = vmatprep.subr.mxu0 0.0
        %1726 = vmatpush2.xpose.msra.mxu0 0.0
        %1727 = vmatprep.subr.mxu0 0.0
        %1728 = vmatpush2.xpose.msra.mxu0 0.0
        %1729 = vmatprep.subr.mxu0 0.0
        %1730 = vmatpush2.xpose.msra.mxu0 0.0
        %1731 = vmatprep.subr.mxu0 0.0
        %1732 = vmatpush2.xpose.msra.mxu0 0.0
        %1733 = vmatprep.subr.mxu0 0.0
        %1734 = vmatpush2.xpose.msra.mxu0 0.0
        %1735 = vmatprep.subr.mxu0 0.0
        %1736 = vmatpush2.xpose.msra.mxu0 0.0
        %1737 = vmatprep.subr.mxu0 0.0
        %1738 = vmatpush2.xpose.msra.mxu0 0.0
        %1739 = vmatprep.mubr.f32.mxu0 0.0
        %1740 = vmatmul.mubr.f32.gmra.mxu0 %v1671
        %v1741 = vpop.f32.mrf.mxu0
        %v1742 = vadd.f32 0.0, %v1741
        %v1743 = vpop.f32.mrf.mxu0
        %1744 = vdwg.mxu0
        %v1745 = vmul.f32 %v1742, 0.35355338
        %v1746 = vsel %vm1055, %v1745, -inf
        %1747 = vmax.xlane.f32.xlu0 %v1746
        %v1748 = vpop.xlane.xlu0 %1747
        %v1749 = vsub.f32 %v1745, %v1748
        %v1750 = vmul.f32 %v1749, 1.442695
        %v1751 = vpow.pop %v1750
        %v1752 = vsel %vm1055, %v1751, 0.0
        %1753 = vadd.xlane.f32.xlu0 %v1752
        %v1754 = vpop.xlane.xlu0 %1753
        %v1755 = vrcp.pop %v1754
        %v1756 = vmul.f32 %v1751, %v1755
        %1757 = vrot.lane.b32.xlu0 %v1668, 64
        %v1758 = vpop.permute.xlu0 %1757
        %v1760 = vsel %vm1069, %v1756, 0
        %v1762 = vsel %vm1073, %v1758, 0
        %1764 = vmatprep.subr.mxu0 0.0
        %1765 = vmatpush1.msra.mxu0 0.0
        %1766 = vmatprep.subr.mxu0 0.0
        %1767 = vmatpush1.msra.mxu0 0.0
        %1768 = vmatprep.subr.mxu0 0.0
        %1769 = vmatpush1.msra.mxu0 0.0
        %1770 = vmatprep.subr.mxu0 0.0
        %1771 = vmatpush1.msra.mxu0 0.0
        %1772 = vmatprep.subr.mxu0 0.0
        %1773 = vmatpush1.msra.mxu0 0.0
        %1774 = vmatprep.subr.mxu0 0.0
        %1775 = vmatpush1.msra.mxu0 0.0
        %1776 = vmatprep.subr.mxu0 0.0
        %1777 = vmatpush1.msra.mxu0 0.0
        %1778 = vmatprep.subr.mxu0 0.0
        %1779 = vmatpush1.msra.mxu0 0.0
        %1780 = vmatprep.subr.mxu0 0.0
        %1781 = vmatpush1.msra.mxu0 0.0
        %1782 = vmatprep.subr.mxu0 0.0
        %1783 = vmatpush1.msra.mxu0 0.0
        %1784 = vmatprep.subr.mxu0 0.0
        %1785 = vmatpush1.msra.mxu0 0.0
        %1786 = vmatprep.subr.mxu0 0.0
        %1787 = vmatpush1.msra.mxu0 0.0
        %1788 = vmatprep.subr.mxu0 0.0
        %1789 = vmatpush1.msra.mxu0 0.0
        %1790 = vmatprep.subr.mxu0 0.0
        %1791 = vmatpush1.msra.mxu0 0.0
        %1792 = vmatprep.subr.mxu0 0.0
        %1793 = vmatpush1.msra.mxu0 0.0
        %1794 = vmatprep.subr.mxu0 0.0
        %1795 = vmatpush1.msra.mxu0 %v1762
        %1796 = vmatprep.subr.mxu0 0.0
        %1797 = vmatpush2.msra.mxu0 0.0
        %1798 = vmatprep.subr.mxu0 0.0
        %1799 = vmatpush2.msra.mxu0 0.0
        %1800 = vmatprep.subr.mxu0 0.0
        %1801 = vmatpush2.msra.mxu0 0.0
        %1802 = vmatprep.subr.mxu0 0.0
        %1803 = vmatpush2.msra.mxu0 0.0
        %1804 = vmatprep.subr.mxu0 0.0
        %1805 = vmatpush2.msra.mxu0 0.0
        %1806 = vmatprep.subr.mxu0 0.0
        %1807 = vmatpush2.msra.mxu0 0.0
        %1808 = vmatprep.subr.mxu0 0.0
        %1809 = vmatpush2.msra.mxu0 0.0
        %1810 = vmatprep.subr.mxu0 0.0
        %1811 = vmatpush2.msra.mxu0 0.0
        %1812 = vmatprep.subr.mxu0 0.0
        %1813 = vmatpush2.msra.mxu0 0.0
        %1814 = vmatprep.subr.mxu0 0.0
        %1815 = vmatpush2.msra.mxu0 0.0
        %1816 = vmatprep.subr.mxu0 0.0
        %1817 = vmatpush2.msra.mxu0 0.0
        %1818 = vmatprep.subr.mxu0 0.0
        %1819 = vmatpush2.msra.mxu0 0.0
        %1820 = vmatprep.subr.mxu0 0.0
        %1821 = vmatpush2.msra.mxu0 0.0
        %1822 = vmatprep.subr.mxu0 0.0
        %1823 = vmatpush2.msra.mxu0 0.0
        %1824 = vmatprep.subr.mxu0 0.0
        %1825 = vmatpush2.msra.mxu0 0.0
        %1826 = vmatprep.subr.mxu0 0.0
        %1827 = vmatpush2.msra.mxu0 0.0
        %1828 = vmatprep.mubr.f32.mxu0 0.0
        %1829 = vmatmul.mubr.f32.gmra.mxu0 %v1760
        %v1830 = vpop.f32.mrf.mxu0
        %v1831 = vadd.f32 0.0, %v1830
        %v1832 = vpop.f32.mrf.mxu0
        %1833 = vdwg.mxu0
        %1834 = vrot.lane.b32.xlu0 %v1668, 120
        %v1835 = vpop.permute.xlu0 %1834
        %1836 = vrot.lane.b32.xlu0 %v1668, 88
        %v1837 = vpop.permute.xlu0 %1836
        %v1838 = vsel %vm979, %v1835, 0
        %v1840 = vsel %vm979, %v1837, 0
        %1842 = vmatprep.subr.mxu0 0.0
        %1843 = vmatpush1.xpose.msra.mxu0 0.0
        %1844 = vmatprep.subr.mxu0 0.0
        %1845 = vmatpush1.xpose.msra.mxu0 0.0
        %1846 = vmatprep.subr.mxu0 0.0
        %1847 = vmatpush1.xpose.msra.mxu0 0.0
        %1848 = vmatprep.subr.mxu0 0.0
        %1849 = vmatpush1.xpose.msra.mxu0 0.0
        %1850 = vmatprep.subr.mxu0 0.0
        %1851 = vmatpush1.xpose.msra.mxu0 0.0
        %1852 = vmatprep.subr.mxu0 0.0
        %1853 = vmatpush1.xpose.msra.mxu0 0.0
        %1854 = vmatprep.subr.mxu0 0.0
        %1855 = vmatpush1.xpose.msra.mxu0 0.0
        %1856 = vmatprep.subr.mxu0 0.0
        %1857 = vmatpush1.xpose.msra.mxu0 0.0
        %1858 = vmatprep.subr.mxu0 0.0
        %1859 = vmatpush1.xpose.msra.mxu0 0.0
        %1860 = vmatprep.subr.mxu0 0.0
        %1861 = vmatpush1.xpose.msra.mxu0 0.0
        %1862 = vmatprep.subr.mxu0 0.0
        %1863 = vmatpush1.xpose.msra.mxu0 0.0
        %1864 = vmatprep.subr.mxu0 0.0
        %1865 = vmatpush1.xpose.msra.mxu0 0.0
        %1866 = vmatprep.subr.mxu0 0.0
        %1867 = vmatpush1.xpose.msra.mxu0 0.0
        %1868 = vmatprep.subr.mxu0 0.0
        %1869 = vmatpush1.xpose.msra.mxu0 0.0
        %1870 = vmatprep.subr.mxu0 0.0
        %1871 = vmatpush1.xpose.msra.mxu0 0.0
        %1872 = vmatprep.subr.mxu0 0.0
        %1873 = vmatpush1.xpose.msra.mxu0 %v1840
        %1874 = vmatprep.subr.mxu0 0.0
        %1875 = vmatpush2.xpose.msra.mxu0 0.0
        %1876 = vmatprep.subr.mxu0 0.0
        %1877 = vmatpush2.xpose.msra.mxu0 0.0
        %1878 = vmatprep.subr.mxu0 0.0
        %1879 = vmatpush2.xpose.msra.mxu0 0.0
        %1880 = vmatprep.subr.mxu0 0.0
        %1881 = vmatpush2.xpose.msra.mxu0 0.0
        %1882 = vmatprep.subr.mxu0 0.0
        %1883 = vmatpush2.xpose.msra.mxu0 0.0
        %1884 = vmatprep.subr.mxu0 0.0
        %1885 = vmatpush2.xpose.msra.mxu0 0.0
        %1886 = vmatprep.subr.mxu0 0.0
        %1887 = vmatpush2.xpose.msra.mxu0 0.0
        %1888 = vmatprep.subr.mxu0 0.0
        %1889 = vmatpush2.xpose.msra.mxu0 0.0
        %1890 = vmatprep.subr.mxu0 0.0
        %1891 = vmatpush2.xpose.msra.mxu0 0.0
        %1892 = vmatprep.subr.mxu0 0.0
        %1893 = vmatpush2.xpose.msra.mxu0 0.0
        %1894 = vmatprep.subr.mxu0 0.0
        %1895 = vmatpush2.xpose.msra.mxu0 0.0
        %1896 = vmatprep.subr.mxu0 0.0
        %1897 = vmatpush2.xpose.msra.mxu0 0.0
        %1898 = vmatprep.subr.mxu0 0.0
        %1899 = vmatpush2.xpose.msra.mxu0 0.0
        %1900 = vmatprep.subr.mxu0 0.0
        %1901 = vmatpush2.xpose.msra.mxu0 0.0
        %1902 = vmatprep.subr.mxu0 0.0
        %1903 = vmatpush2.xpose.msra.mxu0 0.0
        %1904 = vmatprep.subr.mxu0 0.0
        %1905 = vmatpush2.xpose.msra.mxu0 0.0
        %1906 = vmatprep.mubr.f32.mxu0 0.0
        %1907 = vmatmul.mubr.f32.gmra.mxu0 %v1838
        %v1908 = vpop.f32.mrf.mxu0
        %v1909 = vadd.f32 0.0, %v1908
        %v1910 = vpop.f32.mrf.mxu0
        %1911 = vdwg.mxu0
        %v1912 = vmul.f32 %v1909, 0.35355338
        %v1913 = vsel %vm1055, %v1912, -inf
        %1914 = vmax.xlane.f32.xlu0 %v1913
        %v1915 = vpop.xlane.xlu0 %1914
        %v1916 = vsub.f32 %v1912, %v1915
        %v1917 = vmul.f32 %v1916, 1.442695
        %v1918 = vpow.pop %v1917
        %v1919 = vsel %vm1055, %v1918, 0.0
        %1920 = vadd.xlane.f32.xlu0 %v1919
        %v1921 = vpop.xlane.xlu0 %1920
        %v1922 = vrcp.pop %v1921
        %v1923 = vmul.f32 %v1918, %v1922
        %1924 = vrot.lane.b32.xlu0 %v1668, 56
        %v1925 = vpop.permute.xlu0 %1924
        %v1927 = vsel %vm1069, %v1923, 0
        %v1929 = vsel %vm1073, %v1925, 0
        %1931 = vmatprep.subr.mxu0 0.0
        %1932 = vmatpush1.msra.mxu0 0.0
        %1933 = vmatprep.subr.mxu0 0.0
        %1934 = vmatpush1.msra.mxu0 0.0
        %1935 = vmatprep.subr.mxu0 0.0
        %1936 = vmatpush1.msra.mxu0 0.0
        %1937 = vmatprep.subr.mxu0 0.0
        %1938 = vmatpush1.msra.mxu0 0.0
        %1939 = vmatprep.subr.mxu0 0.0
        %1940 = vmatpush1.msra.mxu0 0.0
        %1941 = vmatprep.subr.mxu0 0.0
        %1942 = vmatpush1.msra.mxu0 0.0
        %1943 = vmatprep.subr.mxu0 0.0
        %1944 = vmatpush1.msra.mxu0 0.0
        %1945 = vmatprep.subr.mxu0 0.0
        %1946 = vmatpush1.msra.mxu0 0.0
        %1947 = vmatprep.subr.mxu0 0.0
        %1948 = vmatpush1.msra.mxu0 0.0
        %1949 = vmatprep.subr.mxu0 0.0
        %1950 = vmatpush1.msra.mxu0 0.0
        %1951 = vmatprep.subr.mxu0 0.0
        %1952 = vmatpush1.msra.mxu0 0.0
        %1953 = vmatprep.subr.mxu0 0.0
        %1954 = vmatpush1.msra.mxu0 0.0
        %1955 = vmatprep.subr.mxu0 0.0
        %1956 = vmatpush1.msra.mxu0 0.0
        %1957 = vmatprep.subr.mxu0 0.0
        %1958 = vmatpush1.msra.mxu0 0.0
        %1959 = vmatprep.subr.mxu0 0.0
        %1960 = vmatpush1.msra.mxu0 0.0
        %1961 = vmatprep.subr.mxu0 0.0
        %1962 = vmatpush1.msra.mxu0 %v1929
        %1963 = vmatprep.subr.mxu0 0.0
        %1964 = vmatpush2.msra.mxu0 0.0
        %1965 = vmatprep.subr.mxu0 0.0
        %1966 = vmatpush2.msra.mxu0 0.0
        %1967 = vmatprep.subr.mxu0 0.0
        %1968 = vmatpush2.msra.mxu0 0.0
        %1969 = vmatprep.subr.mxu0 0.0
        %1970 = vmatpush2.msra.mxu0 0.0
        %1971 = vmatprep.subr.mxu0 0.0
        %1972 = vmatpush2.msra.mxu0 0.0
        %1973 = vmatprep.subr.mxu0 0.0
        %1974 = vmatpush2.msra.mxu0 0.0
        %1975 = vmatprep.subr.mxu0 0.0
        %1976 = vmatpush2.msra.mxu0 0.0
        %1977 = vmatprep.subr.mxu0 0.0
        %1978 = vmatpush2.msra.mxu0 0.0
        %1979 = vmatprep.subr.mxu0 0.0
        %1980 = vmatpush2.msra.mxu0 0.0
        %1981 = vmatprep.subr.mxu0 0.0
        %1982 = vmatpush2.msra.mxu0 0.0
        %1983 = vmatprep.subr.mxu0 0.0
        %1984 = vmatpush2.msra.mxu0 0.0
        %1985 = vmatprep.subr.mxu0 0.0
        %1986 = vmatpush2.msra.mxu0 0.0
        %1987 = vmatprep.subr.mxu0 0.0
        %1988 = vmatpush2.msra.mxu0 0.0
        %1989 = vmatprep.subr.mxu0 0.0
        %1990 = vmatpush2.msra.mxu0 0.0
        %1991 = vmatprep.subr.mxu0 0.0
        %1992 = vmatpush2.msra.mxu0 0.0
        %1993 = vmatprep.subr.mxu0 0.0
        %1994 = vmatpush2.msra.mxu0 0.0
        %1995 = vmatprep.mubr.f32.mxu0 0.0
        %1996 = vmatmul.mubr.f32.gmra.mxu0 %v1927
        %v1997 = vpop.f32.mrf.mxu0
        %v1998 = vadd.f32 0.0, %v1997
        %v1999 = vpop.f32.mrf.mxu0
        %2000 = vdwg.mxu0
        %2001 = vrot.lane.b32.xlu0 %v1668, 112
        %v2002 = vpop.permute.xlu0 %2001
        %2003 = vrot.lane.b32.xlu0 %v1668, 80
        %v2004 = vpop.permute.xlu0 %2003
        %v2005 = vsel %vm979, %v2002, 0
        %v2007 = vsel %vm979, %v2004, 0
        %2009 = vmatprep.subr.mxu0 0.0
        %2010 = vmatpush1.xpose.msra.mxu0 0.0
        %2011 = vmatprep.subr.mxu0 0.0
        %2012 = vmatpush1.xpose.msra.mxu0 0.0
        %2013 = vmatprep.subr.mxu0 0.0
        %2014 = vmatpush1.xpose.msra.mxu0 0.0
        %2015 = vmatprep.subr.mxu0 0.0
        %2016 = vmatpush1.xpose.msra.mxu0 0.0
        %2017 = vmatprep.subr.mxu0 0.0
        %2018 = vmatpush1.xpose.msra.mxu0 0.0
        %2019 = vmatprep.subr.mxu0 0.0
        %2020 = vmatpush1.xpose.msra.mxu0 0.0
        %2021 = vmatprep.subr.mxu0 0.0
        %2022 = vmatpush1.xpose.msra.mxu0 0.0
        %2023 = vmatprep.subr.mxu0 0.0
        %2024 = vmatpush1.xpose.msra.mxu0 0.0
        %2025 = vmatprep.subr.mxu0 0.0
        %2026 = vmatpush1.xpose.msra.mxu0 0.0
        %2027 = vmatprep.subr.mxu0 0.0
        %2028 = vmatpush1.xpose.msra.mxu0 0.0
        %2029 = vmatprep.subr.mxu0 0.0
        %2030 = vmatpush1.xpose.msra.mxu0 0.0
        %2031 = vmatprep.subr.mxu0 0.0
        %2032 = vmatpush1.xpose.msra.mxu0 0.0
        %2033 = vmatprep.subr.mxu0 0.0
        %2034 = vmatpush1.xpose.msra.mxu0 0.0
        %2035 = vmatprep.subr.mxu0 0.0
        %2036 = vmatpush1.xpose.msra.mxu0 0.0
        %2037 = vmatprep.subr.mxu0 0.0
        %2038 = vmatpush1.xpose.msra.mxu0 0.0
        %2039 = vmatprep.subr.mxu0 0.0
        %2040 = vmatpush1.xpose.msra.mxu0 %v2007
        %2041 = vmatprep.subr.mxu0 0.0
        %2042 = vmatpush2.xpose.msra.mxu0 0.0
        %2043 = vmatprep.subr.mxu0 0.0
        %2044 = vmatpush2.xpose.msra.mxu0 0.0
        %2045 = vmatprep.subr.mxu0 0.0
        %2046 = vmatpush2.xpose.msra.mxu0 0.0
        %2047 = vmatprep.subr.mxu0 0.0
        %2048 = vmatpush2.xpose.msra.mxu0 0.0
        %2049 = vmatprep.subr.mxu0 0.0
        %2050 = vmatpush2.xpose.msra.mxu0 0.0
        %2051 = vmatprep.subr.mxu0 0.0
        %2052 = vmatpush2.xpose.msra.mxu0 0.0
        %2053 = vmatprep.subr.mxu0 0.0
        %2054 = vmatpush2.xpose.msra.mxu0 0.0
        %2055 = vmatprep.subr.mxu0 0.0
        %2056 = vmatpush2.xpose.msra.mxu0 0.0
        %2057 = vmatprep.subr.mxu0 0.0
        %2058 = vmatpush2.xpose.msra.mxu0 0.0
        %2059 = vmatprep.subr.mxu0 0.0
        %2060 = vmatpush2.xpose.msra.mxu0 0.0
        %2061 = vmatprep.subr.mxu0 0.0
        %2062 = vmatpush2.xpose.msra.mxu0 0.0
        %2063 = vmatprep.subr.mxu0 0.0
        %2064 = vmatpush2.xpose.msra.mxu0 0.0
        %2065 = vmatprep.subr.mxu0 0.0
        %2066 = vmatpush2.xpose.msra.mxu0 0.0
        %2067 = vmatprep.subr.mxu0 0.0
        %2068 = vmatpush2.xpose.msra.mxu0 0.0
        %2069 = vmatprep.subr.mxu0 0.0
        %2070 = vmatpush2.xpose.msra.mxu0 0.0
        %2071 = vmatprep.subr.mxu0 0.0
        %2072 = vmatpush2.xpose.msra.mxu0 0.0
        %2073 = vmatprep.mubr.f32.mxu0 0.0
        %2074 = vmatmul.mubr.f32.gmra.mxu0 %v2005
        %v2075 = vpop.f32.mrf.mxu0
        %v2076 = vadd.f32 0.0, %v2075
        %v2077 = vpop.f32.mrf.mxu0
        %2078 = vdwg.mxu0
        %v2079 = vmul.f32 %v2076, 0.35355338
        %v2080 = vsel %vm1055, %v2079, -inf
        %2081 = vmax.xlane.f32.xlu0 %v2080
        %v2082 = vpop.xlane.xlu0 %2081
        %v2083 = vsub.f32 %v2079, %v2082
        %v2084 = vmul.f32 %v2083, 1.442695
        %v2085 = vpow.pop %v2084
        %v2086 = vsel %vm1055, %v2085, 0.0
        %2087 = vadd.xlane.f32.xlu0 %v2086
        %v2088 = vpop.xlane.xlu0 %2087
        %v2089 = vrcp.pop %v2088
        %v2090 = vmul.f32 %v2085, %v2089
        %2091 = vrot.lane.b32.xlu0 %v1668, 48
        %v2092 = vpop.permute.xlu0 %2091
        %v2094 = vsel %vm1069, %v2090, 0
        %v2096 = vsel %vm1073, %v2092, 0
        %2098 = vmatprep.subr.mxu0 0.0
        %2099 = vmatpush1.msra.mxu0 0.0
        %2100 = vmatprep.subr.mxu0 0.0
        %2101 = vmatpush1.msra.mxu0 0.0
        %2102 = vmatprep.subr.mxu0 0.0
        %2103 = vmatpush1.msra.mxu0 0.0
        %2104 = vmatprep.subr.mxu0 0.0
        %2105 = vmatpush1.msra.mxu0 0.0
        %2106 = vmatprep.subr.mxu0 0.0
        %2107 = vmatpush1.msra.mxu0 0.0
        %2108 = vmatprep.subr.mxu0 0.0
        %2109 = vmatpush1.msra.mxu0 0.0
        %2110 = vmatprep.subr.mxu0 0.0
        %2111 = vmatpush1.msra.mxu0 0.0
        %2112 = vmatprep.subr.mxu0 0.0
        %2113 = vmatpush1.msra.mxu0 0.0
        %2114 = vmatprep.subr.mxu0 0.0
        %2115 = vmatpush1.msra.mxu0 0.0
        %2116 = vmatprep.subr.mxu0 0.0
        %2117 = vmatpush1.msra.mxu0 0.0
        %2118 = vmatprep.subr.mxu0 0.0
        %2119 = vmatpush1.msra.mxu0 0.0
        %2120 = vmatprep.subr.mxu0 0.0
        %2121 = vmatpush1.msra.mxu0 0.0
        %2122 = vmatprep.subr.mxu0 0.0
        %2123 = vmatpush1.msra.mxu0 0.0
        %2124 = vmatprep.subr.mxu0 0.0
        %2125 = vmatpush1.msra.mxu0 0.0
        %2126 = vmatprep.subr.mxu0 0.0
        %2127 = vmatpush1.msra.mxu0 0.0
        %2128 = vmatprep.subr.mxu0 0.0
        %2129 = vmatpush1.msra.mxu0 %v2096
        %2130 = vmatprep.subr.mxu0 0.0
        %2131 = vmatpush2.msra.mxu0 0.0
        %2132 = vmatprep.subr.mxu0 0.0
        %2133 = vmatpush2.msra.mxu0 0.0
        %2134 = vmatprep.subr.mxu0 0.0
        %2135 = vmatpush2.msra.mxu0 0.0
        %2136 = vmatprep.subr.mxu0 0.0
        %2137 = vmatpush2.msra.mxu0 0.0
        %2138 = vmatprep.subr.mxu0 0.0
        %2139 = vmatpush2.msra.mxu0 0.0
        %2140 = vmatprep.subr.mxu0 0.0
        %2141 = vmatpush2.msra.mxu0 0.0
        %2142 = vmatprep.subr.mxu0 0.0
        %2143 = vmatpush2.msra.mxu0 0.0
        %2144 = vmatprep.subr.mxu0 0.0
        %2145 = vmatpush2.msra.mxu0 0.0
        %2146 = vmatprep.subr.mxu0 0.0
        %2147 = vmatpush2.msra.mxu0 0.0
        %2148 = vmatprep.subr.mxu0 0.0
        %2149 = vmatpush2.msra.mxu0 0.0
        %2150 = vmatprep.subr.mxu0 0.0
        %2151 = vmatpush2.msra.mxu0 0.0
        %2152 = vmatprep.subr.mxu0 0.0
        %2153 = vmatpush2.msra.mxu0 0.0
        %2154 = vmatprep.subr.mxu0 0.0
        %2155 = vmatpush2.msra.mxu0 0.0
        %2156 = vmatprep.subr.mxu0 0.0
        %2157 = vmatpush2.msra.mxu0 0.0
        %2158 = vmatprep.subr.mxu0 0.0
        %2159 = vmatpush2.msra.mxu0 0.0
        %2160 = vmatprep.subr.mxu0 0.0
        %2161 = vmatpush2.msra.mxu0 0.0
        %2162 = vmatprep.mubr.f32.mxu0 0.0
        %2163 = vmatmul.mubr.f32.gmra.mxu0 %v2094
        %v2164 = vpop.f32.mrf.mxu0
        %v2165 = vadd.f32 0.0, %v2164
        %v2166 = vpop.f32.mrf.mxu0
        %2167 = vdwg.mxu0
        %2168 = vrot.lane.b32.xlu0 %v1668, 104
        %v2169 = vpop.permute.xlu0 %2168
        %2170 = vrot.lane.b32.xlu0 %v1668, 72
        %v2171 = vpop.permute.xlu0 %2170
        %v2172 = vsel %vm979, %v2169, 0
        %v2174 = vsel %vm979, %v2171, 0
        %2176 = vmatprep.subr.mxu0 0.0
        %2177 = vmatpush1.xpose.msra.mxu0 0.0
        %2178 = vmatprep.subr.mxu0 0.0
        %2179 = vmatpush1.xpose.msra.mxu0 0.0
        %2180 = vmatprep.subr.mxu0 0.0
        %2181 = vmatpush1.xpose.msra.mxu0 0.0
        %2182 = vmatprep.subr.mxu0 0.0
        %2183 = vmatpush1.xpose.msra.mxu0 0.0
        %2184 = vmatprep.subr.mxu0 0.0
        %2185 = vmatpush1.xpose.msra.mxu0 0.0
        %2186 = vmatprep.subr.mxu0 0.0
        %2187 = vmatpush1.xpose.msra.mxu0 0.0
        %2188 = vmatprep.subr.mxu0 0.0
        %2189 = vmatpush1.xpose.msra.mxu0 0.0
        %2190 = vmatprep.subr.mxu0 0.0
        %2191 = vmatpush1.xpose.msra.mxu0 0.0
        %2192 = vmatprep.subr.mxu0 0.0
        %2193 = vmatpush1.xpose.msra.mxu0 0.0
        %2194 = vmatprep.subr.mxu0 0.0
        %2195 = vmatpush1.xpose.msra.mxu0 0.0
        %2196 = vmatprep.subr.mxu0 0.0
        %2197 = vmatpush1.xpose.msra.mxu0 0.0
        %2198 = vmatprep.subr.mxu0 0.0
        %2199 = vmatpush1.xpose.msra.mxu0 0.0
        %2200 = vmatprep.subr.mxu0 0.0
        %2201 = vmatpush1.xpose.msra.mxu0 0.0
        %2202 = vmatprep.subr.mxu0 0.0
        %2203 = vmatpush1.xpose.msra.mxu0 0.0
        %2204 = vmatprep.subr.mxu0 0.0
        %2205 = vmatpush1.xpose.msra.mxu0 0.0
        %2206 = vmatprep.subr.mxu0 0.0
        %2207 = vmatpush1.xpose.msra.mxu0 %v2174
        %2208 = vmatprep.subr.mxu0 0.0
        %2209 = vmatpush2.xpose.msra.mxu0 0.0
        %2210 = vmatprep.subr.mxu0 0.0
        %2211 = vmatpush2.xpose.msra.mxu0 0.0
        %2212 = vmatprep.subr.mxu0 0.0
        %2213 = vmatpush2.xpose.msra.mxu0 0.0
        %2214 = vmatprep.subr.mxu0 0.0
        %2215 = vmatpush2.xpose.msra.mxu0 0.0
        %2216 = vmatprep.subr.mxu0 0.0
        %2217 = vmatpush2.xpose.msra.mxu0 0.0
        %2218 = vmatprep.subr.mxu0 0.0
        %2219 = vmatpush2.xpose.msra.mxu0 0.0
        %2220 = vmatprep.subr.mxu0 0.0
        %2221 = vmatpush2.xpose.msra.mxu0 0.0
        %2222 = vmatprep.subr.mxu0 0.0
        %2223 = vmatpush2.xpose.msra.mxu0 0.0
        %2224 = vmatprep.subr.mxu0 0.0
        %2225 = vmatpush2.xpose.msra.mxu0 0.0
        %2226 = vmatprep.subr.mxu0 0.0
        %2227 = vmatpush2.xpose.msra.mxu0 0.0
        %2228 = vmatprep.subr.mxu0 0.0
        %2229 = vmatpush2.xpose.msra.mxu0 0.0
        %2230 = vmatprep.subr.mxu0 0.0
        %2231 = vmatpush2.xpose.msra.mxu0 0.0
        %2232 = vmatprep.subr.mxu0 0.0
        %2233 = vmatpush2.xpose.msra.mxu0 0.0
        %2234 = vmatprep.subr.mxu0 0.0
        %2235 = vmatpush2.xpose.msra.mxu0 0.0
        %2236 = vmatprep.subr.mxu0 0.0
        %2237 = vmatpush2.xpose.msra.mxu0 0.0
        %2238 = vmatprep.subr.mxu0 0.0
        %2239 = vmatpush2.xpose.msra.mxu0 0.0
        %2240 = vmatprep.mubr.f32.mxu0 0.0
        %2241 = vmatmul.mubr.f32.gmra.mxu0 %v2172
        %v2242 = vpop.f32.mrf.mxu0
        %v2243 = vadd.f32 0.0, %v2242
        %v2244 = vpop.f32.mrf.mxu0
        %2245 = vdwg.mxu0
        %v2246 = vmul.f32 %v2243, 0.35355338
        %v2247 = vsel %vm1055, %v2246, -inf
        %2248 = vmax.xlane.f32.xlu0 %v2247
        %v2249 = vpop.xlane.xlu0 %2248
        %v2250 = vsub.f32 %v2246, %v2249
        %v2251 = vmul.f32 %v2250, 1.442695
        %v2252 = vpow.pop %v2251
        %v2253 = vsel %vm1055, %v2252, 0.0
        %2254 = vadd.xlane.f32.xlu0 %v2253
        %v2255 = vpop.xlane.xlu0 %2254
        %v2256 = vrcp.pop %v2255
        %v2257 = vmul.f32 %v2252, %v2256
        %2258 = vrot.lane.b32.xlu0 %v1668, 40
        %v2259 = vpop.permute.xlu0 %2258
        %v2261 = vsel %vm1069, %v2257, 0
        %v2263 = vsel %vm1073, %v2259, 0
        %2265 = vmatprep.subr.mxu0 0.0
        %2266 = vmatpush1.msra.mxu0 0.0
        %2267 = vmatprep.subr.mxu0 0.0
        %2268 = vmatpush1.msra.mxu0 0.0
        %2269 = vmatprep.subr.mxu0 0.0
        %2270 = vmatpush1.msra.mxu0 0.0
        %2271 = vmatprep.subr.mxu0 0.0
        %2272 = vmatpush1.msra.mxu0 0.0
        %2273 = vmatprep.subr.mxu0 0.0
        %2274 = vmatpush1.msra.mxu0 0.0
        %2275 = vmatprep.subr.mxu0 0.0
        %2276 = vmatpush1.msra.mxu0 0.0
        %2277 = vmatprep.subr.mxu0 0.0
        %2278 = vmatpush1.msra.mxu0 0.0
        %2279 = vmatprep.subr.mxu0 0.0
        %2280 = vmatpush1.msra.mxu0 0.0
        %2281 = vmatprep.subr.mxu0 0.0
        %2282 = vmatpush1.msra.mxu0 0.0
        %2283 = vmatprep.subr.mxu0 0.0
        %2284 = vmatpush1.msra.mxu0 0.0
        %2285 = vmatprep.subr.mxu0 0.0
        %2286 = vmatpush1.msra.mxu0 0.0
        %2287 = vmatprep.subr.mxu0 0.0
        %2288 = vmatpush1.msra.mxu0 0.0
        %2289 = vmatprep.subr.mxu0 0.0
        %2290 = vmatpush1.msra.mxu0 0.0
        %2291 = vmatprep.subr.mxu0 0.0
        %2292 = vmatpush1.msra.mxu0 0.0
        %2293 = vmatprep.subr.mxu0 0.0
        %2294 = vmatpush1.msra.mxu0 0.0
        %2295 = vmatprep.subr.mxu0 0.0
        %2296 = vmatpush1.msra.mxu0 %v2263
        %2297 = vmatprep.subr.mxu0 0.0
        %2298 = vmatpush2.msra.mxu0 0.0
        %2299 = vmatprep.subr.mxu0 0.0
        %2300 = vmatpush2.msra.mxu0 0.0
        %2301 = vmatprep.subr.mxu0 0.0
        %2302 = vmatpush2.msra.mxu0 0.0
        %2303 = vmatprep.subr.mxu0 0.0
        %2304 = vmatpush2.msra.mxu0 0.0
        %2305 = vmatprep.subr.mxu0 0.0
        %2306 = vmatpush2.msra.mxu0 0.0
        %2307 = vmatprep.subr.mxu0 0.0
        %2308 = vmatpush2.msra.mxu0 0.0
        %2309 = vmatprep.subr.mxu0 0.0
        %2310 = vmatpush2.msra.mxu0 0.0
        %2311 = vmatprep.subr.mxu0 0.0
        %2312 = vmatpush2.msra.mxu0 0.0
        %2313 = vmatprep.subr.mxu0 0.0
        %2314 = vmatpush2.msra.mxu0 0.0
        %2315 = vmatprep.subr.mxu0 0.0
        %2316 = vmatpush2.msra.mxu0 0.0
        %2317 = vmatprep.subr.mxu0 0.0
        %2318 = vmatpush2.msra.mxu0 0.0
        %2319 = vmatprep.subr.mxu0 0.0
        %2320 = vmatpush2.msra.mxu0 0.0
        %2321 = vmatprep.subr.mxu0 0.0
        %2322 = vmatpush2.msra.mxu0 0.0
        %2323 = vmatprep.subr.mxu0 0.0
        %2324 = vmatpush2.msra.mxu0 0.0
        %2325 = vmatprep.subr.mxu0 0.0
        %2326 = vmatpush2.msra.mxu0 0.0
        %2327 = vmatprep.subr.mxu0 0.0
        %2328 = vmatpush2.msra.mxu0 0.0
        %2329 = vmatprep.mubr.f32.mxu0 0.0
        %2330 = vmatmul.mubr.f32.gmra.mxu0 %v2261
        %v2331 = vpop.f32.mrf.mxu0
        %v2332 = vadd.f32 0.0, %v2331
        %v2333 = vpop.f32.mrf.mxu0
        %2334 = vdwg.mxu0
        %2336 = vrot.lane.b32.xlu0 %v1998, 8
        %v2337 = vpop.permute.xlu0 %2336
        %2340 = vrot.lane.b32.xlu0 %v2165, 16
        %v2341 = vpop.permute.xlu0 %2340
        %2344 = vrot.lane.b32.xlu0 %v2332, 24
        %v2345 = vpop.permute.xlu0 %2344
        %v2347 = vsel %vm979, %v1831, %v2337
        %v2348 = vsel %vm1660, %v2347, %v2341
        %v2349 = vsel %vm1662, %v2348, %v2345
        %v2351 = vrot.slane %v2349, 3
        %v2353 = vsel %vm1073, %v1663, %v2351
        %v2354 = vld [vmem:[%s681] sm:$0xff]
        %v2355 = vld [vmem:[%s681 + $0x8] sm:$0xff]
        %v2356 = vld [vmem:[%s681 + $0x10] sm:$0xff]
        %v2357 = vld [vmem:[%s681 + $0x18] sm:$0xff]
        %v2358 = vld [vmem:[%s684] sm:$0x1]
        %v2360 = vlaneseq
        %v2361 = vshrl.u32 %v2360, 7
        %v2362 = vsub.s32 0, %v2361
        %v2363 = vrot.slane %v2358, %v2362
        %v2366 = vsel %vm839, %v2353, 0
        %v2368 = vsel %vm839, %v2351, 0
        %2370 = vmatprep.subr.mxu0 0.0
        %2371 = vmatpush1.msra.mxu0 0.0
        %2372 = vmatprep.subr.mxu0 0.0
        %2373 = vmatpush1.msra.mxu0 0.0
        %2374 = vmatprep.subr.mxu0 0.0
        %2375 = vmatpush1.msra.mxu0 0.0
        %2376 = vmatprep.subr.mxu0 0.0
        %2377 = vmatpush1.msra.mxu0 0.0
        %2378 = vmatprep.subr.mxu0 0.0
        %2379 = vmatpush1.msra.mxu0 0.0
        %2380 = vmatprep.subr.mxu0 0.0
        %2381 = vmatpush1.msra.mxu0 0.0
        %2382 = vmatprep.subr.mxu0 0.0
        %2383 = vmatpush1.msra.mxu0 0.0
        %2384 = vmatprep.subr.mxu0 0.0
        %2385 = vmatpush1.msra.mxu0 0.0
        %2386 = vmatprep.subr.mxu0 0.0
        %2387 = vmatpush1.msra.mxu0 0.0
        %2388 = vmatprep.subr.mxu0 0.0
        %2389 = vmatpush1.msra.mxu0 0.0
        %2390 = vmatprep.subr.mxu0 0.0
        %2391 = vmatpush1.msra.mxu0 0.0
        %2392 = vmatprep.subr.mxu0 0.0
        %2393 = vmatpush1.msra.mxu0 0.0
        %2394 = vmatprep.subr.mxu0 0.0
        %2395 = vmatpush1.msra.mxu0 %v2357
        %2396 = vmatprep.subr.mxu0 0.0
        %2397 = vmatpush1.msra.mxu0 %v2356
        %2398 = vmatprep.subr.mxu0 0.0
        %2399 = vmatpush1.msra.mxu0 %v2355
        %2400 = vmatprep.subr.mxu0 0.0
        %2401 = vmatpush1.msra.mxu0 %v2354
        %2402 = vmatprep.subr.mxu0 0.0
        %2403 = vmatpush2.msra.mxu0 0.0
        %2404 = vmatprep.subr.mxu0 0.0
        %2405 = vmatpush2.msra.mxu0 0.0
        %2406 = vmatprep.subr.mxu0 0.0
        %2407 = vmatpush2.msra.mxu0 0.0
        %2408 = vmatprep.subr.mxu0 0.0
        %2409 = vmatpush2.msra.mxu0 0.0
        %2410 = vmatprep.subr.mxu0 0.0
        %2411 = vmatpush2.msra.mxu0 0.0
        %2412 = vmatprep.subr.mxu0 0.0
        %2413 = vmatpush2.msra.mxu0 0.0
        %2414 = vmatprep.subr.mxu0 0.0
        %2415 = vmatpush2.msra.mxu0 0.0
        %2416 = vmatprep.subr.mxu0 0.0
        %2417 = vmatpush2.msra.mxu0 0.0
        %2418 = vmatprep.subr.mxu0 0.0
        %2419 = vmatpush2.msra.mxu0 0.0
        %2420 = vmatprep.subr.mxu0 0.0
        %2421 = vmatpush2.msra.mxu0 0.0
        %2422 = vmatprep.subr.mxu0 0.0
        %2423 = vmatpush2.msra.mxu0 0.0
        %2424 = vmatprep.subr.mxu0 0.0
        %2425 = vmatpush2.msra.mxu0 0.0
        %2426 = vmatprep.subr.mxu0 0.0
        %2427 = vmatpush2.msra.mxu0 0.0
        %2428 = vmatprep.subr.mxu0 0.0
        %2429 = vmatpush2.msra.mxu0 0.0
        %2430 = vmatprep.subr.mxu0 0.0
        %2431 = vmatpush2.msra.mxu0 0.0
        %2432 = vmatprep.subr.mxu0 0.0
        %2433 = vmatpush2.msra.mxu0 0.0
        %2434 = vmatprep.mubr.f32.mxu0 0.0
        %2435 = vmatmul.mubr.f32.gmra.mxu0 %v2366
        %v2436 = vpop.f32.mrf.mxu0
        %v2437 = vadd.f32 %v2363, %v2436
        %v2438 = vpop.f32.mrf.mxu0
        %2439 = vmatprep.mubr.f32.mxu0 0.0
        %2440 = vmatmul.mubr.f32.gmra.mxu0 %v2368
        %v2441 = vpop.f32.mrf.mxu0
        %v2442 = vadd.f32 %v2363, %v2441
        %v2443 = vpop.f32.mrf.mxu0
        %2444 = vdwg.mxu0
        %v2445 = vadd.f32 %v835, %v2437
        %v2446 = vadd.f32 %v836, %v2442
        %v2447 = vld [vmem:[%s687] sm:$0x1]
        %v2448 = vld [vmem:[%s690] sm:$0x1]
        %v2449 = vsel %vm839, %v2445, 0.0
        %2450 = vadd.xlane.f32.xlu0 %v2449
        %v2451 = vpop.xlane.xlu0 %2450
        %v2452 = vsel %vm843, %v2446, 0.0
        %2453 = vadd.xlane.f32.xlu0 %v2452
        %v2454 = vpop.xlane.xlu0 %2453
        %v2455 = vmul.f32 %v2451, %v847
        %v2456 = vmul.f32 %v2454, %v847
        %v2457 = vsub.f32 %v2445, %v2455
        %v2458 = vsub.f32 %v2446, %v2456
        %v2459 = vmul.f32 %v2457, %v2457
        %v2460 = vmul.f32 %v2458, %v2458
        %v2461 = vsel %vm839, %v2459, 0.0
        %2462 = vadd.xlane.f32.xlu0 %v2461
        %v2463 = vpop.xlane.xlu0 %2462
        %v2464 = vsel %vm843, %v2460, 0.0
        %2465 = vadd.xlane.f32.xlu0 %v2464
        %v2466 = vpop.xlane.xlu0 %2465
        %v2467 = vmul.f32 %v2463, %v847
        %v2468 = vmul.f32 %v2466, %v847
        %v2469 = vadd.f32 %v2467, 1e-06
        %v2470 = vadd.f32 %v2468, 1e-06
        %v2471 = vrsqrt.pop %v2469
        %v2472 = vrsqrt.pop %v2470
        %v2473 = vmul.f32 %v2457, %v2471
        %v2474 = vmul.f32 %v2458, %v2472
        %v2476 = vlaneseq
        %v2477 = vshrl.u32 %v2476, 7
        %v2478 = vsub.s32 0, %v2477
        %v2479 = vrot.slane %v2447, %v2478
        %v2481 = vmul.f32 %v2473, %v2479
        %v2482 = vmul.f32 %v2474, %v2479
        %v2484 = vlaneseq
        %v2485 = vshrl.u32 %v2484, 7
        %v2486 = vsub.s32 0, %v2485
        %v2487 = vrot.slane %v2448, %v2486
        %v2489 = vadd.f32 %v2481, %v2487
        %v2490 = vadd.f32 %v2482, %v2487
        %v2491 = vld [vmem:[%s695] sm:$0xff]
        %v2492 = vld [vmem:[%s695 + $0x8] sm:$0xff]
        %v2493 = vld [vmem:[%s695 + $0x10] sm:$0xff]
        %v2494 = vld [vmem:[%s695 + $0x18] sm:$0xff]
        %v2495 = vld [vmem:[%s698] sm:$0x1]
        %v2497 = vlaneseq
        %v2498 = vshrl.u32 %v2497, 7
        %v2499 = vsub.s32 0, %v2498
        %v2500 = vrot.slane %v2495, %v2499
        %v2503 = vsel %vm839, %v2489, 0
        %v2506 = vsel %vm839, %v2490, 0
        %2508 = vmatprep.subr.mxu0 0.0
        %2509 = vmatpush1.msra.mxu0 0.0
        %2510 = vmatprep.subr.mxu0 0.0
        %2511 = vmatpush1.msra.mxu0 0.0
        %2512 = vmatprep.subr.mxu0 0.0
        %2513 = vmatpush1.msra.mxu0 0.0
        %2514 = vmatprep.subr.mxu0 0.0
        %2515 = vmatpush1.msra.mxu0 0.0
        %2516 = vmatprep.subr.mxu0 0.0
        %2517 = vmatpush1.msra.mxu0 0.0
        %2518 = vmatprep.subr.mxu0 0.0
        %2519 = vmatpush1.msra.mxu0 0.0
        %2520 = vmatprep.subr.mxu0 0.0
        %2521 = vmatpush1.msra.mxu0 0.0
        %2522 = vmatprep.subr.mxu0 0.0
        %2523 = vmatpush1.msra.mxu0 0.0
        %2524 = vmatprep.subr.mxu0 0.0
        %2525 = vmatpush1.msra.mxu0 0.0
        %2526 = vmatprep.subr.mxu0 0.0
        %2527 = vmatpush1.msra.mxu0 0.0
        %2528 = vmatprep.subr.mxu0 0.0
        %2529 = vmatpush1.msra.mxu0 0.0
        %2530 = vmatprep.subr.mxu0 0.0
        %2531 = vmatpush1.msra.mxu0 0.0
        %2532 = vmatprep.subr.mxu0 0.0
        %2533 = vmatpush1.msra.mxu0 %v2494
        %2534 = vmatprep.subr.mxu0 0.0
        %2535 = vmatpush1.msra.mxu0 %v2493
        %2536 = vmatprep.subr.mxu0 0.0
        %2537 = vmatpush1.msra.mxu0 %v2492
        %2538 = vmatprep.subr.mxu0 0.0
        %2539 = vmatpush1.msra.mxu0 %v2491
        %2540 = vmatprep.subr.mxu0 0.0
        %2541 = vmatpush2.msra.mxu0 0.0
        %2542 = vmatprep.subr.mxu0 0.0
        %2543 = vmatpush2.msra.mxu0 0.0
        %2544 = vmatprep.subr.mxu0 0.0
        %2545 = vmatpush2.msra.mxu0 0.0
        %2546 = vmatprep.subr.mxu0 0.0
        %2547 = vmatpush2.msra.mxu0 0.0
        %2548 = vmatprep.subr.mxu0 0.0
        %2549 = vmatpush2.msra.mxu0 0.0
        %2550 = vmatprep.subr.mxu0 0.0
        %2551 = vmatpush2.msra.mxu0 0.0
        %2552 = vmatprep.subr.mxu0 0.0
        %2553 = vmatpush2.msra.mxu0 0.0
        %2554 = vmatprep.subr.mxu0 0.0
        %2555 = vmatpush2.msra.mxu0 0.0
        %2556 = vmatprep.subr.mxu0 0.0
        %2557 = vmatpush2.msra.mxu0 0.0
        %2558 = vmatprep.subr.mxu0 0.0
        %2559 = vmatpush2.msra.mxu0 0.0
        %2560 = vmatprep.subr.mxu0 0.0
        %2561 = vmatpush2.msra.mxu0 0.0
        %2562 = vmatprep.subr.mxu0 0.0
        %2563 = vmatpush2.msra.mxu0 0.0
        %2564 = vmatprep.subr.mxu0 0.0
        %2565 = vmatpush2.msra.mxu0 0.0
        %2566 = vmatprep.subr.mxu0 0.0
        %2567 = vmatpush2.msra.mxu0 0.0
        %2568 = vmatprep.subr.mxu0 0.0
        %2569 = vmatpush2.msra.mxu0 0.0
        %2570 = vmatprep.subr.mxu0 0.0
        %2571 = vmatpush2.msra.mxu0 0.0
        %2572 = vmatprep.mubr.f32.mxu0 0.0
        %2573 = vmatmul.mubr.f32.gmra.mxu0 %v2503
        %v2574 = vpop.f32.mrf.mxu0
        %v2575 = vadd.f32 %v2500, %v2574
        %v2576 = vpop.f32.mrf.mxu0
        %2577 = vmatprep.mubr.f32.mxu0 0.0
        %2578 = vmatmul.mubr.f32.gmra.mxu0 %v2506
        %v2579 = vpop.f32.mrf.mxu0
        %v2580 = vadd.f32 %v2500, %v2579
        %v2581 = vpop.f32.mrf.mxu0
        %2582 = vdwg.mxu0
        %v2583 = vmul.f32 %v2575, 0.5
        %v2584 = vmul.f32 %v2580, 0.5
        %v2585 = vrcp.pop 1.4142135
        %v2586 = vmul.f32 %v2575, %v2585
        %v2587 = vmul.f32 %v2580, %v2585
        %v2588 = verf.f32.pop %v2586
        %v2589 = verf.f32.pop %v2587
        %v2590 = vadd.f32 %v2588, 1.0
        %v2591 = vadd.f32 %v2589, 1.0
        %v2592 = vmul.f32 %v2583, %v2590
        %v2593 = vmul.f32 %v2584, %v2591
        %v2594 = vld [vmem:[%s703] sm:$0xff]
        %v2595 = vld [vmem:[%s703 + $0x8] sm:$0xff]
        %v2596 = vld [vmem:[%s703 + $0x10] sm:$0xff]
        %v2597 = vld [vmem:[%s703 + $0x18] sm:$0xff]
        %v2598 = vld [vmem:[%s703 + $0x20] sm:$0xff]
        %v2599 = vld [vmem:[%s703 + $0x28] sm:$0xff]
        %v2600 = vld [vmem:[%s703 + $0x30] sm:$0xff]
        %v2601 = vld [vmem:[%s703 + $0x38] sm:$0xff]
        %v2602 = vld [vmem:[%s706] sm:$0x1]
        %v2604 = vlaneseq
        %v2605 = vshrl.u32 %v2604, 7
        %v2606 = vsub.s32 0, %v2605
        %v2607 = vrot.slane %v2602, %v2606
        %vm2609 = vcmask 523264
        %v2611 = vsel %vm2609, %v2592, 0
        %v2614 = vsel %vm2609, %v2593, 0
        %2616 = vmatprep.subr.mxu0 0.0
        %2617 = vmatpush1.msra.mxu0 0.0
        %2618 = vmatprep.subr.mxu0 0.0
        %2619 = vmatpush1.msra.mxu0 0.0
        %2620 = vmatprep.subr.mxu0 0.0
        %2621 = vmatpush1.msra.mxu0 0.0
        %2622 = vmatprep.subr.mxu0 0.0
        %2623 = vmatpush1.msra.mxu0 0.0
        %2624 = vmatprep.subr.mxu0 0.0
        %2625 = vmatpush1.msra.mxu0 0.0
        %2626 = vmatprep.subr.mxu0 0.0
        %2627 = vmatpush1.msra.mxu0 0.0
        %2628 = vmatprep.subr.mxu0 0.0
        %2629 = vmatpush1.msra.mxu0 0.0
        %2630 = vmatprep.subr.mxu0 0.0
        %2631 = vmatpush1.msra.mxu0 0.0
        %2632 = vmatprep.subr.mxu0 0.0
        %2633 = vmatpush1.msra.mxu0 %v2601
        %2634 = vmatprep.subr.mxu0 0.0
        %2635 = vmatpush1.msra.mxu0 %v2600
        %2636 = vmatprep.subr.mxu0 0.0
        %2637 = vmatpush1.msra.mxu0 %v2599
        %2638 = vmatprep.subr.mxu0 0.0
        %2639 = vmatpush1.msra.mxu0 %v2598
        %2640 = vmatprep.subr.mxu0 0.0
        %2641 = vmatpush1.msra.mxu0 %v2597
        %2642 = vmatprep.subr.mxu0 0.0
        %2643 = vmatpush1.msra.mxu0 %v2596
        %2644 = vmatprep.subr.mxu0 0.0
        %2645 = vmatpush1.msra.mxu0 %v2595
        %2646 = vmatprep.subr.mxu0 0.0
        %2647 = vmatpush1.msra.mxu0 %v2594
        %2648 = vmatprep.subr.mxu0 0.0
        %2649 = vmatpush2.msra.mxu0 0.0
        %2650 = vmatprep.subr.mxu0 0.0
        %2651 = vmatpush2.msra.mxu0 0.0
        %2652 = vmatprep.subr.mxu0 0.0
        %2653 = vmatpush2.msra.mxu0 0.0
        %2654 = vmatprep.subr.mxu0 0.0
        %2655 = vmatpush2.msra.mxu0 0.0
        %2656 = vmatprep.subr.mxu0 0.0
        %2657 = vmatpush2.msra.mxu0 0.0
        %2658 = vmatprep.subr.mxu0 0.0
        %2659 = vmatpush2.msra.mxu0 0.0
        %2660 = vmatprep.subr.mxu0 0.0
        %2661 = vmatpush2.msra.mxu0 0.0
        %2662 = vmatprep.subr.mxu0 0.0
        %2663 = vmatpush2.msra.mxu0 0.0
        %2664 = vmatprep.subr.mxu0 0.0
        %2665 = vmatpush2.msra.mxu0 0.0
        %2666 = vmatprep.subr.mxu0 0.0
        %2667 = vmatpush2.msra.mxu0 0.0
        %2668 = vmatprep.subr.mxu0 0.0
        %2669 = vmatpush2.msra.mxu0 0.0
        %2670 = vmatprep.subr.mxu0 0.0
        %2671 = vmatpush2.msra.mxu0 0.0
        %2672 = vmatprep.subr.mxu0 0.0
        %2673 = vmatpush2.msra.mxu0 0.0
        %2674 = vmatprep.subr.mxu0 0.0
        %2675 = vmatpush2.msra.mxu0 0.0
        %2676 = vmatprep.subr.mxu0 0.0
        %2677 = vmatpush2.msra.mxu0 0.0
        %2678 = vmatprep.subr.mxu0 0.0
        %2679 = vmatpush2.msra.mxu0 0.0
        %2680 = vmatprep.mubr.f32.mxu0 0.0
        %2681 = vmatmul.mubr.f32.gmra.mxu0 %v2611
        %v2682 = vpop.f32.mrf.mxu0
        %v2683 = vadd.f32 %v2607, %v2682
        %v2684 = vpop.f32.mrf.mxu0
        %2685 = vmatprep.mubr.f32.mxu0 0.0
        %2686 = vmatmul.mubr.f32.gmra.mxu0 %v2614
        %v2687 = vpop.f32.mrf.mxu0
        %v2688 = vadd.f32 %v2607, %v2687
        %v2689 = vpop.f32.mrf.mxu0
        %2690 = vdwg.mxu0
        %v2691 = vadd.f32 %v2445, %v2683
        %v2692 = vadd.f32 %v2446, %v2688
        %2693 = vst.msk [vmem:[#allocation2] sm:$0xff] %vm839, %v2691
        %2694 = vst.msk [vmem:[#allocation2 + $0x8] sm:$0x3] %vm843, %v2692
        // Predicated region
        $region93: #{tpu_custom_call.1} parent=87 // pred_check
          %p2695 = pneg %p459
        $region94: #{tpu_custom_call.1} parent=87 // pred_check_branch
          %2697 = sbr.rel (%p2695) target = $region96
        $region95: #{tpu_custom_call.1} parent=87 // pred_region
          %s2699 = ssub.s32 256, 256
          %2700 = vsyncadd [#allocation3], %s2699
          %s2701 = sshll.u32 [#allocation2], 4
          %s2702 = int_to_ptr.vmem [resolvable:$true] %s2701
          %2707 = dma.vmem_to_hbm [thread:$0]  %s2702, 256, %s17, [#allocation3], 128, 128, 8
        $region96: #{tpu_custom_call.1} parent=87 // pred_fallthru
          _
        // Predicated region
        $region97: #{tpu_custom_call.1} parent=87 // pred_check
          %p2708 = pneg %p459
        $region98: #{tpu_custom_call.1} parent=87 // pred_check_branch
          %2710 = sbr.rel (%p2708) target = $region100
        $region99: #{tpu_custom_call.1} parent=87 // pred_region
          %2711 = dma.done [#allocation3], 256
        $region100: #{tpu_custom_call.1} parent=87 // pred_fallthru
          _
      $region88: #{tpu_custom_call.1} parent=5 // pred_fallthru
        _
      %p2712 = scmp.le.s32.totalorder 2, %s24
      // Predicated region
      $region101: #{tpu_custom_call.1} parent=5 // pred_check
        %p2713 = pneg %p2712
      $region102: #{tpu_custom_call.1} parent=5 // pred_check_branch
        %2715 = sbr.rel (%p2713) target = $region104
      $region103: #{tpu_custom_call.1} parent=5 // pred_region
        %s2716 = ssub.s32 %s24, 2
      $region104: #{tpu_custom_call.1} parent=5 // pred_fallthru
        _
    $region6: #{tpu_custom_call.1} parent=1 // loop_footer
      %s28 = sadd.s32 1, %s24
    $region7: #{tpu_custom_call.1} parent=1 // loop_footer_branch
      %23 = sbr.rel target = $region3
    $region8: #{tpu_custom_call.1} parent=1 // loop_exit
      _
    %2717 = vsyncpa [#allocation3], 1
    %s2718 = scalar_lea.sflag [#allocation3], 1
    %2719 = vsyncpa %s2718, 1

</llo_original>
